<compile_context>
chip_gen: v6e
topology: v6e:2x2x1
jax: 0.10.0
libtpu: 0.0.40
codegen_flags: <defaults>
</compile_context>

<pallas_src>
import jax
import jax.numpy as jnp
from jax import lax
from jax.experimental import pallas as pl
from jax.experimental.pallas import tpu as pltpu

BN_EPS = 1e-5


# ----------------------------------------------------------------------------- kernel
def _aux_head_kernel(x_ref, w1_ref, b1_ref, w2_ref, b2_ref, wc_ref, bc_ref, out_ref):
    """Fused AuxHeadCIFAR forward (eval-mode BatchNorm folded into the weights).

    x_ref  : (TN, C_in*64) f32   -- relu'd in-kernel, NCHW spatial flattened
    w1_ref : (C_in*64, 512) bf16 -- avg_pool(5,3) + conv1(1x1) + bn1-scale (4 taps stacked)
    b1_ref : (1, 512) f32        -- bn1 shift, tiled per tap
    w2_ref : (512, 768) bf16     -- conv2(2x2) + bn2-scale
    b2_ref : (1, 768) f32        -- bn2 shift
    wc_ref : (768, CPAD) bf16    -- classifier weight, zero-padded to 128 lanes
    bc_ref : (1, CPAD) f32
    out_ref: (TN, CPAD) f32
    """
    # TODO(synk): on v5e (197 TF/s MXU) the 64x K-inflated pooled matmul can become
    # MXU-bound; if profiling shows that, split this dot into 4 per-tap dots over
    # contiguous row windows. v6e/v7x stay HBM-bound, so keep the single fused dot.
    x = jnp.maximum(x_ref[...], 0.0).astype(jnp.bfloat16)                  # relu1
    h1 = jnp.dot(x, w1_ref[...], preferred_element_type=jnp.float32)       # pool+conv1+bn1 scale
    h1 = jnp.maximum(h1 + b1_ref[...], 0.0)                                # bn1 shift + relu2
    h2 = jnp.dot(h1.astype(jnp.bfloat16), w2_ref[...],
                 preferred_element_type=jnp.float32)                       # conv2+bn2 scale
    h2 = jnp.maximum(h2 + b2_ref[...], 0.0)                                # bn2 shift + relu3
    out = jnp.dot(h2.astype(jnp.bfloat16), wc_ref[...],
                  preferred_element_type=jnp.float32) + bc_ref[...]        # classifier
    out_ref[...] = out.astype(out_ref.dtype)


# ------------------------------------------------------------------- one-time weight prep
def prepare_aux_head(params):
    """One-time weight prep: fold BN + pooling into matmul weights. Cache the result."""
    f32, bf16 = jnp.float32, jnp.bfloat16
    c_mid, c_in = params["conv1_w"].shape[0], params["conv1_w"].shape[1]   # 128, C_in
    c_out2 = params["conv2_w"].shape[0]                                    # 768
    classes = params["fc_w"].shape[0]
    cpad = max(128, ((classes + 127) // 128) * 128)

    inv1 = params["bn1_g"].astype(f32) * lax.rsqrt(params["bn1_v"].astype(f32) + BN_EPS)
    sh1 = params["bn1_b"].astype(f32) - params["bn1_m"].astype(f32) * inv1
    inv2 = params["bn2_g"].astype(f32) * lax.rsqrt(params["bn2_v"].astype(f32) + BN_EPS)
    sh2 = params["bn2_b"].astype(f32) - params["bn2_m"].astype(f32) * inv2

    # Pooling matrix P (64, 4): avg_pool(5, stride 3) on 8x8 -> 2x2, tap t = kh*2 + kw.
    hh = jnp.arange(8)
    cols = []
    for kh in range(2):
        for kw in range(2):
            mh = (hh >= 3 * kh) & (hh < 3 * kh + 5)
            mw = (hh >= 3 * kw) & (hh < 3 * kw + 5)
            cols.append((mh[:, None] & mw[None, :]).astype(f32).reshape(64) / 25.0)
    pool_mat = jnp.stack(cols, axis=1)                                     # (64, 4)

    # conv1 (1x1) with bn1 scale folded, fused with pooling: (C_in*64, 4*c_mid)
    w1 = params["conv1_w"].astype(f32).reshape(c_mid, c_in).T * inv1[None, :]
    w_pc = jnp.einsum('ck,st->cstk', w1, pool_mat).reshape(c_in * 64, 4 * c_mid)
    b1 = jnp.tile(sh1, 4).reshape(1, 4 * c_mid)

    # conv2 (2x2) as one (4*c_mid, c_out2) matmul with bn2 scale folded.
    w2 = jnp.transpose(params["conv2_w"].astype(f32), (2, 3, 1, 0)).reshape(4 * c_mid, c_out2)
    w2 = w2 * inv2[None, :]
    b2 = sh2.reshape(1, c_out2)

    # Classifier, zero-padded to a lane-dense (multiple of 128) output.
    wc = jnp.pad(params["fc_w"].astype(f32).T, ((0, 0), (0, cpad - classes)))
    bc = jnp.pad(params["fc_b"].astype(f32), (0, cpad - classes)).reshape(1, cpad)

    return {
        "w_pc": w_pc.astype(bf16), "b1": b1,
        "w2": w2.astype(bf16), "b2": b2,
        "wc": wc.astype(bf16), "bc": bc,
        "c_in": int(c_in), "c_mid4": int(4 * c_mid), "c_out2": int(c_out2),
        "classes": int(classes), "cpad": int(cpad),
    }


# ----------------------------------------------------------------------- tiling / budget
def _vmem_budget_bytes():
    """Per-generation scoped-VMEM budget (headroom below physical capacity)."""
    cap = None
    try:
        cap = int(pltpu.get_tpu_info().vmem_capacity_bytes)
    except Exception:
        cap = None
    if not cap:
        try:
            kind = jax.devices()[0].device_kind.lower()
        except Exception:
            kind = ""
        cap = 64 * 1024 * 1024 if "v7" in kind else 128 * 1024 * 1024
    # ~75% of physical: ~48 MiB on v7x, capped at 96 MiB on v5e/v6e.
    return max(32 * 1024 * 1024, min(3 * cap // 4, 96 * 1024 * 1024))


def _choose_batch_tile(n, k, c_mid4, c_out2, cpad, vmem_limit):
    """Pick the batch tile from K and the VMEM budget instead of a fixed 256."""
    # Grid-invariant weights are single-buffered (pl.Buffered(1)).
    weight_bytes = (k * c_mid4 * 2 + c_mid4 * 4
                    + c_mid4 * c_out2 * 2 + c_out2 * 4
                    + c_out2 * cpad * 2 + cpad * 4)
    # Per-batch-row cost: x f32 (double-buffered) + in-kernel bf16 x copy +
    # f32 h1/h2 temporaries + f32 output (double-buffered).
    per_row = 2 * (k * 4) + k * 2 + c_mid4 * 4 + c_out2 * 4 + 2 * (cpad * 4)
    headroom = 6 * 1024 * 1024                       # Mosaic internal scratch / slack
    avail = max(vmem_limit - weight_bytes - headroom, per_row * 8)
    tn = avail // per_row
    # Target ~8 MiB f32 x tiles; never more than 2048 rows per step.
    tn = min(tn, max(8, (8 * 1024 * 1024) // (4 * k)), 2048, n)
    if n >= 16:
        tn = max(tn, 8)
        if -(-n // tn) < 2:          # keep >= 2 grid steps so both v7x TCs get work
            tn = -(-n // 2)
        tn = max(8, (tn // 8) * 8)   # sublane-aligned batch tiles
    else:
        tn = n                       # tiny batch: single full-extent block
    return int(tn)


# --------------------------------------------------------------------------- hot path
def aux_head_apply(x_nchw, prep):
    """Hot-path forward. Returns the (N, CPAD)-padded logits; slice [:classes] lazily."""
    n, c_in, h, w = x_nchw.shape
    assert (h, w) == (8, 8), "AuxHeadCIFAR assumes 8x8 spatial input"
    assert c_in == prep["c_in"]
    k = c_in * 64
    c_mid4, c_out2, cpad = prep["c_mid4"], prep["c_out2"], prep["cpad"]

    # NCHW (C,H,W) is contiguous -> this reshape is a free bitcast, no extra HBM pass.
    x_flat = x_nchw.astype(jnp.float32).reshape(n, k)

    vmem_limit = _vmem_budget_bytes()
    tn = _choose_batch_tile(n, k, c_mid4, c_out2, cpad, vmem_limit)
    grid = (pl.cdiv(n, tn),)

    cost = pl.CostEstimate(
        flops=2 * n * (k * c_mid4 + c_mid4 * c_out2 + c_out2 * cpad),
        transcendentals=0,
        bytes_accessed=(n * k * 4 + n * cpad * 4
                        + k * c_mid4 * 2 + c_mid4 * c_out2 * 2 + c_out2 * cpad * 2
                        + (c_mid4 + c_out2 + cpad) * 4))

    def run(single_buffer_weights):
        const_kwargs = {"pipeline_mode": pl.Buffered(1)} if single_buffer_weights else {}

        def const(shape):
            # Constant index_map -> VMEM-resident weights; single-buffered to save VMEM.
            return pl.BlockSpec(shape, lambda i: (0, 0), **const_kwargs)

        return pl.pallas_call(
            _aux_head_kernel,
            out_shape=jax.ShapeDtypeStruct((n, cpad), jnp.float32),
            grid=grid,
            in_specs=[
                pl.BlockSpec((tn, k), lambda i: (i, 0)),
                const((k, c_mid4)),
                const((1, c_mid4)),
                const((c_mid4, c_out2)),
                const((1, c_out2)),
                const((c_out2, cpad)),
                const((1, cpad)),
            ],
            out_specs=pl.BlockSpec((tn, cpad), lambda i: (i, 0)),
            compiler_params=pltpu.CompilerParams(
                dimension_semantics=("parallel",),
                vmem_limit_bytes=vmem_limit),
            cost_estimate=cost,
        )(x_flat, prep["w_pc"], prep["b1"], prep["w2"], prep["b2"],
          prep["wc"], prep["bc"])

    try:
        return run(single_buffer_weights=True)
    except Exception:
        # Fallback if pipeline_mode=pl.Buffered(1) is unsupported on this jax version.
        return run(single_buffer_weights=False)


def aux_head_cifar(x_nchw, params):
    """Convenience one-shot API matching the PyTorch forward (eval-mode BN)."""
    prep = prepare_aux_head(params)
    return aux_head_apply(x_nchw, prep)[:, :prep["classes"]]


# --------------------------------------------------------------------------- reference
def ref_forward(x, p):
    """Pure-JAX reference matching the PyTorch forward (bn_train=False)."""
    x = jnp.maximum(x, 0.0)
    pool = jnp.stack(
        [jnp.stack([jnp.mean(x[:, :, 3 * i:3 * i + 5, 3 * j:3 * j + 5], axis=(2, 3))
                    for j in range(2)], axis=-1) for i in range(2)], axis=-2)  # (N,C,2,2)
    h1 = jnp.einsum('nchw,kc->nkhw', pool, p["conv1_w"].reshape(128, -1))
    bn = lambda y, g, b, m, v: (y - m) / jnp.sqrt(v + BN_EPS) * g + b
    h1 = bn(h1, p["bn1_g"][None, :, None, None], p["bn1_b"][None, :, None, None],
            p["bn1_m"][None, :, None, None], p["bn1_v"][None, :, None, None])
    h1 = jnp.maximum(h1, 0.0)
    h2 = jnp.einsum('nchw,ochw->no', h1, p["conv2_w"])
    h2 = bn(h2, p["bn2_g"][None, :], p["bn2_b"][None, :],
            p["bn2_m"][None, :], p["bn2_v"][None, :])
    h2 = jnp.maximum(h2, 0.0)
    return h2 @ p["fc_w"].T + p["fc_b"][None, :]


if __name__ == "__main__":
    N, C_IN, CLASSES = 2, 4, 10
    key = jax.random.PRNGKey(0)
    kx, *ks = jax.random.split(key, 13)

    # TODO(synk): bn_train=True (training-mode batch statistics) is not implemented;
    # kernel reproduces eval-mode BatchNorm with running stats folded into weights.
    params = {
        "conv1_w": 0.1 * jax.random.normal(ks[0], (128, C_IN, 1, 1), jnp.float32),
        "bn1_g": 1.0 + 0.1 * jax.random.normal(ks[1], (128,), jnp.float32),
        "bn1_b": 0.1 * jax.random.normal(ks[2], (128,), jnp.float32),
        "bn1_m": 0.1 * jax.random.normal(ks[3], (128,), jnp.float32),
        "bn1_v": 1.0 + 0.1 * jnp.abs(jax.random.normal(ks[4], (128,), jnp.float32)),
        "conv2_w": 0.05 * jax.random.normal(ks[5], (768, 128, 2, 2), jnp.float32),
        "bn2_g": 1.0 + 0.1 * jax.random.normal(ks[6], (768,), jnp.float32),
        "bn2_b": 0.1 * jax.random.normal(ks[7], (768,), jnp.float32),
        "bn2_m": 0.1 * jax.random.normal(ks[8], (768,), jnp.float32),
        "bn2_v": 1.0 + 0.1 * jnp.abs(jax.random.normal(ks[9], (768,), jnp.float32)),
        "fc_w": 0.05 * jax.random.normal(ks[10], (CLASSES, 768), jnp.float32),
        "fc_b": 0.1 * jax.random.normal(ks[11], (CLASSES,), jnp.float32),
    }
    x = jax.random.normal(kx, (N, C_IN, 8, 8), jnp.float32)

    prep = prepare_aux_head(params)                       # one-time prep (cache per model)
    out_pad = jax.block_until_ready(aux_head_apply(x, prep))
    out = out_pad[:, :CLASSES]                            # lazy slice at the consumer

    ref = ref_forward(x, params)
    assert out.shape == (N, CLASSES), out.shape
    assert jnp.allclose(out, ref, rtol=1e-2, atol=1e-2), (
        f"mismatch, max abs err = {jnp.max(jnp.abs(out - ref))}")
    print("KERNEL_OK")
</pallas_src>

<mosaic_0001>
module attributes {stable_mosaic.version = 11 : i64} {
  func.func @_aux_head_kernel(%arg0: i32, %arg1: memref<2x256xf32, #tpu.memory_space<vmem>>, %arg2: memref<256x512xbf16, #tpu.memory_space<vmem>>, %arg3: memref<1x512xf32, #tpu.memory_space<vmem>>, %arg4: memref<512x768xbf16, #tpu.memory_space<vmem>>, %arg5: memref<1x768xf32, #tpu.memory_space<vmem>>, %arg6: memref<768x128xbf16, #tpu.memory_space<vmem>>, %arg7: memref<1x128xf32, #tpu.memory_space<vmem>>, %arg8: memref<2x128xf32, #tpu.memory_space<vmem>>) attributes {dimension_semantics = [#tpu.dimension_semantics<parallel>], iteration_bounds = array<i64: 1>, scalar_prefetch = 0 : i64, scratch_operands = 0 : i64, tpu.core_type = #tpu.core_type<tc>, window_params = [{transform_indices = @transform_0, window_bounds = array<i64: 2, 256>}, {pipeline_mode = #tpu.pipeline_mode<synchronous>, transform_indices = @transform_1, window_bounds = array<i64: 256, 512>}, {pipeline_mode = #tpu.pipeline_mode<synchronous>, transform_indices = @transform_2, window_bounds = array<i64: 1, 512>}, {pipeline_mode = #tpu.pipeline_mode<synchronous>, transform_indices = @transform_3, window_bounds = array<i64: 512, 768>}, {pipeline_mode = #tpu.pipeline_mode<synchronous>, transform_indices = @transform_4, window_bounds = array<i64: 1, 768>}, {pipeline_mode = #tpu.pipeline_mode<synchronous>, transform_indices = @transform_5, window_bounds = array<i64: 768, 128>}, {pipeline_mode = #tpu.pipeline_mode<synchronous>, transform_indices = @transform_6, window_bounds = array<i64: 1, 128>}, {transform_indices = @transform_7, window_bounds = array<i64: 2, 128>}]} {
    %c0 = arith.constant 0 : index
    %c0_0 = arith.constant 0 : index
    %0 = vector.load %arg1[%c0, %c0_0] : memref<2x256xf32, #tpu.memory_space<vmem>>, vector<2x256xf32>
    %cst = arith.constant 0.000000e+00 : f32
    %1 = vector.broadcast %cst : f32 to vector<2x256xf32>
    %2 = arith.maximumf %0, %1 : vector<2x256xf32>
    %3 = arith.truncf %2 : vector<2x256xf32> to vector<2x256xbf16>
    %c0_1 = arith.constant 0 : index
    %c0_2 = arith.constant 0 : index
    %4 = vector.load %arg2[%c0_1, %c0_2] : memref<256x512xbf16, #tpu.memory_space<vmem>>, vector<256x512xbf16>
    %cst_3 = arith.constant dense<0.000000e+00> : vector<2x512xf32>
    %5 = tpu.matmul %3, %4, %cst_3 {dimension_numbers = #tpu.dot_dimension_numbers<[1], [0], [0], [1], [0, 0, 1, 1], [], []>} : vector<2x256xbf16>, vector<256x512xbf16>, vector<2x512xf32> -> vector<2x512xf32>
    %c0_4 = arith.constant 0 : index
    %c0_5 = arith.constant 0 : index
    %6 = vector.load %arg3[%c0_4, %c0_5] : memref<1x512xf32, #tpu.memory_space<vmem>>, vector<1x512xf32>
    %7 = vector.broadcast %6 : vector<1x512xf32> to vector<2x512xf32>
    %8 = arith.addf %5, %7 : vector<2x512xf32>
    %cst_6 = arith.constant 0.000000e+00 : f32
    %9 = vector.broadcast %cst_6 : f32 to vector<2x512xf32>
    %10 = arith.maximumf %8, %9 : vector<2x512xf32>
    %11 = arith.truncf %10 : vector<2x512xf32> to vector<2x512xbf16>
    %c0_7 = arith.constant 0 : index
    %c0_8 = arith.constant 0 : index
    %12 = vector.load %arg4[%c0_7, %c0_8] : memref<512x768xbf16, #tpu.memory_space<vmem>>, vector<512x768xbf16>
    %cst_9 = arith.constant dense<0.000000e+00> : vector<2x768xf32>
    %13 = tpu.matmul %11, %12, %cst_9 {dimension_numbers = #tpu.dot_dimension_numbers<[1], [0], [0], [1], [0, 0, 1, 1], [], []>} : vector<2x512xbf16>, vector<512x768xbf16>, vector<2x768xf32> -> vector<2x768xf32>
    %c0_10 = arith.constant 0 : index
    %c0_11 = arith.constant 0 : index
    %14 = vector.load %arg5[%c0_10, %c0_11] : memref<1x768xf32, #tpu.memory_space<vmem>>, vector<1x768xf32>
    %15 = vector.broadcast %14 : vector<1x768xf32> to vector<2x768xf32>
    %16 = arith.addf %13, %15 : vector<2x768xf32>
    %cst_12 = arith.constant 0.000000e+00 : f32
    %17 = vector.broadcast %cst_12 : f32 to vector<2x768xf32>
    %18 = arith.maximumf %16, %17 : vector<2x768xf32>
    %19 = arith.truncf %18 : vector<2x768xf32> to vector<2x768xbf16>
    %c0_13 = arith.constant 0 : index
    %c0_14 = arith.constant 0 : index
    %20 = vector.load %arg6[%c0_13, %c0_14] : memref<768x128xbf16, #tpu.memory_space<vmem>>, vector<768x128xbf16>
    %cst_15 = arith.constant dense<0.000000e+00> : vector<2x128xf32>
    %21 = tpu.matmul %19, %20, %cst_15 {dimension_numbers = #tpu.dot_dimension_numbers<[1], [0], [0], [1], [0, 0, 1, 1], [], []>} : vector<2x768xbf16>, vector<768x128xbf16>, vector<2x128xf32> -> vector<2x128xf32>
    %c0_16 = arith.constant 0 : index
    %c0_17 = arith.constant 0 : index
    %22 = vector.load %arg7[%c0_16, %c0_17] : memref<1x128xf32, #tpu.memory_space<vmem>>, vector<1x128xf32>
    %23 = vector.broadcast %22 : vector<1x128xf32> to vector<2x128xf32>
    %24 = arith.addf %21, %23 : vector<2x128xf32>
    %c0_18 = arith.constant 0 : index
    %c0_19 = arith.constant 0 : index
    %25 = vector.load %arg8[%c0_18, %c0_19] : memref<2x128xf32, #tpu.memory_space<vmem>>, vector<2x128xf32>
    tpu.vector_store %arg8[%c0_18, %c0_19], %24 {strides = array<i32>} : memref<2x128xf32, #tpu.memory_space<vmem>>, vector<2x128xf32>,
    return
  }
  func.func @transform_0(%arg0: i32) -> (i32, i32) {
    %c0_i32 = arith.constant 0 : i32
    %c0_i32_0 = arith.constant 0 : i32
    return %arg0, %c0_i32 : i32, i32
  }
  func.func @transform_1(%arg0: i32) -> (i32, i32) {
    %c0_i32 = arith.constant 0 : i32
    %c0_i32_0 = arith.constant 0 : i32
    %c0_i32_1 = arith.constant 0 : i32
    return %c0_i32, %c0_i32_0 : i32, i32
  }
  func.func @transform_2(%arg0: i32) -> (i32, i32) {
    %c0_i32 = arith.constant 0 : i32
    %c0_i32_0 = arith.constant 0 : i32
    %c0_i32_1 = arith.constant 0 : i32
    return %c0_i32, %c0_i32_0 : i32, i32
  }
  func.func @transform_3(%arg0: i32) -> (i32, i32) {
    %c0_i32 = arith.constant 0 : i32
    %c0_i32_0 = arith.constant 0 : i32
    %c0_i32_1 = arith.constant 0 : i32
    return %c0_i32, %c0_i32_0 : i32, i32
  }
  func.func @transform_4(%arg0: i32) -> (i32, i32) {
    %c0_i32 = arith.constant 0 : i32
    %c0_i32_0 = arith.constant 0 : i32
    %c0_i32_1 = arith.constant 0 : i32
    return %c0_i32, %c0_i32_0 : i32, i32
  }
  func.func @transform_5(%arg0: i32) -> (i32, i32) {
    %c0_i32 = arith.constant 0 : i32
    %c0_i32_0 = arith.constant 0 : i32
    %c0_i32_1 = arith.constant 0 : i32
    return %c0_i32, %c0_i32_0 : i32, i32
  }
  func.func @transform_6(%arg0: i32) -> (i32, i32) {
    %c0_i32 = arith.constant 0 : i32
    %c0_i32_0 = arith.constant 0 : i32
    %c0_i32_1 = arith.constant 0 : i32
    return %c0_i32, %c0_i32_0 : i32, i32
  }
  func.func @transform_7(%arg0: i32) -> (i32, i32) {
    %c0_i32 = arith.constant 0 : i32
    %c0_i32_0 = arith.constant 0 : i32
    return %arg0, %c0_i32 : i32, i32
  }
}

module attributes {stable_mosaic.version = 11 : i64} {
  func.func @_aux_head_kernel(%arg0: i32, %arg1: memref<2x256xf32, #tpu.memory_space<vmem>>, %arg2: memref<256x512xbf16, #tpu.memory_space<vmem>>, %arg3: memref<1x512xf32, #tpu.memory_space<vmem>>, %arg4: memref<512x768xbf16, #tpu.memory_space<vmem>>, %arg5: memref<1x768xf32, #tpu.memory_space<vmem>>, %arg6: memref<768x128xbf16, #tpu.memory_space<vmem>>, %arg7: memref<1x128xf32, #tpu.memory_space<vmem>>, %arg8: memref<2x128xf32, #tpu.memory_space<vmem>>) attributes {dimension_semantics = [#tpu.dimension_semantics<parallel>], iteration_bounds = array<i64: 1>, scalar_prefetch = 0 : i64, scratch_operands = 0 : i64, tpu.core_type = #tpu.core_type<tc>, window_params = [{transform_indices = @transform_0, window_bounds = array<i64: 2, 256>}, {pipeline_mode = #tpu.pipeline_mode<synchronous>, transform_indices = @transform_1, window_bounds = array<i64: 256, 512>}, {pipeline_mode = #tpu.pipeline_mode<synchronous>, transform_indices = @transform_2, window_bounds = array<i64: 1, 512>}, {pipeline_mode = #tpu.pipeline_mode<synchronous>, transform_indices = @transform_3, window_bounds = array<i64: 512, 768>}, {pipeline_mode = #tpu.pipeline_mode<synchronous>, transform_indices = @transform_4, window_bounds = array<i64: 1, 768>}, {pipeline_mode = #tpu.pipeline_mode<synchronous>, transform_indices = @transform_5, window_bounds = array<i64: 768, 128>}, {pipeline_mode = #tpu.pipeline_mode<synchronous>, transform_indices = @transform_6, window_bounds = array<i64: 1, 128>}, {transform_indices = @transform_7, window_bounds = array<i64: 2, 128>}]} {
    %c0 = arith.constant 0 : index
    %c0_0 = arith.constant 0 : index
    %0 = vector.load %arg1[%c0, %c0_0] : memref<2x256xf32, #tpu.memory_space<vmem>>, vector<2x256xf32>
    %cst = arith.constant 0.000000e+00 : f32
    %1 = vector.broadcast %cst : f32 to vector<2x256xf32>
    %2 = arith.maximumf %0, %1 : vector<2x256xf32>
    %3 = arith.truncf %2 : vector<2x256xf32> to vector<2x256xbf16>
    %c0_1 = arith.constant 0 : index
    %c0_2 = arith.constant 0 : index
    %4 = vector.load %arg2[%c0_1, %c0_2] : memref<256x512xbf16, #tpu.memory_space<vmem>>, vector<256x512xbf16>
    %cst_3 = arith.constant dense<0.000000e+00> : vector<2x512xf32>
    %5 = tpu.matmul %3, %4, %cst_3 {dimension_numbers = #tpu.dot_dimension_numbers<[1], [0], [0], [1], [0, 0, 1, 1], [], []>} : vector<2x256xbf16>, vector<256x512xbf16>, vector<2x512xf32> -> vector<2x512xf32>
    %c0_4 = arith.constant 0 : index
    %c0_5 = arith.constant 0 : index
    %6 = vector.load %arg3[%c0_4, %c0_5] : memref<1x512xf32, #tpu.memory_space<vmem>>, vector<1x512xf32>
    %7 = vector.broadcast %6 : vector<1x512xf32> to vector<2x512xf32>
    %8 = arith.addf %5, %7 : vector<2x512xf32>
    %cst_6 = arith.constant 0.000000e+00 : f32
    %9 = vector.broadcast %cst_6 : f32 to vector<2x512xf32>
    %10 = arith.maximumf %8, %9 : vector<2x512xf32>
    %11 = arith.truncf %10 : vector<2x512xf32> to vector<2x512xbf16>
    %c0_7 = arith.constant 0 : index
    %c0_8 = arith.constant 0 : index
    %12 = vector.load %arg4[%c0_7, %c0_8] : memref<512x768xbf16, #tpu.memory_space<vmem>>, vector<512x768xbf16>
    %cst_9 = arith.constant dense<0.000000e+00> : vector<2x768xf32>
    %13 = tpu.matmul %11, %12, %cst_9 {dimension_numbers = #tpu.dot_dimension_numbers<[1], [0], [0], [1], [0, 0, 1, 1], [], []>} : vector<2x512xbf16>, vector<512x768xbf16>, vector<2x768xf32> -> vector<2x768xf32>
    %c0_10 = arith.constant 0 : index
    %c0_11 = arith.constant 0 : index
    %14 = vector.load %arg5[%c0_10, %c0_11] : memref<1x768xf32, #tpu.memory_space<vmem>>, vector<1x768xf32>
    %15 = vector.broadcast %14 : vector<1x768xf32> to vector<2x768xf32>
    %16 = arith.addf %13, %15 : vector<2x768xf32>
    %cst_12 = arith.constant 0.000000e+00 : f32
    %17 = vector.broadcast %cst_12 : f32 to vector<2x768xf32>
    %18 = arith.maximumf %16, %17 : vector<2x768xf32>
    %19 = arith.truncf %18 : vector<2x768xf32> to vector<2x768xbf16>
    %c0_13 = arith.constant 0 : index
    %c0_14 = arith.constant 0 : index
    %20 = vector.load %arg6[%c0_13, %c0_14] : memref<768x128xbf16, #tpu.memory_space<vmem>>, vector<768x128xbf16>
    %cst_15 = arith.constant dense<0.000000e+00> : vector<2x128xf32>
    %21 = tpu.matmul %19, %20, %cst_15 {dimension_numbers = #tpu.dot_dimension_numbers<[1], [0], [0], [1], [0, 0, 1, 1], [], []>} : vector<2x768xbf16>, vector<768x128xbf16>, vector<2x128xf32> -> vector<2x128xf32>
    %c0_16 = arith.constant 0 : index
    %c0_17 = arith.constant 0 : index
    %22 = vector.load %arg7[%c0_16, %c0_17] : memref<1x128xf32, #tpu.memory_space<vmem>>, vector<1x128xf32>
    %23 = vector.broadcast %22 : vector<1x128xf32> to vector<2x128xf32>
    %24 = arith.addf %21, %23 : vector<2x128xf32>
    %c0_18 = arith.constant 0 : index
    %c0_19 = arith.constant 0 : index
    %25 = vector.load %arg8[%c0_18, %c0_19] : memref<2x128xf32, #tpu.memory_space<vmem>>, vector<2x128xf32>
    tpu.vector_store %arg8[%c0_18, %c0_19], %24 {strides = array<i32>} : memref<2x128xf32, #tpu.memory_space<vmem>>, vector<2x128xf32>,
    return
  }
  func.func @transform_0(%arg0: i32) -> (i32, i32) {
    %c0_i32 = arith.constant 0 : i32
    %c0_i32_0 = arith.constant 0 : i32
    return %arg0, %c0_i32 : i32, i32
  }
  func.func @transform_1(%arg0: i32) -> (i32, i32) {
    %c0_i32 = arith.constant 0 : i32
    %c0_i32_0 = arith.constant 0 : i32
    %c0_i32_1 = arith.constant 0 : i32
    return %c0_i32, %c0_i32_0 : i32, i32
  }
  func.func @transform_2(%arg0: i32) -> (i32, i32) {
    %c0_i32 = arith.constant 0 : i32
    %c0_i32_0 = arith.constant 0 : i32
    %c0_i32_1 = arith.constant 0 : i32
    return %c0_i32, %c0_i32_0 : i32, i32
  }
  func.func @transform_3(%arg0: i32) -> (i32, i32) {
    %c0_i32 = arith.constant 0 : i32
    %c0_i32_0 = arith.constant 0 : i32
    %c0_i32_1 = arith.constant 0 : i32
    return %c0_i32, %c0_i32_0 : i32, i32
  }
  func.func @transform_4(%arg0: i32) -> (i32, i32) {
    %c0_i32 = arith.constant 0 : i32
    %c0_i32_0 = arith.constant 0 : i32
    %c0_i32_1 = arith.constant 0 : i32
    return %c0_i32, %c0_i32_0 : i32, i32
  }
  func.func @transform_5(%arg0: i32) -> (i32, i32) {
    %c0_i32 = arith.constant 0 : i32
    %c0_i32_0 = arith.constant 0 : i32
    %c0_i32_1 = arith.constant 0 : i32
    return %c0_i32, %c0_i32_0 : i32, i32
  }
  func.func @transform_6(%arg0: i32) -> (i32, i32) {
    %c0_i32 = arith.constant 0 : i32
    %c0_i32_0 = arith.constant 0 : i32
    %c0_i32_1 = arith.constant 0 : i32
    return %c0_i32, %c0_i32_0 : i32, i32
  }
  func.func @transform_7(%arg0: i32) -> (i32, i32) {
    %c0_i32 = arith.constant 0 : i32
    %c0_i32_0 = arith.constant 0 : i32
    return %arg0, %c0_i32 : i32, i32
  }
}

</mosaic_0001>

<llo_original>
// kernel: tpu_custom_call.1
$region0: #{tpu_custom_call.1}
  #allocation0 [shape = 'u32[]', space=smem, size = 0x4, offset = 0x4, fixed_abs, tag = 'smem constant byte address 0x4 - core index']
  #allocation1 [shape = 'u32[144,128]{1,0:T(1,128)}', space=vmem, size = 0x12000, scoped, tag = 'internal scratch']
  %s0 = inlined_call_operand.hbm [shape: f32[2,256], index: 0, kind: input, shape index: {}]
  %s1 = inlined_call_operand.hbm [shape: bf16[256,512], index: 1, kind: input, shape index: {}]
  %s2 = inlined_call_operand.hbm [shape: f32[1,512], index: 2, kind: input, shape index: {}]
  %s3 = inlined_call_operand.hbm [shape: bf16[512,768], index: 3, kind: input, shape index: {}]
  %s4 = inlined_call_operand.vmem [shape: f32[1,768], index: 4, kind: input, shape index: {}]
  %s5 = inlined_call_operand.hbm [shape: bf16[768,128], index: 5, kind: input, shape index: {}]
  %s6 = inlined_call_operand.vmem [shape: f32[1,128], index: 6, kind: input, shape index: {}]
  %s7 = inlined_call_operand.hbm [shape: f32[2,128], index: 7, kind: output, shape index: {}]
  %s8 = sld [smem:[#allocation0]]
  $region58: #{tpu_custom_call.1} parent=0
    _
  %s10 = ssub.s32 1, %s8
  %s11 = scalar_select 0, %s10, %s8
  $region1: #{tpu_custom_call.1} parent=0
    #allocation2 [shape = 'u8[2048]{0}', space=vmem, size = 0x800, scoped, tag = 'input window, operand 0, single buffered']
    #allocation3 [shape = 's32[1]{0}', space=sflag, size = 0x4, scoped, tag = 'scoped memory for tpu_custom_call.1']
    #allocation4 [shape = 's32[1]{0}', space=sflag, size = 0x4, scoped, tag = 'scoped memory for tpu_custom_call.1']
    #allocation5 [shape = 'u8[262144]{0}', space=vmem, size = 0x40000, scoped, tag = 'input window, operand 1, single buffered']
    #allocation6 [shape = 's32[1]{0}', space=sflag, size = 0x4, scoped, tag = 'scoped memory for tpu_custom_call.1']
    #allocation7 [shape = 'u8[2048]{0}', space=vmem, size = 0x800, scoped, tag = 'input window, operand 2, single buffered']
    #allocation8 [shape = 'u8[786432]{0}', space=vmem, size = 0xc0000, scoped, tag = 'input window, operand 3, single buffered']
    #allocation9 [shape = 's32[1]{0}', space=sflag, size = 0x4, scoped, tag = 'scoped memory for tpu_custom_call.1']
    #allocation10 [shape = 'u8[196608]{0}', space=vmem, size = 0x30000, scoped, tag = 'input window, operand 5, single buffered']
    #allocation11 [shape = 'u8[1024]{0}', space=vmem, size = 0x400, scoped, tag = 'output window, operand 0, single buffered']
    %12 = vsyncpa [#allocation3], 0
    %13 = vsyncpa [#allocation6], 0
    %14 = vsyncpa [#allocation9], 0
    %15 = vsyncpa [#allocation4], 0
    // Predicated region
    $region2: #{tpu_custom_call.1} parent=1 // pred_check
      _
    $region3: #{tpu_custom_call.1} parent=1 // pred_check_branch
      %17 = sbr.rel (0) target = $region5
    $region4: #{tpu_custom_call.1} parent=1 // pred_region
      %s19 = ssub.s32 64, 64
      %20 = vsyncadd [#allocation3], %s19
      %s22 = sshll.u32 [#allocation2], 4
      %s23 = int_to_ptr.vmem [resolvable:$true] %s22
      %25 = dma.hbm_to_vmem [thread:$0]  %s0, 64, %s23, [#allocation3]
    $region5: #{tpu_custom_call.1} parent=1 // pred_fallthru
      _
    // Predicated region
    $region6: #{tpu_custom_call.1} parent=1 // pred_check
      _
    $region7: #{tpu_custom_call.1} parent=1 // pred_check_branch
      %27 = sbr.rel (0) target = $region9
    $region8: #{tpu_custom_call.1} parent=1 // pred_region
      %s29 = ssub.s32 8192, 8192
      %30 = vsyncadd [#allocation6], %s29
      %s31 = sshll.u32 [#allocation5], 4
      %s32 = int_to_ptr.vmem [resolvable:$true] %s31
      %37 = dma.hbm_to_vmem [thread:$0]  %s1, 8192, %s32, [#allocation6], 256, 256, 16
    $region9: #{tpu_custom_call.1} parent=1 // pred_fallthru
      _
    // Predicated region
    $region10: #{tpu_custom_call.1} parent=1 // pred_check
      _
    $region11: #{tpu_custom_call.1} parent=1 // pred_check_branch
      %39 = sbr.rel (0) target = $region13
    $region12: #{tpu_custom_call.1} parent=1 // pred_region
      %s41 = ssub.s32 64, 64
      %42 = vsyncadd [#allocation6], %s41
      %s44 = sshll.u32 [#allocation7], 4
      %s45 = int_to_ptr.vmem [resolvable:$true] %s44
      %47 = dma.hbm_to_vmem [thread:$0]  %s2, 64, %s45, [#allocation6]
    $region13: #{tpu_custom_call.1} parent=1 // pred_fallthru
      _
    // Predicated region
    $region14: #{tpu_custom_call.1} parent=1 // pred_check
      _
    $region15: #{tpu_custom_call.1} parent=1 // pred_check_branch
      %49 = sbr.rel (0) target = $region17
    $region16: #{tpu_custom_call.1} parent=1 // pred_region
      %s51 = ssub.s32 24576, 24576
      %52 = vsyncadd [#allocation9], %s51
      %s53 = sshll.u32 [#allocation8], 4
      %s54 = int_to_ptr.vmem [resolvable:$true] %s53
      %59 = dma.hbm_to_vmem [thread:$0]  %s3, 24576, %s54, [#allocation9], 384, 384, 24
    $region17: #{tpu_custom_call.1} parent=1 // pred_fallthru
      _
    // Predicated region
    $region18: #{tpu_custom_call.1} parent=1 // pred_check
      _
    $region19: #{tpu_custom_call.1} parent=1 // pred_check_branch
      %61 = sbr.rel (0) target = $region21
    $region20: #{tpu_custom_call.1} parent=1 // pred_region
      _
    $region21: #{tpu_custom_call.1} parent=1 // pred_fallthru
      _
    // Predicated region
    $region22: #{tpu_custom_call.1} parent=1 // pred_check
      _
    $region23: #{tpu_custom_call.1} parent=1 // pred_check_branch
      %63 = sbr.rel (0) target = $region25
    $region24: #{tpu_custom_call.1} parent=1 // pred_region
      %s65 = ssub.s32 6144, 6144
      %66 = vsyncadd [#allocation9], %s65
      %s67 = sshll.u32 [#allocation10], 4
      %s68 = int_to_ptr.vmem [resolvable:$true] %s67
      %73 = dma.hbm_to_vmem [thread:$0]  %s5, 6144, %s68, [#allocation9], 64, 64, 4
    $region25: #{tpu_custom_call.1} parent=1 // pred_fallthru
      _
    // Predicated region
    $region26: #{tpu_custom_call.1} parent=1 // pred_check
      _
    $region27: #{tpu_custom_call.1} parent=1 // pred_check_branch
      %75 = sbr.rel (0) target = $region29
    $region28: #{tpu_custom_call.1} parent=1 // pred_region
      _
    $region29: #{tpu_custom_call.1} parent=1 // pred_fallthru
      _
    // Predicated region
    $region30: #{tpu_custom_call.1} parent=1 // pred_check
      _
    $region31: #{tpu_custom_call.1} parent=1 // pred_check_branch
      %77 = sbr.rel (0) target = $region33
    $region32: #{tpu_custom_call.1} parent=1 // pred_region
      %78 = dma.done [#allocation3], 64
    $region33: #{tpu_custom_call.1} parent=1 // pred_fallthru
      _
    // Predicated region
    $region34: #{tpu_custom_call.1} parent=1 // pred_check
      _
    $region35: #{tpu_custom_call.1} parent=1 // pred_check_branch
      %80 = sbr.rel (0) target = $region37
    $region36: #{tpu_custom_call.1} parent=1 // pred_region
      %81 = dma.done [#allocation6], 8192
    $region37: #{tpu_custom_call.1} parent=1 // pred_fallthru
      _
    // Predicated region
    $region38: #{tpu_custom_call.1} parent=1 // pred_check
      _
    $region39: #{tpu_custom_call.1} parent=1 // pred_check_branch
      %83 = sbr.rel (0) target = $region41
    $region40: #{tpu_custom_call.1} parent=1 // pred_region
      %84 = dma.done [#allocation6], 64
    $region41: #{tpu_custom_call.1} parent=1 // pred_fallthru
      _
    // Predicated region
    $region42: #{tpu_custom_call.1} parent=1 // pred_check
      _
    $region43: #{tpu_custom_call.1} parent=1 // pred_check_branch
      %86 = sbr.rel (0) target = $region45
    $region44: #{tpu_custom_call.1} parent=1 // pred_region
      %87 = dma.done [#allocation9], 24576
    $region45: #{tpu_custom_call.1} parent=1 // pred_fallthru
      _
    // Predicated region
    $region46: #{tpu_custom_call.1} parent=1 // pred_check
      _
    $region47: #{tpu_custom_call.1} parent=1 // pred_check_branch
      %89 = sbr.rel (0) target = $region49
    $region48: #{tpu_custom_call.1} parent=1 // pred_region
      %90 = dma.done [#allocation9], 6144
    $region49: #{tpu_custom_call.1} parent=1 // pred_fallthru
      _
    %v92 = vld [vmem:[#allocation2] sm:$0xf]
    %v93 = vmax.f32 %v92, 0.0
    %v96 = vunpack.c.l.s4 1983009808
    %v97 = vunpack.c.0.s8 %v96
    %v98 = vlaneseq
    %v99 = vshrl.u32 %v98, 7
    %v100 = vsub.s32 %v97, %v99
    %v101 = vrot.slane %v93, %v100
    %v102 = vcombine.high %v101, %v101
    %v105 = vpack.c.bf16 %v101, %v101
    %v106 = vpack.c.bf16 %v102, %v102
    %v107 = vld [vmem:[#allocation5] sm:$0xff]
    %v108 = vld [vmem:[#allocation5 + $0x8] sm:$0xff]
    %v109 = vld [vmem:[#allocation5 + $0x10] sm:$0xff]
    %v110 = vld [vmem:[#allocation5 + $0x18] sm:$0xff]
    %v111 = vld [vmem:[#allocation5 + $0x20] sm:$0xff]
    %v112 = vld [vmem:[#allocation5 + $0x28] sm:$0xff]
    %v113 = vld [vmem:[#allocation5 + $0x30] sm:$0xff]
    %v114 = vld [vmem:[#allocation5 + $0x38] sm:$0xff]
    %v115 = vld [vmem:[#allocation5 + $0x40] sm:$0xff]
    %v116 = vld [vmem:[#allocation5 + $0x48] sm:$0xff]
    %v117 = vld [vmem:[#allocation5 + $0x50] sm:$0xff]
    %v118 = vld [vmem:[#allocation5 + $0x58] sm:$0xff]
    %v119 = vld [vmem:[#allocation5 + $0x60] sm:$0xff]
    %v120 = vld [vmem:[#allocation5 + $0x68] sm:$0xff]
    %v121 = vld [vmem:[#allocation5 + $0x70] sm:$0xff]
    %v122 = vld [vmem:[#allocation5 + $0x78] sm:$0xff]
    %v123 = vld [vmem:[#allocation5 + $0x80] sm:$0xff]
    %v124 = vld [vmem:[#allocation5 + $0x88] sm:$0xff]
    %v125 = vld [vmem:[#allocation5 + $0x90] sm:$0xff]
    %v126 = vld [vmem:[#allocation5 + $0x98] sm:$0xff]
    %v127 = vld [vmem:[#allocation5 + $0xa0] sm:$0xff]
    %v128 = vld [vmem:[#allocation5 + $0xa8] sm:$0xff]
    %v129 = vld [vmem:[#allocation5 + $0xb0] sm:$0xff]
    %v130 = vld [vmem:[#allocation5 + $0xb8] sm:$0xff]
    %v131 = vld [vmem:[#allocation5 + $0xc0] sm:$0xff]
    %v132 = vld [vmem:[#allocation5 + $0xc8] sm:$0xff]
    %v133 = vld [vmem:[#allocation5 + $0xd0] sm:$0xff]
    %v134 = vld [vmem:[#allocation5 + $0xd8] sm:$0xff]
    %v135 = vld [vmem:[#allocation5 + $0xe0] sm:$0xff]
    %v136 = vld [vmem:[#allocation5 + $0xe8] sm:$0xff]
    %v137 = vld [vmem:[#allocation5 + $0xf0] sm:$0xff]
    %v138 = vld [vmem:[#allocation5 + $0xf8] sm:$0xff]
    %v139 = vld [vmem:[#allocation5 + $0x100] sm:$0xff]
    %v140 = vld [vmem:[#allocation5 + $0x108] sm:$0xff]
    %v141 = vld [vmem:[#allocation5 + $0x110] sm:$0xff]
    %v142 = vld [vmem:[#allocation5 + $0x118] sm:$0xff]
    %v143 = vld [vmem:[#allocation5 + $0x120] sm:$0xff]
    %v144 = vld [vmem:[#allocation5 + $0x128] sm:$0xff]
    %v145 = vld [vmem:[#allocation5 + $0x130] sm:$0xff]
    %v146 = vld [vmem:[#allocation5 + $0x138] sm:$0xff]
    %v147 = vld [vmem:[#allocation5 + $0x140] sm:$0xff]
    %v148 = vld [vmem:[#allocation5 + $0x148] sm:$0xff]
    %v149 = vld [vmem:[#allocation5 + $0x150] sm:$0xff]
    %v150 = vld [vmem:[#allocation5 + $0x158] sm:$0xff]
    %v151 = vld [vmem:[#allocation5 + $0x160] sm:$0xff]
    %v152 = vld [vmem:[#allocation5 + $0x168] sm:$0xff]
    %v153 = vld [vmem:[#allocation5 + $0x170] sm:$0xff]
    %v154 = vld [vmem:[#allocation5 + $0x178] sm:$0xff]
    %v155 = vld [vmem:[#allocation5 + $0x180] sm:$0xff]
    %v156 = vld [vmem:[#allocation5 + $0x188] sm:$0xff]
    %v157 = vld [vmem:[#allocation5 + $0x190] sm:$0xff]
    %v158 = vld [vmem:[#allocation5 + $0x198] sm:$0xff]
    %v159 = vld [vmem:[#allocation5 + $0x1a0] sm:$0xff]
    %v160 = vld [vmem:[#allocation5 + $0x1a8] sm:$0xff]
    %v161 = vld [vmem:[#allocation5 + $0x1b0] sm:$0xff]
    %v162 = vld [vmem:[#allocation5 + $0x1b8] sm:$0xff]
    %v163 = vld [vmem:[#allocation5 + $0x1c0] sm:$0xff]
    %v164 = vld [vmem:[#allocation5 + $0x1c8] sm:$0xff]
    %v165 = vld [vmem:[#allocation5 + $0x1d0] sm:$0xff]
    %v166 = vld [vmem:[#allocation5 + $0x1d8] sm:$0xff]
    %v167 = vld [vmem:[#allocation5 + $0x1e0] sm:$0xff]
    %v168 = vld [vmem:[#allocation5 + $0x1e8] sm:$0xff]
    %v169 = vld [vmem:[#allocation5 + $0x1f0] sm:$0xff]
    %v170 = vld [vmem:[#allocation5 + $0x1f8] sm:$0xff]
    %v171 = vld [vmem:[#allocation7] sm:$0xf]
    %v173 = vlaneseq
    %v174 = vshrl.u32 %v173, 7
    %v175 = vsub.s32 0, %v174
    %v176 = vrot.slane %v171, %v175
    %v177 = vlaneseq
    %v178 = vshrl.u32 %v177, 7
    %v179 = vsub.s32 1, %v178
    %v180 = vrot.slane %v171, %v179
    %v181 = vlaneseq
    %v182 = vshrl.u32 %v181, 7
    %v183 = vsub.s32 2, %v182
    %v184 = vrot.slane %v171, %v183
    %v185 = vlaneseq
    %v186 = vshrl.u32 %v185, 7
    %v187 = vsub.s32 3, %v186
    %v188 = vrot.slane %v171, %v187
    %v257 = vunpack.c.l.b16 %v107
    %v258 = vunpack.c.h.b16 %v107
    %v259 = vunpack.c.l.b16 %v108
    %v260 = vunpack.c.h.b16 %v108
    %v261 = vunpack.c.l.b16 %v109
    %v262 = vunpack.c.h.b16 %v109
    %v263 = vunpack.c.l.b16 %v110
    %v264 = vunpack.c.h.b16 %v110
    %v265 = vunpack.c.l.b16 %v111
    %v266 = vunpack.c.h.b16 %v111
    %v267 = vunpack.c.l.b16 %v112
    %v268 = vunpack.c.h.b16 %v112
    %v269 = vunpack.c.l.b16 %v113
    %v270 = vunpack.c.h.b16 %v113
    %v271 = vunpack.c.l.b16 %v114
    %v272 = vunpack.c.h.b16 %v114
    %v273 = vunpack.c.l.b16 %v115
    %v274 = vunpack.c.h.b16 %v115
    %v275 = vunpack.c.l.b16 %v116
    %v276 = vunpack.c.h.b16 %v116
    %v277 = vunpack.c.l.b16 %v117
    %v278 = vunpack.c.h.b16 %v117
    %v279 = vunpack.c.l.b16 %v118
    %v280 = vunpack.c.h.b16 %v118
    %v281 = vunpack.c.l.b16 %v119
    %v282 = vunpack.c.h.b16 %v119
    %v283 = vunpack.c.l.b16 %v120
    %v284 = vunpack.c.h.b16 %v120
    %v285 = vunpack.c.l.b16 %v121
    %v286 = vunpack.c.h.b16 %v121
    %v287 = vunpack.c.l.b16 %v122
    %v288 = vunpack.c.h.b16 %v122
    %v289 = vunpack.c.l.b16 %v123
    %v290 = vunpack.c.h.b16 %v123
    %v291 = vunpack.c.l.b16 %v124
    %v292 = vunpack.c.h.b16 %v124
    %v293 = vunpack.c.l.b16 %v125
    %v294 = vunpack.c.h.b16 %v125
    %v295 = vunpack.c.l.b16 %v126
    %v296 = vunpack.c.h.b16 %v126
    %v297 = vunpack.c.l.b16 %v127
    %v298 = vunpack.c.h.b16 %v127
    %v299 = vunpack.c.l.b16 %v128
    %v300 = vunpack.c.h.b16 %v128
    %v301 = vunpack.c.l.b16 %v129
    %v302 = vunpack.c.h.b16 %v129
    %v303 = vunpack.c.l.b16 %v130
    %v304 = vunpack.c.h.b16 %v130
    %v305 = vunpack.c.l.b16 %v131
    %v306 = vunpack.c.h.b16 %v131
    %v307 = vunpack.c.l.b16 %v132
    %v308 = vunpack.c.h.b16 %v132
    %v309 = vunpack.c.l.b16 %v133
    %v310 = vunpack.c.h.b16 %v133
    %v311 = vunpack.c.l.b16 %v134
    %v312 = vunpack.c.h.b16 %v134
    %v313 = vunpack.c.l.b16 %v135
    %v314 = vunpack.c.h.b16 %v135
    %v315 = vunpack.c.l.b16 %v136
    %v316 = vunpack.c.h.b16 %v136
    %v317 = vunpack.c.l.b16 %v137
    %v318 = vunpack.c.h.b16 %v137
    %v319 = vunpack.c.l.b16 %v138
    %v320 = vunpack.c.h.b16 %v138
    %v321 = vunpack.c.l.b16 %v139
    %v322 = vunpack.c.h.b16 %v139
    %v323 = vunpack.c.l.b16 %v140
    %v324 = vunpack.c.h.b16 %v140
    %v325 = vunpack.c.l.b16 %v141
    %v326 = vunpack.c.h.b16 %v141
    %v327 = vunpack.c.l.b16 %v142
    %v328 = vunpack.c.h.b16 %v142
    %v329 = vunpack.c.l.b16 %v143
    %v330 = vunpack.c.h.b16 %v143
    %v331 = vunpack.c.l.b16 %v144
    %v332 = vunpack.c.h.b16 %v144
    %v333 = vunpack.c.l.b16 %v145
    %v334 = vunpack.c.h.b16 %v145
    %v335 = vunpack.c.l.b16 %v146
    %v336 = vunpack.c.h.b16 %v146
    %v337 = vunpack.c.l.b16 %v147
    %v338 = vunpack.c.h.b16 %v147
    %v339 = vunpack.c.l.b16 %v148
    %v340 = vunpack.c.h.b16 %v148
    %v341 = vunpack.c.l.b16 %v149
    %v342 = vunpack.c.h.b16 %v149
    %v343 = vunpack.c.l.b16 %v150
    %v344 = vunpack.c.h.b16 %v150
    %v345 = vunpack.c.l.b16 %v151
    %v346 = vunpack.c.h.b16 %v151
    %v347 = vunpack.c.l.b16 %v152
    %v348 = vunpack.c.h.b16 %v152
    %v349 = vunpack.c.l.b16 %v153
    %v350 = vunpack.c.h.b16 %v153
    %v351 = vunpack.c.l.b16 %v154
    %v352 = vunpack.c.h.b16 %v154
    %v353 = vunpack.c.l.b16 %v155
    %v354 = vunpack.c.h.b16 %v155
    %v355 = vunpack.c.l.b16 %v156
    %v356 = vunpack.c.h.b16 %v156
    %v357 = vunpack.c.l.b16 %v157
    %v358 = vunpack.c.h.b16 %v157
    %v359 = vunpack.c.l.b16 %v158
    %v360 = vunpack.c.h.b16 %v158
    %v361 = vunpack.c.l.b16 %v159
    %v362 = vunpack.c.h.b16 %v159
    %v363 = vunpack.c.l.b16 %v160
    %v364 = vunpack.c.h.b16 %v160
    %v365 = vunpack.c.l.b16 %v161
    %v366 = vunpack.c.h.b16 %v161
    %v367 = vunpack.c.l.b16 %v162
    %v368 = vunpack.c.h.b16 %v162
    %v369 = vunpack.c.l.b16 %v163
    %v370 = vunpack.c.h.b16 %v163
    %v371 = vunpack.c.l.b16 %v164
    %v372 = vunpack.c.h.b16 %v164
    %v373 = vunpack.c.l.b16 %v165
    %v374 = vunpack.c.h.b16 %v165
    %v375 = vunpack.c.l.b16 %v166
    %v376 = vunpack.c.h.b16 %v166
    %v377 = vunpack.c.l.b16 %v167
    %v378 = vunpack.c.h.b16 %v167
    %v379 = vunpack.c.l.b16 %v168
    %v380 = vunpack.c.h.b16 %v168
    %v381 = vunpack.c.l.b16 %v169
    %v382 = vunpack.c.h.b16 %v169
    %v383 = vunpack.c.l.b16 %v170
    %v384 = vunpack.c.h.b16 %v170
    %v385 = vpack.c.b16 %v261, %v257
    %v386 = vpack.c.b16 %v262, %v258
    %v387 = vpack.c.b16 %v263, %v259
    %v388 = vpack.c.b16 %v264, %v260
    %v389 = vpack.c.b16 %v269, %v265
    %v390 = vpack.c.b16 %v270, %v266
    %v391 = vpack.c.b16 %v271, %v267
    %v392 = vpack.c.b16 %v272, %v268
    %v393 = vpack.c.b16 %v277, %v273
    %v394 = vpack.c.b16 %v278, %v274
    %v395 = vpack.c.b16 %v279, %v275
    %v396 = vpack.c.b16 %v280, %v276
    %v397 = vpack.c.b16 %v285, %v281
    %v398 = vpack.c.b16 %v286, %v282
    %v399 = vpack.c.b16 %v287, %v283
    %v400 = vpack.c.b16 %v288, %v284
    %v401 = vpack.c.b16 %v293, %v289
    %v402 = vpack.c.b16 %v294, %v290
    %v403 = vpack.c.b16 %v295, %v291
    %v404 = vpack.c.b16 %v296, %v292
    %v405 = vpack.c.b16 %v301, %v297
    %v406 = vpack.c.b16 %v302, %v298
    %v407 = vpack.c.b16 %v303, %v299
    %v408 = vpack.c.b16 %v304, %v300
    %v409 = vpack.c.b16 %v309, %v305
    %v410 = vpack.c.b16 %v310, %v306
    %v411 = vpack.c.b16 %v311, %v307
    %v412 = vpack.c.b16 %v312, %v308
    %v413 = vpack.c.b16 %v317, %v313
    %v414 = vpack.c.b16 %v318, %v314
    %v415 = vpack.c.b16 %v319, %v315
    %v416 = vpack.c.b16 %v320, %v316
    %v417 = vpack.c.b16 %v325, %v321
    %v418 = vpack.c.b16 %v326, %v322
    %v419 = vpack.c.b16 %v327, %v323
    %v420 = vpack.c.b16 %v328, %v324
    %v421 = vpack.c.b16 %v333, %v329
    %v422 = vpack.c.b16 %v334, %v330
    %v423 = vpack.c.b16 %v335, %v331
    %v424 = vpack.c.b16 %v336, %v332
    %v425 = vpack.c.b16 %v341, %v337
    %v426 = vpack.c.b16 %v342, %v338
    %v427 = vpack.c.b16 %v343, %v339
    %v428 = vpack.c.b16 %v344, %v340
    %v429 = vpack.c.b16 %v349, %v345
    %v430 = vpack.c.b16 %v350, %v346
    %v431 = vpack.c.b16 %v351, %v347
    %v432 = vpack.c.b16 %v352, %v348
    %v433 = vpack.c.b16 %v357, %v353
    %v434 = vpack.c.b16 %v358, %v354
    %v435 = vpack.c.b16 %v359, %v355
    %v436 = vpack.c.b16 %v360, %v356
    %v437 = vpack.c.b16 %v365, %v361
    %v438 = vpack.c.b16 %v366, %v362
    %v439 = vpack.c.b16 %v367, %v363
    %v440 = vpack.c.b16 %v368, %v364
    %v441 = vpack.c.b16 %v373, %v369
    %v442 = vpack.c.b16 %v374, %v370
    %v443 = vpack.c.b16 %v375, %v371
    %v444 = vpack.c.b16 %v376, %v372
    %v445 = vpack.c.b16 %v381, %v377
    %v446 = vpack.c.b16 %v382, %v378
    %v447 = vpack.c.b16 %v383, %v379
    %v448 = vpack.c.b16 %v384, %v380
    %513 = vmatprep.subr.bf16.mxu0 %v414
    %514 = vmatpush1.bf16.msra.mxu0 %v413
    %515 = vmatprep.subr.bf16.mxu0 %v410
    %516 = vmatpush1.bf16.msra.mxu0 %v409
    %517 = vmatprep.subr.bf16.mxu0 %v406
    %518 = vmatpush1.bf16.msra.mxu0 %v405
    %519 = vmatprep.subr.bf16.mxu0 %v402
    %520 = vmatpush1.bf16.msra.mxu0 %v401
    %521 = vmatprep.subr.bf16.mxu0 %v398
    %522 = vmatpush1.bf16.msra.mxu0 %v397
    %523 = vmatprep.subr.bf16.mxu0 %v394
    %524 = vmatpush1.bf16.msra.mxu0 %v393
    %525 = vmatprep.subr.bf16.mxu0 %v390
    %526 = vmatpush1.bf16.msra.mxu0 %v389
    %527 = vmatprep.subr.bf16.mxu0 %v386
    %528 = vmatpush1.bf16.msra.mxu0 %v385
    %529 = vmatprep.subr.bf16.mxu0 %v446
    %530 = vmatpush2.bf16.msra.mxu0 %v445
    %531 = vmatprep.subr.bf16.mxu0 %v442
    %532 = vmatpush2.bf16.msra.mxu0 %v441
    %533 = vmatprep.subr.bf16.mxu0 %v438
    %534 = vmatpush2.bf16.msra.mxu0 %v437
    %535 = vmatprep.subr.bf16.mxu0 %v434
    %536 = vmatpush2.bf16.msra.mxu0 %v433
    %537 = vmatprep.subr.bf16.mxu0 %v430
    %538 = vmatpush2.bf16.msra.mxu0 %v429
    %539 = vmatprep.subr.bf16.mxu0 %v426
    %540 = vmatpush2.bf16.msra.mxu0 %v425
    %541 = vmatprep.subr.bf16.mxu0 %v422
    %542 = vmatpush2.bf16.msra.mxu0 %v421
    %543 = vmatprep.subr.bf16.mxu0 %v418
    %544 = vmatpush2.bf16.msra.mxu0 %v417
    %545 = vmatprep.mubr.bf16.mxu0 %v106
    %546 = vmatmul.mubr.bf16.gmra.mxu0 %v105
    %v547 = vpop.f32.mrf.mxu0
    %v548 = vadd.f32 %v176, %v547
    %v549 = vpop.f32.mrf.mxu0
    %v550 = vadd.f32 %v180, %v549
    %v551 = vpop.f32.mrf.mxu0
    %v552 = vpop.f32.mrf.mxu0
    %553 = vdwg.mxu0
    %554 = vmatprep.subr.bf16.mxu0 %v416
    %555 = vmatpush1.bf16.msra.mxu0 %v415
    %556 = vmatprep.subr.bf16.mxu0 %v412
    %557 = vmatpush1.bf16.msra.mxu0 %v411
    %558 = vmatprep.subr.bf16.mxu0 %v408
    %559 = vmatpush1.bf16.msra.mxu0 %v407
    %560 = vmatprep.subr.bf16.mxu0 %v404
    %561 = vmatpush1.bf16.msra.mxu0 %v403
    %562 = vmatprep.subr.bf16.mxu0 %v400
    %563 = vmatpush1.bf16.msra.mxu0 %v399
    %564 = vmatprep.subr.bf16.mxu0 %v396
    %565 = vmatpush1.bf16.msra.mxu0 %v395
    %566 = vmatprep.subr.bf16.mxu0 %v392
    %567 = vmatpush1.bf16.msra.mxu0 %v391
    %568 = vmatprep.subr.bf16.mxu0 %v388
    %569 = vmatpush1.bf16.msra.mxu0 %v387
    %570 = vmatprep.subr.bf16.mxu0 %v448
    %571 = vmatpush2.bf16.msra.mxu0 %v447
    %572 = vmatprep.subr.bf16.mxu0 %v444
    %573 = vmatpush2.bf16.msra.mxu0 %v443
    %574 = vmatprep.subr.bf16.mxu0 %v440
    %575 = vmatpush2.bf16.msra.mxu0 %v439
    %576 = vmatprep.subr.bf16.mxu0 %v436
    %577 = vmatpush2.bf16.msra.mxu0 %v435
    %578 = vmatprep.subr.bf16.mxu0 %v432
    %579 = vmatpush2.bf16.msra.mxu0 %v431
    %580 = vmatprep.subr.bf16.mxu0 %v428
    %581 = vmatpush2.bf16.msra.mxu0 %v427
    %582 = vmatprep.subr.bf16.mxu0 %v424
    %583 = vmatpush2.bf16.msra.mxu0 %v423
    %584 = vmatprep.subr.bf16.mxu0 %v420
    %585 = vmatpush2.bf16.msra.mxu0 %v419
    %586 = vmatprep.mubr.bf16.mxu0 %v106
    %587 = vmatmul.mubr.bf16.gmra.mxu0 %v105
    %v588 = vpop.f32.mrf.mxu0
    %v589 = vadd.f32 %v184, %v588
    %v590 = vpop.f32.mrf.mxu0
    %v591 = vadd.f32 %v188, %v590
    %v592 = vpop.f32.mrf.mxu0
    %v593 = vpop.f32.mrf.mxu0
    %594 = vdwg.mxu0
    %v595 = vmax.f32 %v548, 0.0
    %v596 = vmax.f32 %v550, 0.0
    %v597 = vmax.f32 %v589, 0.0
    %v598 = vmax.f32 %v591, 0.0
    %v599 = vpack.c.bf16 %v595, %v595
    %v600 = vpack.c.bf16 %v596, %v596
    %v601 = vpack.c.bf16 %v597, %v597
    %v602 = vpack.c.bf16 %v598, %v598
    %v603 = vld [vmem:[#allocation8] sm:$0xff]
    %v604 = vld [vmem:[#allocation8 + $0x8] sm:$0xff]
    %v605 = vld [vmem:[#allocation8 + $0x10] sm:$0xff]
    %v606 = vld [vmem:[#allocation8 + $0x18] sm:$0xff]
    %v607 = vld [vmem:[#allocation8 + $0x20] sm:$0xff]
    %v608 = vld [vmem:[#allocation8 + $0x28] sm:$0xff]
    %v609 = vld [vmem:[#allocation8 + $0x30] sm:$0xff]
    %v610 = vld [vmem:[#allocation8 + $0x38] sm:$0xff]
    %v611 = vld [vmem:[#allocation8 + $0x40] sm:$0xff]
    %v612 = vld [vmem:[#allocation8 + $0x48] sm:$0xff]
    %v613 = vld [vmem:[#allocation8 + $0x50] sm:$0xff]
    %v614 = vld [vmem:[#allocation8 + $0x58] sm:$0xff]
    %v615 = vld [vmem:[#allocation8 + $0x60] sm:$0xff]
    %v616 = vld [vmem:[#allocation8 + $0x68] sm:$0xff]
    %v617 = vld [vmem:[#allocation8 + $0x70] sm:$0xff]
    %v618 = vld [vmem:[#allocation8 + $0x78] sm:$0xff]
    %v619 = vld [vmem:[#allocation8 + $0x80] sm:$0xff]
    %v620 = vld [vmem:[#allocation8 + $0x88] sm:$0xff]
    %v621 = vld [vmem:[#allocation8 + $0x90] sm:$0xff]
    %v622 = vld [vmem:[#allocation8 + $0x98] sm:$0xff]
    %v623 = vld [vmem:[#allocation8 + $0xa0] sm:$0xff]
    %v624 = vld [vmem:[#allocation8 + $0xa8] sm:$0xff]
    %v625 = vld [vmem:[#allocation8 + $0xb0] sm:$0xff]
    %v626 = vld [vmem:[#allocation8 + $0xb8] sm:$0xff]
    %v627 = vld [vmem:[#allocation8 + $0xc0] sm:$0xff]
    %v628 = vld [vmem:[#allocation8 + $0xc8] sm:$0xff]
    %v629 = vld [vmem:[#allocation8 + $0xd0] sm:$0xff]
    %v630 = vld [vmem:[#allocation8 + $0xd8] sm:$0xff]
    %v631 = vld [vmem:[#allocation8 + $0xe0] sm:$0xff]
    %v632 = vld [vmem:[#allocation8 + $0xe8] sm:$0xff]
    %v633 = vld [vmem:[#allocation8 + $0xf0] sm:$0xff]
    %v634 = vld [vmem:[#allocation8 + $0xf8] sm:$0xff]
    %v635 = vld [vmem:[#allocation8 + $0x100] sm:$0xff]
    %v636 = vld [vmem:[#allocation8 + $0x108] sm:$0xff]
    %v637 = vld [vmem:[#allocation8 + $0x110] sm:$0xff]
    %v638 = vld [vmem:[#allocation8 + $0x118] sm:$0xff]
    %v639 = vld [vmem:[#allocation8 + $0x120] sm:$0xff]
    %v640 = vld [vmem:[#allocation8 + $0x128] sm:$0xff]
    %v641 = vld [vmem:[#allocation8 + $0x130] sm:$0xff]
    %v642 = vld [vmem:[#allocation8 + $0x138] sm:$0xff]
    %v643 = vld [vmem:[#allocation8 + $0x140] sm:$0xff]
    %v644 = vld [vmem:[#allocation8 + $0x148] sm:$0xff]
    %v645 = vld [vmem:[#allocation8 + $0x150] sm:$0xff]
    %v646 = vld [vmem:[#allocation8 + $0x158] sm:$0xff]
    %v647 = vld [vmem:[#allocation8 + $0x160] sm:$0xff]
    %v648 = vld [vmem:[#allocation8 + $0x168] sm:$0xff]
    %v649 = vld [vmem:[#allocation8 + $0x170] sm:$0xff]
    %v650 = vld [vmem:[#allocation8 + $0x178] sm:$0xff]
    %v651 = vld [vmem:[#allocation8 + $0x180] sm:$0xff]
    %v652 = vld [vmem:[#allocation8 + $0x188] sm:$0xff]
    %v653 = vld [vmem:[#allocation8 + $0x190] sm:$0xff]
    %v654 = vld [vmem:[#allocation8 + $0x198] sm:$0xff]
    %v655 = vld [vmem:[#allocation8 + $0x1a0] sm:$0xff]
    %v656 = vld [vmem:[#allocation8 + $0x1a8] sm:$0xff]
    %v657 = vld [vmem:[#allocation8 + $0x1b0] sm:$0xff]
    %v658 = vld [vmem:[#allocation8 + $0x1b8] sm:$0xff]
    %v659 = vld [vmem:[#allocation8 + $0x1c0] sm:$0xff]
    %v660 = vld [vmem:[#allocation8 + $0x1c8] sm:$0xff]
    %v661 = vld [vmem:[#allocation8 + $0x1d0] sm:$0xff]
    %v662 = vld [vmem:[#allocation8 + $0x1d8] sm:$0xff]
    %v663 = vld [vmem:[#allocation8 + $0x1e0] sm:$0xff]
    %v664 = vld [vmem:[#allocation8 + $0x1e8] sm:$0xff]
    %v665 = vld [vmem:[#allocation8 + $0x1f0] sm:$0xff]
    %v666 = vld [vmem:[#allocation8 + $0x1f8] sm:$0xff]
    %v667 = vld [vmem:[#allocation8 + $0x200] sm:$0xff]
    %v668 = vld [vmem:[#allocation8 + $0x208] sm:$0xff]
    %v669 = vld [vmem:[#allocation8 + $0x210] sm:$0xff]
    %v670 = vld [vmem:[#allocation8 + $0x218] sm:$0xff]
    %v671 = vld [vmem:[#allocation8 + $0x220] sm:$0xff]
    %v672 = vld [vmem:[#allocation8 + $0x228] sm:$0xff]
    %v673 = vld [vmem:[#allocation8 + $0x230] sm:$0xff]
    %v674 = vld [vmem:[#allocation8 + $0x238] sm:$0xff]
    %v675 = vld [vmem:[#allocation8 + $0x240] sm:$0xff]
    %v676 = vld [vmem:[#allocation8 + $0x248] sm:$0xff]
    %v677 = vld [vmem:[#allocation8 + $0x250] sm:$0xff]
    %v678 = vld [vmem:[#allocation8 + $0x258] sm:$0xff]
    %v679 = vld [vmem:[#allocation8 + $0x260] sm:$0xff]
    %v680 = vld [vmem:[#allocation8 + $0x268] sm:$0xff]
    %v681 = vld [vmem:[#allocation8 + $0x270] sm:$0xff]
    %v682 = vld [vmem:[#allocation8 + $0x278] sm:$0xff]
    %v683 = vld [vmem:[#allocation8 + $0x280] sm:$0xff]
    %v684 = vld [vmem:[#allocation8 + $0x288] sm:$0xff]
    %v685 = vld [vmem:[#allocation8 + $0x290] sm:$0xff]
    %v686 = vld [vmem:[#allocation8 + $0x298] sm:$0xff]
    %v687 = vld [vmem:[#allocation8 + $0x2a0] sm:$0xff]
    %v688 = vld [vmem:[#allocation8 + $0x2a8] sm:$0xff]
    %v689 = vld [vmem:[#allocation8 + $0x2b0] sm:$0xff]
    %v690 = vld [vmem:[#allocation8 + $0x2b8] sm:$0xff]
    %v691 = vld [vmem:[#allocation8 + $0x2c0] sm:$0xff]
    %v692 = vld [vmem:[#allocation8 + $0x2c8] sm:$0xff]
    %v693 = vld [vmem:[#allocation8 + $0x2d0] sm:$0xff]
    %v694 = vld [vmem:[#allocation8 + $0x2d8] sm:$0xff]
    %v695 = vld [vmem:[#allocation8 + $0x2e0] sm:$0xff]
    %v696 = vld [vmem:[#allocation8 + $0x2e8] sm:$0xff]
    %v697 = vld [vmem:[#allocation8 + $0x2f0] sm:$0xff]
    %v698 = vld [vmem:[#allocation8 + $0x2f8] sm:$0xff]
    %v699 = vld [vmem:[#allocation8 + $0x300] sm:$0xff]
    %v700 = vld [vmem:[#allocation8 + $0x308] sm:$0xff]
    %v701 = vld [vmem:[#allocation8 + $0x310] sm:$0xff]
    %v702 = vld [vmem:[#allocation8 + $0x318] sm:$0xff]
    %v703 = vld [vmem:[#allocation8 + $0x320] sm:$0xff]
    %v704 = vld [vmem:[#allocation8 + $0x328] sm:$0xff]
    %v705 = vld [vmem:[#allocation8 + $0x330] sm:$0xff]
    %v706 = vld [vmem:[#allocation8 + $0x338] sm:$0xff]
    %v707 = vld [vmem:[#allocation8 + $0x340] sm:$0xff]
    %v708 = vld [vmem:[#allocation8 + $0x348] sm:$0xff]
    %v709 = vld [vmem:[#allocation8 + $0x350] sm:$0xff]
    %v710 = vld [vmem:[#allocation8 + $0x358] sm:$0xff]
    %v711 = vld [vmem:[#allocation8 + $0x360] sm:$0xff]
    %v712 = vld [vmem:[#allocation8 + $0x368] sm:$0xff]
    %v713 = vld [vmem:[#allocation8 + $0x370] sm:$0xff]
    %v714 = vld [vmem:[#allocation8 + $0x378] sm:$0xff]
    %v715 = vld [vmem:[#allocation8 + $0x380] sm:$0xff]
    %v716 = vld [vmem:[#allocation8 + $0x388] sm:$0xff]
    %v717 = vld [vmem:[#allocation8 + $0x390] sm:$0xff]
    %v718 = vld [vmem:[#allocation8 + $0x398] sm:$0xff]
    %v719 = vld [vmem:[#allocation8 + $0x3a0] sm:$0xff]
    %v720 = vld [vmem:[#allocation8 + $0x3a8] sm:$0xff]
    %v721 = vld [vmem:[#allocation8 + $0x3b0] sm:$0xff]
    %v722 = vld [vmem:[#allocation8 + $0x3b8] sm:$0xff]
    %v723 = vld [vmem:[#allocation8 + $0x3c0] sm:$0xff]
    %v724 = vld [vmem:[#allocation8 + $0x3c8] sm:$0xff]
    %v725 = vld [vmem:[#allocation8 + $0x3d0] sm:$0xff]
    %v726 = vld [vmem:[#allocation8 + $0x3d8] sm:$0xff]
    %v727 = vld [vmem:[#allocation8 + $0x3e0] sm:$0xff]
    %v728 = vld [vmem:[#allocation8 + $0x3e8] sm:$0xff]
    %v729 = vld [vmem:[#allocation8 + $0x3f0] sm:$0xff]
    %v730 = vld [vmem:[#allocation8 + $0x3f8] sm:$0xff]
    %v731 = vld [vmem:[#allocation8 + $0x400] sm:$0xff]
    %v732 = vld [vmem:[#allocation8 + $0x408] sm:$0xff]
    %v733 = vld [vmem:[#allocation8 + $0x410] sm:$0xff]
    %v734 = vld [vmem:[#allocation8 + $0x418] sm:$0xff]
    %v735 = vld [vmem:[#allocation8 + $0x420] sm:$0xff]
    %v736 = vld [vmem:[#allocation8 + $0x428] sm:$0xff]
    %v737 = vld [vmem:[#allocation8 + $0x430] sm:$0xff]
    %v738 = vld [vmem:[#allocation8 + $0x438] sm:$0xff]
    %v739 = vld [vmem:[#allocation8 + $0x440] sm:$0xff]
    %v740 = vld [vmem:[#allocation8 + $0x448] sm:$0xff]
    %v741 = vld [vmem:[#allocation8 + $0x450] sm:$0xff]
    %v742 = vld [vmem:[#allocation8 + $0x458] sm:$0xff]
    %v743 = vld [vmem:[#allocation8 + $0x460] sm:$0xff]
    %v744 = vld [vmem:[#allocation8 + $0x468] sm:$0xff]
    %v745 = vld [vmem:[#allocation8 + $0x470] sm:$0xff]
    %v746 = vld [vmem:[#allocation8 + $0x478] sm:$0xff]
    %v747 = vld [vmem:[#allocation8 + $0x480] sm:$0xff]
    %v748 = vld [vmem:[#allocation8 + $0x488] sm:$0xff]
    %v749 = vld [vmem:[#allocation8 + $0x490] sm:$0xff]
    %v750 = vld [vmem:[#allocation8 + $0x498] sm:$0xff]
    %v751 = vld [vmem:[#allocation8 + $0x4a0] sm:$0xff]
    %v752 = vld [vmem:[#allocation8 + $0x4a8] sm:$0xff]
    %v753 = vld [vmem:[#allocation8 + $0x4b0] sm:$0xff]
    %v754 = vld [vmem:[#allocation8 + $0x4b8] sm:$0xff]
    %v755 = vld [vmem:[#allocation8 + $0x4c0] sm:$0xff]
    %v756 = vld [vmem:[#allocation8 + $0x4c8] sm:$0xff]
    %v757 = vld [vmem:[#allocation8 + $0x4d0] sm:$0xff]
    %v758 = vld [vmem:[#allocation8 + $0x4d8] sm:$0xff]
    %v759 = vld [vmem:[#allocation8 + $0x4e0] sm:$0xff]
    %v760 = vld [vmem:[#allocation8 + $0x4e8] sm:$0xff]
    %v761 = vld [vmem:[#allocation8 + $0x4f0] sm:$0xff]
    %v762 = vld [vmem:[#allocation8 + $0x4f8] sm:$0xff]
    %v763 = vld [vmem:[#allocation8 + $0x500] sm:$0xff]
    %v764 = vld [vmem:[#allocation8 + $0x508] sm:$0xff]
    %v765 = vld [vmem:[#allocation8 + $0x510] sm:$0xff]
    %v766 = vld [vmem:[#allocation8 + $0x518] sm:$0xff]
    %v767 = vld [vmem:[#allocation8 + $0x520] sm:$0xff]
    %v768 = vld [vmem:[#allocation8 + $0x528] sm:$0xff]
    %v769 = vld [vmem:[#allocation8 + $0x530] sm:$0xff]
    %v770 = vld [vmem:[#allocation8 + $0x538] sm:$0xff]
    %v771 = vld [vmem:[#allocation8 + $0x540] sm:$0xff]
    %v772 = vld [vmem:[#allocation8 + $0x548] sm:$0xff]
    %v773 = vld [vmem:[#allocation8 + $0x550] sm:$0xff]
    %v774 = vld [vmem:[#allocation8 + $0x558] sm:$0xff]
    %v775 = vld [vmem:[#allocation8 + $0x560] sm:$0xff]
    %v776 = vld [vmem:[#allocation8 + $0x568] sm:$0xff]
    %v777 = vld [vmem:[#allocation8 + $0x570] sm:$0xff]
    %v778 = vld [vmem:[#allocation8 + $0x578] sm:$0xff]
    %v779 = vld [vmem:[#allocation8 + $0x580] sm:$0xff]
    %v780 = vld [vmem:[#allocation8 + $0x588] sm:$0xff]
    %v781 = vld [vmem:[#allocation8 + $0x590] sm:$0xff]
    %v782 = vld [vmem:[#allocation8 + $0x598] sm:$0xff]
    %v783 = vld [vmem:[#allocation8 + $0x5a0] sm:$0xff]
    %v784 = vld [vmem:[#allocation8 + $0x5a8] sm:$0xff]
    %v785 = vld [vmem:[#allocation8 + $0x5b0] sm:$0xff]
    %v786 = vld [vmem:[#allocation8 + $0x5b8] sm:$0xff]
    %v787 = vld [vmem:[#allocation8 + $0x5c0] sm:$0xff]
    %v788 = vld [vmem:[#allocation8 + $0x5c8] sm:$0xff]
    %v789 = vld [vmem:[#allocation8 + $0x5d0] sm:$0xff]
    %v790 = vld [vmem:[#allocation8 + $0x5d8] sm:$0xff]
    %v791 = vld [vmem:[#allocation8 + $0x5e0] sm:$0xff]
    %v792 = vld [vmem:[#allocation8 + $0x5e8] sm:$0xff]
    %v793 = vld [vmem:[#allocation8 + $0x5f0] sm:$0xff]
    %v794 = vld [vmem:[#allocation8 + $0x5f8] sm:$0xff]
    %v795 = vld [vmem:[%s4] sm:$0x3f]
    %v797 = vlaneseq
    %v798 = vshrl.u32 %v797, 7
    %v799 = vsub.s32 0, %v798
    %v800 = vrot.slane %v795, %v799
    %v801 = vlaneseq
    %v802 = vshrl.u32 %v801, 7
    %v803 = vsub.s32 1, %v802
    %v804 = vrot.slane %v795, %v803
    %v805 = vlaneseq
    %v806 = vshrl.u32 %v805, 7
    %v807 = vsub.s32 2, %v806
    %v808 = vrot.slane %v795, %v807
    %v809 = vlaneseq
    %v810 = vshrl.u32 %v809, 7
    %v811 = vsub.s32 3, %v810
    %v812 = vrot.slane %v795, %v811
    %v813 = vlaneseq
    %v814 = vshrl.u32 %v813, 7
    %v815 = vsub.s32 4, %v814
    %v816 = vrot.slane %v795, %v815
    %v817 = vlaneseq
    %v818 = vshrl.u32 %v817, 7
    %v819 = vsub.s32 5, %v818
    %v820 = vrot.slane %v795, %v819
    %v1019 = vunpack.c.l.b16 %v603
    %v1020 = vunpack.c.h.b16 %v603
    %v1021 = vunpack.c.l.b16 %v604
    %v1022 = vunpack.c.h.b16 %v604
    %v1023 = vunpack.c.l.b16 %v605
    %v1024 = vunpack.c.h.b16 %v605
    %v1025 = vunpack.c.l.b16 %v606
    %v1026 = vunpack.c.h.b16 %v606
    %v1027 = vunpack.c.l.b16 %v607
    %v1028 = vunpack.c.h.b16 %v607
    %v1029 = vunpack.c.l.b16 %v608
    %v1030 = vunpack.c.h.b16 %v608
    %v1031 = vunpack.c.l.b16 %v609
    %v1032 = vunpack.c.h.b16 %v609
    %v1033 = vunpack.c.l.b16 %v610
    %v1034 = vunpack.c.h.b16 %v610
    %v1035 = vunpack.c.l.b16 %v611
    %v1036 = vunpack.c.h.b16 %v611
    %v1037 = vunpack.c.l.b16 %v612
    %v1038 = vunpack.c.h.b16 %v612
    %v1039 = vunpack.c.l.b16 %v613
    %v1040 = vunpack.c.h.b16 %v613
    %v1041 = vunpack.c.l.b16 %v614
    %v1042 = vunpack.c.h.b16 %v614
    %v1043 = vunpack.c.l.b16 %v615
    %v1044 = vunpack.c.h.b16 %v615
    %v1045 = vunpack.c.l.b16 %v616
    %v1046 = vunpack.c.h.b16 %v616
    %v1047 = vunpack.c.l.b16 %v617
    %v1048 = vunpack.c.h.b16 %v617
    %v1049 = vunpack.c.l.b16 %v618
    %v1050 = vunpack.c.h.b16 %v618
    %v1051 = vunpack.c.l.b16 %v619
    %v1052 = vunpack.c.h.b16 %v619
    %v1053 = vunpack.c.l.b16 %v620
    %v1054 = vunpack.c.h.b16 %v620
    %v1055 = vunpack.c.l.b16 %v621
    %v1056 = vunpack.c.h.b16 %v621
    %v1057 = vunpack.c.l.b16 %v622
    %v1058 = vunpack.c.h.b16 %v622
    %v1059 = vunpack.c.l.b16 %v623
    %v1060 = vunpack.c.h.b16 %v623
    %v1061 = vunpack.c.l.b16 %v624
    %v1062 = vunpack.c.h.b16 %v624
    %v1063 = vunpack.c.l.b16 %v625
    %v1064 = vunpack.c.h.b16 %v625
    %v1065 = vunpack.c.l.b16 %v626
    %v1066 = vunpack.c.h.b16 %v626
    %v1067 = vunpack.c.l.b16 %v627
    %v1068 = vunpack.c.h.b16 %v627
    %v1069 = vunpack.c.l.b16 %v628
    %v1070 = vunpack.c.h.b16 %v628
    %v1071 = vunpack.c.l.b16 %v629
    %v1072 = vunpack.c.h.b16 %v629
    %v1073 = vunpack.c.l.b16 %v630
    %v1074 = vunpack.c.h.b16 %v630
    %v1075 = vunpack.c.l.b16 %v631
    %v1076 = vunpack.c.h.b16 %v631
    %v1077 = vunpack.c.l.b16 %v632
    %v1078 = vunpack.c.h.b16 %v632
    %v1079 = vunpack.c.l.b16 %v633
    %v1080 = vunpack.c.h.b16 %v633
    %v1081 = vunpack.c.l.b16 %v634
    %v1082 = vunpack.c.h.b16 %v634
    %v1083 = vunpack.c.l.b16 %v635
    %v1084 = vunpack.c.h.b16 %v635
    %v1085 = vunpack.c.l.b16 %v636
    %v1086 = vunpack.c.h.b16 %v636
    %v1087 = vunpack.c.l.b16 %v637
    %v1088 = vunpack.c.h.b16 %v637
    %v1089 = vunpack.c.l.b16 %v638
    %v1090 = vunpack.c.h.b16 %v638
    %v1091 = vunpack.c.l.b16 %v639
    %v1092 = vunpack.c.h.b16 %v639
    %v1093 = vunpack.c.l.b16 %v640
    %v1094 = vunpack.c.h.b16 %v640
    %v1095 = vunpack.c.l.b16 %v641
    %v1096 = vunpack.c.h.b16 %v641
    %v1097 = vunpack.c.l.b16 %v642
    %v1098 = vunpack.c.h.b16 %v642
    %v1099 = vunpack.c.l.b16 %v643
    %v1100 = vunpack.c.h.b16 %v643
    %v1101 = vunpack.c.l.b16 %v644
    %v1102 = vunpack.c.h.b16 %v644
    %v1103 = vunpack.c.l.b16 %v645
    %v1104 = vunpack.c.h.b16 %v645
    %v1105 = vunpack.c.l.b16 %v646
    %v1106 = vunpack.c.h.b16 %v646
    %v1107 = vunpack.c.l.b16 %v647
    %v1108 = vunpack.c.h.b16 %v647
    %v1109 = vunpack.c.l.b16 %v648
    %v1110 = vunpack.c.h.b16 %v648
    %v1111 = vunpack.c.l.b16 %v649
    %v1112 = vunpack.c.h.b16 %v649
    %v1113 = vunpack.c.l.b16 %v650
    %v1114 = vunpack.c.h.b16 %v650
    %v1115 = vunpack.c.l.b16 %v651
    %v1116 = vunpack.c.h.b16 %v651
    %v1117 = vunpack.c.l.b16 %v652
    %v1118 = vunpack.c.h.b16 %v652
    %v1119 = vunpack.c.l.b16 %v653
    %v1120 = vunpack.c.h.b16 %v653
    %v1121 = vunpack.c.l.b16 %v654
    %v1122 = vunpack.c.h.b16 %v654
    %v1123 = vunpack.c.l.b16 %v655
    %v1124 = vunpack.c.h.b16 %v655
    %v1125 = vunpack.c.l.b16 %v656
    %v1126 = vunpack.c.h.b16 %v656
    %v1127 = vunpack.c.l.b16 %v657
    %v1128 = vunpack.c.h.b16 %v657
    %v1129 = vunpack.c.l.b16 %v658
    %v1130 = vunpack.c.h.b16 %v658
    %v1131 = vunpack.c.l.b16 %v659
    %v1132 = vunpack.c.h.b16 %v659
    %v1133 = vunpack.c.l.b16 %v660
    %v1134 = vunpack.c.h.b16 %v660
    %v1135 = vunpack.c.l.b16 %v661
    %v1136 = vunpack.c.h.b16 %v661
    %v1137 = vunpack.c.l.b16 %v662
    %v1138 = vunpack.c.h.b16 %v662
    %v1139 = vunpack.c.l.b16 %v663
    %v1140 = vunpack.c.h.b16 %v663
    %v1141 = vunpack.c.l.b16 %v664
    %v1142 = vunpack.c.h.b16 %v664
    %v1143 = vunpack.c.l.b16 %v665
    %v1144 = vunpack.c.h.b16 %v665
    %v1145 = vunpack.c.l.b16 %v666
    %v1146 = vunpack.c.h.b16 %v666
    %v1147 = vunpack.c.l.b16 %v667
    %v1148 = vunpack.c.h.b16 %v667
    %v1149 = vunpack.c.l.b16 %v668
    %v1150 = vunpack.c.h.b16 %v668
    %v1151 = vunpack.c.l.b16 %v669
    %v1152 = vunpack.c.h.b16 %v669
    %v1153 = vunpack.c.l.b16 %v670
    %v1154 = vunpack.c.h.b16 %v670
    %v1155 = vunpack.c.l.b16 %v671
    %v1156 = vunpack.c.h.b16 %v671
    %v1157 = vunpack.c.l.b16 %v672
    %v1158 = vunpack.c.h.b16 %v672
    %v1159 = vunpack.c.l.b16 %v673
    %v1160 = vunpack.c.h.b16 %v673
    %v1161 = vunpack.c.l.b16 %v674
    %v1162 = vunpack.c.h.b16 %v674
    %v1163 = vunpack.c.l.b16 %v675
    %v1164 = vunpack.c.h.b16 %v675
    %v1165 = vunpack.c.l.b16 %v676
    %v1166 = vunpack.c.h.b16 %v676
    %v1167 = vunpack.c.l.b16 %v677
    %v1168 = vunpack.c.h.b16 %v677
    %v1169 = vunpack.c.l.b16 %v678
    %v1170 = vunpack.c.h.b16 %v678
    %v1171 = vunpack.c.l.b16 %v679
    %v1172 = vunpack.c.h.b16 %v679
    %v1173 = vunpack.c.l.b16 %v680
    %v1174 = vunpack.c.h.b16 %v680
    %v1175 = vunpack.c.l.b16 %v681
    %v1176 = vunpack.c.h.b16 %v681
    %v1177 = vunpack.c.l.b16 %v682
    %v1178 = vunpack.c.h.b16 %v682
    %v1179 = vunpack.c.l.b16 %v683
    %v1180 = vunpack.c.h.b16 %v683
    %v1181 = vunpack.c.l.b16 %v684
    %v1182 = vunpack.c.h.b16 %v684
    %v1183 = vunpack.c.l.b16 %v685
    %v1184 = vunpack.c.h.b16 %v685
    %v1185 = vunpack.c.l.b16 %v686
    %v1186 = vunpack.c.h.b16 %v686
    %v1187 = vunpack.c.l.b16 %v687
    %v1188 = vunpack.c.h.b16 %v687
    %v1189 = vunpack.c.l.b16 %v688
    %v1190 = vunpack.c.h.b16 %v688
    %v1191 = vunpack.c.l.b16 %v689
    %v1192 = vunpack.c.h.b16 %v689
    %v1193 = vunpack.c.l.b16 %v690
    %v1194 = vunpack.c.h.b16 %v690
    %v1195 = vunpack.c.l.b16 %v691
    %v1196 = vunpack.c.h.b16 %v691
    %v1197 = vunpack.c.l.b16 %v692
    %v1198 = vunpack.c.h.b16 %v692
    %v1199 = vunpack.c.l.b16 %v693
    %v1200 = vunpack.c.h.b16 %v693
    %v1201 = vunpack.c.l.b16 %v694
    %v1202 = vunpack.c.h.b16 %v694
    %v1203 = vunpack.c.l.b16 %v695
    %v1204 = vunpack.c.h.b16 %v695
    %v1205 = vunpack.c.l.b16 %v696
    %v1206 = vunpack.c.h.b16 %v696
    %v1207 = vunpack.c.l.b16 %v697
    %v1208 = vunpack.c.h.b16 %v697
    %v1209 = vunpack.c.l.b16 %v698
    %v1210 = vunpack.c.h.b16 %v698
    %v1211 = vunpack.c.l.b16 %v699
    %v1212 = vunpack.c.h.b16 %v699
    %v1213 = vunpack.c.l.b16 %v700
    %v1214 = vunpack.c.h.b16 %v700
    %v1215 = vunpack.c.l.b16 %v701
    %v1216 = vunpack.c.h.b16 %v701
    %v1217 = vunpack.c.l.b16 %v702
    %v1218 = vunpack.c.h.b16 %v702
    %v1219 = vunpack.c.l.b16 %v703
    %v1220 = vunpack.c.h.b16 %v703
    %v1221 = vunpack.c.l.b16 %v704
    %v1222 = vunpack.c.h.b16 %v704
    %v1223 = vunpack.c.l.b16 %v705
    %v1224 = vunpack.c.h.b16 %v705
    %v1225 = vunpack.c.l.b16 %v706
    %v1226 = vunpack.c.h.b16 %v706
    %v1227 = vunpack.c.l.b16 %v707
    %v1228 = vunpack.c.h.b16 %v707
    %v1229 = vunpack.c.l.b16 %v708
    %v1230 = vunpack.c.h.b16 %v708
    %v1231 = vunpack.c.l.b16 %v709
    %v1232 = vunpack.c.h.b16 %v709
    %v1233 = vunpack.c.l.b16 %v710
    %v1234 = vunpack.c.h.b16 %v710
    %v1235 = vunpack.c.l.b16 %v711
    %v1236 = vunpack.c.h.b16 %v711
    %v1237 = vunpack.c.l.b16 %v712
    %v1238 = vunpack.c.h.b16 %v712
    %v1239 = vunpack.c.l.b16 %v713
    %v1240 = vunpack.c.h.b16 %v713
    %v1241 = vunpack.c.l.b16 %v714
    %v1242 = vunpack.c.h.b16 %v714
    %v1243 = vunpack.c.l.b16 %v715
    %v1244 = vunpack.c.h.b16 %v715
    %v1245 = vunpack.c.l.b16 %v716
    %v1246 = vunpack.c.h.b16 %v716
    %v1247 = vunpack.c.l.b16 %v717
    %v1248 = vunpack.c.h.b16 %v717
    %v1249 = vunpack.c.l.b16 %v718
    %v1250 = vunpack.c.h.b16 %v718
    %v1251 = vunpack.c.l.b16 %v719
    %v1252 = vunpack.c.h.b16 %v719
    %v1253 = vunpack.c.l.b16 %v720
    %v1254 = vunpack.c.h.b16 %v720
    %v1255 = vunpack.c.l.b16 %v721
    %v1256 = vunpack.c.h.b16 %v721
    %v1257 = vunpack.c.l.b16 %v722
    %v1258 = vunpack.c.h.b16 %v722
    %v1259 = vunpack.c.l.b16 %v723
    %v1260 = vunpack.c.h.b16 %v723
    %v1261 = vunpack.c.l.b16 %v724
    %v1262 = vunpack.c.h.b16 %v724
    %v1263 = vunpack.c.l.b16 %v725
    %v1264 = vunpack.c.h.b16 %v725
    %v1265 = vunpack.c.l.b16 %v726
    %v1266 = vunpack.c.h.b16 %v726
    %v1267 = vunpack.c.l.b16 %v727
    %v1268 = vunpack.c.h.b16 %v727
    %v1269 = vunpack.c.l.b16 %v728
    %v1270 = vunpack.c.h.b16 %v728
    %v1271 = vunpack.c.l.b16 %v729
    %v1272 = vunpack.c.h.b16 %v729
    %v1273 = vunpack.c.l.b16 %v730
    %v1274 = vunpack.c.h.b16 %v730
    %v1275 = vunpack.c.l.b16 %v731
    %v1276 = vunpack.c.h.b16 %v731
    %v1277 = vunpack.c.l.b16 %v732
    %v1278 = vunpack.c.h.b16 %v732
    %v1279 = vunpack.c.l.b16 %v733
    %v1280 = vunpack.c.h.b16 %v733
    %v1281 = vunpack.c.l.b16 %v734
    %v1282 = vunpack.c.h.b16 %v734
    %v1283 = vunpack.c.l.b16 %v735
    %v1284 = vunpack.c.h.b16 %v735
    %v1285 = vunpack.c.l.b16 %v736
    %v1286 = vunpack.c.h.b16 %v736
    %v1287 = vunpack.c.l.b16 %v737
    %v1288 = vunpack.c.h.b16 %v737
    %v1289 = vunpack.c.l.b16 %v738
    %v1290 = vunpack.c.h.b16 %v738
    %v1291 = vunpack.c.l.b16 %v739
    %v1292 = vunpack.c.h.b16 %v739
    %v1293 = vunpack.c.l.b16 %v740
    %v1294 = vunpack.c.h.b16 %v740
    %v1295 = vunpack.c.l.b16 %v741
    %v1296 = vunpack.c.h.b16 %v741
    %v1297 = vunpack.c.l.b16 %v742
    %v1298 = vunpack.c.h.b16 %v742
    %v1299 = vunpack.c.l.b16 %v743
    %v1300 = vunpack.c.h.b16 %v743
    %v1301 = vunpack.c.l.b16 %v744
    %v1302 = vunpack.c.h.b16 %v744
    %v1303 = vunpack.c.l.b16 %v745
    %v1304 = vunpack.c.h.b16 %v745
    %v1305 = vunpack.c.l.b16 %v746
    %v1306 = vunpack.c.h.b16 %v746
    %v1307 = vunpack.c.l.b16 %v747
    %v1308 = vunpack.c.h.b16 %v747
    %v1309 = vunpack.c.l.b16 %v748
    %v1310 = vunpack.c.h.b16 %v748
    %v1311 = vunpack.c.l.b16 %v749
    %v1312 = vunpack.c.h.b16 %v749
    %v1313 = vunpack.c.l.b16 %v750
    %v1314 = vunpack.c.h.b16 %v750
    %v1315 = vunpack.c.l.b16 %v751
    %v1316 = vunpack.c.h.b16 %v751
    %v1317 = vunpack.c.l.b16 %v752
    %v1318 = vunpack.c.h.b16 %v752
    %v1319 = vunpack.c.l.b16 %v753
    %v1320 = vunpack.c.h.b16 %v753
    %v1321 = vunpack.c.l.b16 %v754
    %v1322 = vunpack.c.h.b16 %v754
    %v1323 = vunpack.c.l.b16 %v755
    %v1324 = vunpack.c.h.b16 %v755
    %v1325 = vunpack.c.l.b16 %v756
    %v1326 = vunpack.c.h.b16 %v756
    %v1327 = vunpack.c.l.b16 %v757
    %v1328 = vunpack.c.h.b16 %v757
    %v1329 = vunpack.c.l.b16 %v758
    %v1330 = vunpack.c.h.b16 %v758
    %v1331 = vunpack.c.l.b16 %v759
    %v1332 = vunpack.c.h.b16 %v759
    %v1333 = vunpack.c.l.b16 %v760
    %v1334 = vunpack.c.h.b16 %v760
    %v1335 = vunpack.c.l.b16 %v761
    %v1336 = vunpack.c.h.b16 %v761
    %v1337 = vunpack.c.l.b16 %v762
    %v1338 = vunpack.c.h.b16 %v762
    %v1339 = vunpack.c.l.b16 %v763
    %v1340 = vunpack.c.h.b16 %v763
    %v1341 = vunpack.c.l.b16 %v764
    %v1342 = vunpack.c.h.b16 %v764
    %v1343 = vunpack.c.l.b16 %v765
    %v1344 = vunpack.c.h.b16 %v765
    %v1345 = vunpack.c.l.b16 %v766
    %v1346 = vunpack.c.h.b16 %v766
    %v1347 = vunpack.c.l.b16 %v767
    %v1348 = vunpack.c.h.b16 %v767
    %v1349 = vunpack.c.l.b16 %v768
    %v1350 = vunpack.c.h.b16 %v768
    %v1351 = vunpack.c.l.b16 %v769
    %v1352 = vunpack.c.h.b16 %v769
    %v1353 = vunpack.c.l.b16 %v770
    %v1354 = vunpack.c.h.b16 %v770
    %v1355 = vunpack.c.l.b16 %v771
    %v1356 = vunpack.c.h.b16 %v771
    %v1357 = vunpack.c.l.b16 %v772
    %v1358 = vunpack.c.h.b16 %v772
    %v1359 = vunpack.c.l.b16 %v773
    %v1360 = vunpack.c.h.b16 %v773
    %v1361 = vunpack.c.l.b16 %v774
    %v1362 = vunpack.c.h.b16 %v774
    %v1363 = vunpack.c.l.b16 %v775
    %v1364 = vunpack.c.h.b16 %v775
    %v1365 = vunpack.c.l.b16 %v776
    %v1366 = vunpack.c.h.b16 %v776
    %v1367 = vunpack.c.l.b16 %v777
    %v1368 = vunpack.c.h.b16 %v777
    %v1369 = vunpack.c.l.b16 %v778
    %v1370 = vunpack.c.h.b16 %v778
    %v1371 = vunpack.c.l.b16 %v779
    %v1372 = vunpack.c.h.b16 %v779
    %v1373 = vunpack.c.l.b16 %v780
    %v1374 = vunpack.c.h.b16 %v780
    %v1375 = vunpack.c.l.b16 %v781
    %v1376 = vunpack.c.h.b16 %v781
    %v1377 = vunpack.c.l.b16 %v782
    %v1378 = vunpack.c.h.b16 %v782
    %v1379 = vunpack.c.l.b16 %v783
    %v1380 = vunpack.c.h.b16 %v783
    %v1381 = vunpack.c.l.b16 %v784
    %v1382 = vunpack.c.h.b16 %v784
    %v1383 = vunpack.c.l.b16 %v785
    %v1384 = vunpack.c.h.b16 %v785
    %v1385 = vunpack.c.l.b16 %v786
    %v1386 = vunpack.c.h.b16 %v786
    %v1387 = vunpack.c.l.b16 %v787
    %v1388 = vunpack.c.h.b16 %v787
    %v1389 = vunpack.c.l.b16 %v788
    %v1390 = vunpack.c.h.b16 %v788
    %v1391 = vunpack.c.l.b16 %v789
    %v1392 = vunpack.c.h.b16 %v789
    %v1393 = vunpack.c.l.b16 %v790
    %v1394 = vunpack.c.h.b16 %v790
    %v1395 = vunpack.c.l.b16 %v791
    %v1396 = vunpack.c.h.b16 %v791
    %v1397 = vunpack.c.l.b16 %v792
    %v1398 = vunpack.c.h.b16 %v792
    %v1399 = vunpack.c.l.b16 %v793
    %v1400 = vunpack.c.h.b16 %v793
    %v1401 = vunpack.c.l.b16 %v794
    %v1402 = vunpack.c.h.b16 %v794
    %v1403 = vpack.c.b16 %v1025, %v1019
    %v1404 = vpack.c.b16 %v1026, %v1020
    %v1405 = vpack.c.b16 %v1027, %v1021
    %v1406 = vpack.c.b16 %v1028, %v1022
    %v1407 = vpack.c.b16 %v1029, %v1023
    %v1408 = vpack.c.b16 %v1030, %v1024
    %v1409 = vpack.c.b16 %v1037, %v1031
    %v1410 = vpack.c.b16 %v1038, %v1032
    %v1411 = vpack.c.b16 %v1039, %v1033
    %v1412 = vpack.c.b16 %v1040, %v1034
    %v1413 = vpack.c.b16 %v1041, %v1035
    %v1414 = vpack.c.b16 %v1042, %v1036
    %v1415 = vpack.c.b16 %v1049, %v1043
    %v1416 = vpack.c.b16 %v1050, %v1044
    %v1417 = vpack.c.b16 %v1051, %v1045
    %v1418 = vpack.c.b16 %v1052, %v1046
    %v1419 = vpack.c.b16 %v1053, %v1047
    %v1420 = vpack.c.b16 %v1054, %v1048
    %v1421 = vpack.c.b16 %v1061, %v1055
    %v1422 = vpack.c.b16 %v1062, %v1056
    %v1423 = vpack.c.b16 %v1063, %v1057
    %v1424 = vpack.c.b16 %v1064, %v1058
    %v1425 = vpack.c.b16 %v1065, %v1059
    %v1426 = vpack.c.b16 %v1066, %v1060
    %v1427 = vpack.c.b16 %v1073, %v1067
    %v1428 = vpack.c.b16 %v1074, %v1068
    %v1429 = vpack.c.b16 %v1075, %v1069
    %v1430 = vpack.c.b16 %v1076, %v1070
    %v1431 = vpack.c.b16 %v1077, %v1071
    %v1432 = vpack.c.b16 %v1078, %v1072
    %v1433 = vpack.c.b16 %v1085, %v1079
    %v1434 = vpack.c.b16 %v1086, %v1080
    %v1435 = vpack.c.b16 %v1087, %v1081
    %v1436 = vpack.c.b16 %v1088, %v1082
    %v1437 = vpack.c.b16 %v1089, %v1083
    %v1438 = vpack.c.b16 %v1090, %v1084
    %v1439 = vpack.c.b16 %v1097, %v1091
    %v1440 = vpack.c.b16 %v1098, %v1092
    %v1441 = vpack.c.b16 %v1099, %v1093
    %v1442 = vpack.c.b16 %v1100, %v1094
    %v1443 = vpack.c.b16 %v1101, %v1095
    %v1444 = vpack.c.b16 %v1102, %v1096
    %v1445 = vpack.c.b16 %v1109, %v1103
    %v1446 = vpack.c.b16 %v1110, %v1104
    %v1447 = vpack.c.b16 %v1111, %v1105
    %v1448 = vpack.c.b16 %v1112, %v1106
    %v1449 = vpack.c.b16 %v1113, %v1107
    %v1450 = vpack.c.b16 %v1114, %v1108
    %v1451 = vpack.c.b16 %v1121, %v1115
    %v1452 = vpack.c.b16 %v1122, %v1116
    %v1453 = vpack.c.b16 %v1123, %v1117
    %v1454 = vpack.c.b16 %v1124, %v1118
    %v1455 = vpack.c.b16 %v1125, %v1119
    %v1456 = vpack.c.b16 %v1126, %v1120
    %v1457 = vpack.c.b16 %v1133, %v1127
    %v1458 = vpack.c.b16 %v1134, %v1128
    %v1459 = vpack.c.b16 %v1135, %v1129
    %v1460 = vpack.c.b16 %v1136, %v1130
    %v1461 = vpack.c.b16 %v1137, %v1131
    %v1462 = vpack.c.b16 %v1138, %v1132
    %v1463 = vpack.c.b16 %v1145, %v1139
    %v1464 = vpack.c.b16 %v1146, %v1140
    %v1465 = vpack.c.b16 %v1147, %v1141
    %v1466 = vpack.c.b16 %v1148, %v1142
    %v1467 = vpack.c.b16 %v1149, %v1143
    %v1468 = vpack.c.b16 %v1150, %v1144
    %v1469 = vpack.c.b16 %v1157, %v1151
    %v1470 = vpack.c.b16 %v1158, %v1152
    %v1471 = vpack.c.b16 %v1159, %v1153
    %v1472 = vpack.c.b16 %v1160, %v1154
    %v1473 = vpack.c.b16 %v1161, %v1155
    %v1474 = vpack.c.b16 %v1162, %v1156
    %v1475 = vpack.c.b16 %v1169, %v1163
    %v1476 = vpack.c.b16 %v1170, %v1164
    %v1477 = vpack.c.b16 %v1171, %v1165
    %v1478 = vpack.c.b16 %v1172, %v1166
    %v1479 = vpack.c.b16 %v1173, %v1167
    %v1480 = vpack.c.b16 %v1174, %v1168
    %v1481 = vpack.c.b16 %v1181, %v1175
    %v1482 = vpack.c.b16 %v1182, %v1176
    %v1483 = vpack.c.b16 %v1183, %v1177
    %v1484 = vpack.c.b16 %v1184, %v1178
    %v1485 = vpack.c.b16 %v1185, %v1179
    %v1486 = vpack.c.b16 %v1186, %v1180
    %v1487 = vpack.c.b16 %v1193, %v1187
    %v1488 = vpack.c.b16 %v1194, %v1188
    %v1489 = vpack.c.b16 %v1195, %v1189
    %v1490 = vpack.c.b16 %v1196, %v1190
    %v1491 = vpack.c.b16 %v1197, %v1191
    %v1492 = vpack.c.b16 %v1198, %v1192
    %v1493 = vpack.c.b16 %v1205, %v1199
    %v1494 = vpack.c.b16 %v1206, %v1200
    %v1495 = vpack.c.b16 %v1207, %v1201
    %v1496 = vpack.c.b16 %v1208, %v1202
    %v1497 = vpack.c.b16 %v1209, %v1203
    %v1498 = vpack.c.b16 %v1210, %v1204
    %v1499 = vpack.c.b16 %v1217, %v1211
    %v1500 = vpack.c.b16 %v1218, %v1212
    %v1501 = vpack.c.b16 %v1219, %v1213
    %v1502 = vpack.c.b16 %v1220, %v1214
    %v1503 = vpack.c.b16 %v1221, %v1215
    %v1504 = vpack.c.b16 %v1222, %v1216
    %v1505 = vpack.c.b16 %v1229, %v1223
    %v1506 = vpack.c.b16 %v1230, %v1224
    %v1507 = vpack.c.b16 %v1231, %v1225
    %v1508 = vpack.c.b16 %v1232, %v1226
    %v1509 = vpack.c.b16 %v1233, %v1227
    %v1510 = vpack.c.b16 %v1234, %v1228
    %v1511 = vpack.c.b16 %v1241, %v1235
    %v1512 = vpack.c.b16 %v1242, %v1236
    %v1513 = vpack.c.b16 %v1243, %v1237
    %v1514 = vpack.c.b16 %v1244, %v1238
    %v1515 = vpack.c.b16 %v1245, %v1239
    %v1516 = vpack.c.b16 %v1246, %v1240
    %v1517 = vpack.c.b16 %v1253, %v1247
    %v1518 = vpack.c.b16 %v1254, %v1248
    %v1519 = vpack.c.b16 %v1255, %v1249
    %v1520 = vpack.c.b16 %v1256, %v1250
    %v1521 = vpack.c.b16 %v1257, %v1251
    %v1522 = vpack.c.b16 %v1258, %v1252
    %v1523 = vpack.c.b16 %v1265, %v1259
    %v1524 = vpack.c.b16 %v1266, %v1260
    %v1525 = vpack.c.b16 %v1267, %v1261
    %v1526 = vpack.c.b16 %v1268, %v1262
    %v1527 = vpack.c.b16 %v1269, %v1263
    %v1528 = vpack.c.b16 %v1270, %v1264
    %v1529 = vpack.c.b16 %v1277, %v1271
    %v1530 = vpack.c.b16 %v1278, %v1272
    %v1531 = vpack.c.b16 %v1279, %v1273
    %v1532 = vpack.c.b16 %v1280, %v1274
    %v1533 = vpack.c.b16 %v1281, %v1275
    %v1534 = vpack.c.b16 %v1282, %v1276
    %v1535 = vpack.c.b16 %v1289, %v1283
    %v1536 = vpack.c.b16 %v1290, %v1284
    %v1537 = vpack.c.b16 %v1291, %v1285
    %v1538 = vpack.c.b16 %v1292, %v1286
    %v1539 = vpack.c.b16 %v1293, %v1287
    %v1540 = vpack.c.b16 %v1294, %v1288
    %v1541 = vpack.c.b16 %v1301, %v1295
    %v1542 = vpack.c.b16 %v1302, %v1296
    %v1543 = vpack.c.b16 %v1303, %v1297
    %v1544 = vpack.c.b16 %v1304, %v1298
    %v1545 = vpack.c.b16 %v1305, %v1299
    %v1546 = vpack.c.b16 %v1306, %v1300
    %v1547 = vpack.c.b16 %v1313, %v1307
    %v1548 = vpack.c.b16 %v1314, %v1308
    %v1549 = vpack.c.b16 %v1315, %v1309
    %v1550 = vpack.c.b16 %v1316, %v1310
    %v1551 = vpack.c.b16 %v1317, %v1311
    %v1552 = vpack.c.b16 %v1318, %v1312
    %v1553 = vpack.c.b16 %v1325, %v1319
    %v1554 = vpack.c.b16 %v1326, %v1320
    %v1555 = vpack.c.b16 %v1327, %v1321
    %v1556 = vpack.c.b16 %v1328, %v1322
    %v1557 = vpack.c.b16 %v1329, %v1323
    %v1558 = vpack.c.b16 %v1330, %v1324
    %v1559 = vpack.c.b16 %v1337, %v1331
    %v1560 = vpack.c.b16 %v1338, %v1332
    %v1561 = vpack.c.b16 %v1339, %v1333
    %v1562 = vpack.c.b16 %v1340, %v1334
    %v1563 = vpack.c.b16 %v1341, %v1335
    %v1564 = vpack.c.b16 %v1342, %v1336
    %v1565 = vpack.c.b16 %v1349, %v1343
    %v1566 = vpack.c.b16 %v1350, %v1344
    %v1567 = vpack.c.b16 %v1351, %v1345
    %v1568 = vpack.c.b16 %v1352, %v1346
    %v1569 = vpack.c.b16 %v1353, %v1347
    %v1570 = vpack.c.b16 %v1354, %v1348
    %v1571 = vpack.c.b16 %v1361, %v1355
    %v1572 = vpack.c.b16 %v1362, %v1356
    %v1573 = vpack.c.b16 %v1363, %v1357
    %v1574 = vpack.c.b16 %v1364, %v1358
    %v1575 = vpack.c.b16 %v1365, %v1359
    %v1576 = vpack.c.b16 %v1366, %v1360
    %v1577 = vpack.c.b16 %v1373, %v1367
    %v1578 = vpack.c.b16 %v1374, %v1368
    %v1579 = vpack.c.b16 %v1375, %v1369
    %v1580 = vpack.c.b16 %v1376, %v1370
    %v1581 = vpack.c.b16 %v1377, %v1371
    %v1582 = vpack.c.b16 %v1378, %v1372
    %v1583 = vpack.c.b16 %v1385, %v1379
    %v1584 = vpack.c.b16 %v1386, %v1380
    %v1585 = vpack.c.b16 %v1387, %v1381
    %v1586 = vpack.c.b16 %v1388, %v1382
    %v1587 = vpack.c.b16 %v1389, %v1383
    %v1588 = vpack.c.b16 %v1390, %v1384
    %v1589 = vpack.c.b16 %v1397, %v1391
    %v1590 = vpack.c.b16 %v1398, %v1392
    %v1591 = vpack.c.b16 %v1399, %v1393
    %v1592 = vpack.c.b16 %v1400, %v1394
    %v1593 = vpack.c.b16 %v1401, %v1395
    %v1594 = vpack.c.b16 %v1402, %v1396
    %1787 = vmatprep.subr.bf16.mxu0 %v1446
    %1788 = vmatpush1.bf16.msra.mxu0 %v1445
    %1789 = vmatprep.subr.bf16.mxu0 %v1440
    %1790 = vmatpush1.bf16.msra.mxu0 %v1439
    %1791 = vmatprep.subr.bf16.mxu0 %v1434
    %1792 = vmatpush1.bf16.msra.mxu0 %v1433
    %1793 = vmatprep.subr.bf16.mxu0 %v1428
    %1794 = vmatpush1.bf16.msra.mxu0 %v1427
    %1795 = vmatprep.subr.bf16.mxu0 %v1422
    %1796 = vmatpush1.bf16.msra.mxu0 %v1421
    %1797 = vmatprep.subr.bf16.mxu0 %v1416
    %1798 = vmatpush1.bf16.msra.mxu0 %v1415
    %1799 = vmatprep.subr.bf16.mxu0 %v1410
    %1800 = vmatpush1.bf16.msra.mxu0 %v1409
    %1801 = vmatprep.subr.bf16.mxu0 %v1404
    %1802 = vmatpush1.bf16.msra.mxu0 %v1403
    %1803 = vmatprep.subr.bf16.mxu0 %v1494
    %1804 = vmatpush2.bf16.msra.mxu0 %v1493
    %1805 = vmatprep.subr.bf16.mxu0 %v1488
    %1806 = vmatpush2.bf16.msra.mxu0 %v1487
    %1807 = vmatprep.subr.bf16.mxu0 %v1482
    %1808 = vmatpush2.bf16.msra.mxu0 %v1481
    %1809 = vmatprep.subr.bf16.mxu0 %v1476
    %1810 = vmatpush2.bf16.msra.mxu0 %v1475
    %1811 = vmatprep.subr.bf16.mxu0 %v1470
    %1812 = vmatpush2.bf16.msra.mxu0 %v1469
    %1813 = vmatprep.subr.bf16.mxu0 %v1464
    %1814 = vmatpush2.bf16.msra.mxu0 %v1463
    %1815 = vmatprep.subr.bf16.mxu0 %v1458
    %1816 = vmatpush2.bf16.msra.mxu0 %v1457
    %1817 = vmatprep.subr.bf16.mxu0 %v1452
    %1818 = vmatpush2.bf16.msra.mxu0 %v1451
    %1819 = vmatprep.mubr.bf16.mxu0 %v600
    %1820 = vmatmul.mubr.bf16.gmra.mxu0 %v599
    %v1821 = vpop.f32.mrf.mxu0
    %v1822 = vadd.f32 %v800, %v1821
    %v1823 = vpop.f32.mrf.mxu0
    %v1824 = vadd.f32 %v804, %v1823
    %v1825 = vpop.f32.mrf.mxu0
    %v1826 = vpop.f32.mrf.mxu0
    %1827 = vdwg.mxu0
    %1828 = vmatprep.subr.bf16.mxu0 %v1542
    %1829 = vmatpush1.bf16.msra.mxu0 %v1541
    %1830 = vmatprep.subr.bf16.mxu0 %v1536
    %1831 = vmatpush1.bf16.msra.mxu0 %v1535
    %1832 = vmatprep.subr.bf16.mxu0 %v1530
    %1833 = vmatpush1.bf16.msra.mxu0 %v1529
    %1834 = vmatprep.subr.bf16.mxu0 %v1524
    %1835 = vmatpush1.bf16.msra.mxu0 %v1523
    %1836 = vmatprep.subr.bf16.mxu0 %v1518
    %1837 = vmatpush1.bf16.msra.mxu0 %v1517
    %1838 = vmatprep.subr.bf16.mxu0 %v1512
    %1839 = vmatpush1.bf16.msra.mxu0 %v1511
    %1840 = vmatprep.subr.bf16.mxu0 %v1506
    %1841 = vmatpush1.bf16.msra.mxu0 %v1505
    %1842 = vmatprep.subr.bf16.mxu0 %v1500
    %1843 = vmatpush1.bf16.msra.mxu0 %v1499
    %1844 = vmatprep.subr.bf16.mxu0 %v1590
    %1845 = vmatpush2.bf16.msra.mxu0 %v1589
    %1846 = vmatprep.subr.bf16.mxu0 %v1584
    %1847 = vmatpush2.bf16.msra.mxu0 %v1583
    %1848 = vmatprep.subr.bf16.mxu0 %v1578
    %1849 = vmatpush2.bf16.msra.mxu0 %v1577
    %1850 = vmatprep.subr.bf16.mxu0 %v1572
    %1851 = vmatpush2.bf16.msra.mxu0 %v1571
    %1852 = vmatprep.subr.bf16.mxu0 %v1566
    %1853 = vmatpush2.bf16.msra.mxu0 %v1565
    %1854 = vmatprep.subr.bf16.mxu0 %v1560
    %1855 = vmatpush2.bf16.msra.mxu0 %v1559
    %1856 = vmatprep.subr.bf16.mxu0 %v1554
    %1857 = vmatpush2.bf16.msra.mxu0 %v1553
    %1858 = vmatprep.subr.bf16.mxu0 %v1548
    %1859 = vmatpush2.bf16.msra.mxu0 %v1547
    %1860 = vmatprep.mubr.bf16.mxu0 %v602
    %1861 = vmatmul.mubr.bf16.gmra.mxu0 %v601
    %v1862 = vpop.f32.mrf.mxu0
    %v1863 = vadd.f32 %v1822, %v1862
    %v1864 = vpop.f32.mrf.mxu0
    %v1865 = vadd.f32 %v1824, %v1864
    %v1866 = vpop.f32.mrf.mxu0
    %v1867 = vpop.f32.mrf.mxu0
    %1868 = vdwg.mxu0
    %1869 = vmatprep.subr.bf16.mxu0 %v1448
    %1870 = vmatpush1.bf16.msra.mxu0 %v1447
    %1871 = vmatprep.subr.bf16.mxu0 %v1442
    %1872 = vmatpush1.bf16.msra.mxu0 %v1441
    %1873 = vmatprep.subr.bf16.mxu0 %v1436
    %1874 = vmatpush1.bf16.msra.mxu0 %v1435
    %1875 = vmatprep.subr.bf16.mxu0 %v1430
    %1876 = vmatpush1.bf16.msra.mxu0 %v1429
    %1877 = vmatprep.subr.bf16.mxu0 %v1424
    %1878 = vmatpush1.bf16.msra.mxu0 %v1423
    %1879 = vmatprep.subr.bf16.mxu0 %v1418
    %1880 = vmatpush1.bf16.msra.mxu0 %v1417
    %1881 = vmatprep.subr.bf16.mxu0 %v1412
    %1882 = vmatpush1.bf16.msra.mxu0 %v1411
    %1883 = vmatprep.subr.bf16.mxu0 %v1406
    %1884 = vmatpush1.bf16.msra.mxu0 %v1405
    %1885 = vmatprep.subr.bf16.mxu0 %v1496
    %1886 = vmatpush2.bf16.msra.mxu0 %v1495
    %1887 = vmatprep.subr.bf16.mxu0 %v1490
    %1888 = vmatpush2.bf16.msra.mxu0 %v1489
    %1889 = vmatprep.subr.bf16.mxu0 %v1484
    %1890 = vmatpush2.bf16.msra.mxu0 %v1483
    %1891 = vmatprep.subr.bf16.mxu0 %v1478
    %1892 = vmatpush2.bf16.msra.mxu0 %v1477
    %1893 = vmatprep.subr.bf16.mxu0 %v1472
    %1894 = vmatpush2.bf16.msra.mxu0 %v1471
    %1895 = vmatprep.subr.bf16.mxu0 %v1466
    %1896 = vmatpush2.bf16.msra.mxu0 %v1465
    %1897 = vmatprep.subr.bf16.mxu0 %v1460
    %1898 = vmatpush2.bf16.msra.mxu0 %v1459
    %1899 = vmatprep.subr.bf16.mxu0 %v1454
    %1900 = vmatpush2.bf16.msra.mxu0 %v1453
    %1901 = vmatprep.mubr.bf16.mxu0 %v600
    %1902 = vmatmul.mubr.bf16.gmra.mxu0 %v599
    %v1903 = vpop.f32.mrf.mxu0
    %v1904 = vadd.f32 %v808, %v1903
    %v1905 = vpop.f32.mrf.mxu0
    %v1906 = vadd.f32 %v812, %v1905
    %v1907 = vpop.f32.mrf.mxu0
    %v1908 = vpop.f32.mrf.mxu0
    %1909 = vdwg.mxu0
    %1910 = vmatprep.subr.bf16.mxu0 %v1544
    %1911 = vmatpush1.bf16.msra.mxu0 %v1543
    %1912 = vmatprep.subr.bf16.mxu0 %v1538
    %1913 = vmatpush1.bf16.msra.mxu0 %v1537
    %1914 = vmatprep.subr.bf16.mxu0 %v1532
    %1915 = vmatpush1.bf16.msra.mxu0 %v1531
    %1916 = vmatprep.subr.bf16.mxu0 %v1526
    %1917 = vmatpush1.bf16.msra.mxu0 %v1525
    %1918 = vmatprep.subr.bf16.mxu0 %v1520
    %1919 = vmatpush1.bf16.msra.mxu0 %v1519
    %1920 = vmatprep.subr.bf16.mxu0 %v1514
    %1921 = vmatpush1.bf16.msra.mxu0 %v1513
    %1922 = vmatprep.subr.bf16.mxu0 %v1508
    %1923 = vmatpush1.bf16.msra.mxu0 %v1507
    %1924 = vmatprep.subr.bf16.mxu0 %v1502
    %1925 = vmatpush1.bf16.msra.mxu0 %v1501
    %1926 = vmatprep.subr.bf16.mxu0 %v1592
    %1927 = vmatpush2.bf16.msra.mxu0 %v1591
    %1928 = vmatprep.subr.bf16.mxu0 %v1586
    %1929 = vmatpush2.bf16.msra.mxu0 %v1585
    %1930 = vmatprep.subr.bf16.mxu0 %v1580
    %1931 = vmatpush2.bf16.msra.mxu0 %v1579
    %1932 = vmatprep.subr.bf16.mxu0 %v1574
    %1933 = vmatpush2.bf16.msra.mxu0 %v1573
    %1934 = vmatprep.subr.bf16.mxu0 %v1568
    %1935 = vmatpush2.bf16.msra.mxu0 %v1567
    %1936 = vmatprep.subr.bf16.mxu0 %v1562
    %1937 = vmatpush2.bf16.msra.mxu0 %v1561
    %1938 = vmatprep.subr.bf16.mxu0 %v1556
    %1939 = vmatpush2.bf16.msra.mxu0 %v1555
    %1940 = vmatprep.subr.bf16.mxu0 %v1550
    %1941 = vmatpush2.bf16.msra.mxu0 %v1549
    %1942 = vmatprep.mubr.bf16.mxu0 %v602
    %1943 = vmatmul.mubr.bf16.gmra.mxu0 %v601
    %v1944 = vpop.f32.mrf.mxu0
    %v1945 = vadd.f32 %v1904, %v1944
    %v1946 = vpop.f32.mrf.mxu0
    %v1947 = vadd.f32 %v1906, %v1946
    %v1948 = vpop.f32.mrf.mxu0
    %v1949 = vpop.f32.mrf.mxu0
    %1950 = vdwg.mxu0
    %1951 = vmatprep.subr.bf16.mxu0 %v1450
    %1952 = vmatpush1.bf16.msra.mxu0 %v1449
    %1953 = vmatprep.subr.bf16.mxu0 %v1444
    %1954 = vmatpush1.bf16.msra.mxu0 %v1443
    %1955 = vmatprep.subr.bf16.mxu0 %v1438
    %1956 = vmatpush1.bf16.msra.mxu0 %v1437
    %1957 = vmatprep.subr.bf16.mxu0 %v1432
    %1958 = vmatpush1.bf16.msra.mxu0 %v1431
    %1959 = vmatprep.subr.bf16.mxu0 %v1426
    %1960 = vmatpush1.bf16.msra.mxu0 %v1425
    %1961 = vmatprep.subr.bf16.mxu0 %v1420
    %1962 = vmatpush1.bf16.msra.mxu0 %v1419
    %1963 = vmatprep.subr.bf16.mxu0 %v1414
    %1964 = vmatpush1.bf16.msra.mxu0 %v1413
    %1965 = vmatprep.subr.bf16.mxu0 %v1408
    %1966 = vmatpush1.bf16.msra.mxu0 %v1407
    %1967 = vmatprep.subr.bf16.mxu0 %v1498
    %1968 = vmatpush2.bf16.msra.mxu0 %v1497
    %1969 = vmatprep.subr.bf16.mxu0 %v1492
    %1970 = vmatpush2.bf16.msra.mxu0 %v1491
    %1971 = vmatprep.subr.bf16.mxu0 %v1486
    %1972 = vmatpush2.bf16.msra.mxu0 %v1485
    %1973 = vmatprep.subr.bf16.mxu0 %v1480
    %1974 = vmatpush2.bf16.msra.mxu0 %v1479
    %1975 = vmatprep.subr.bf16.mxu0 %v1474
    %1976 = vmatpush2.bf16.msra.mxu0 %v1473
    %1977 = vmatprep.subr.bf16.mxu0 %v1468
    %1978 = vmatpush2.bf16.msra.mxu0 %v1467
    %1979 = vmatprep.subr.bf16.mxu0 %v1462
    %1980 = vmatpush2.bf16.msra.mxu0 %v1461
    %1981 = vmatprep.subr.bf16.mxu0 %v1456
    %1982 = vmatpush2.bf16.msra.mxu0 %v1455
    %1983 = vmatprep.mubr.bf16.mxu0 %v600
    %1984 = vmatmul.mubr.bf16.gmra.mxu0 %v599
    %v1985 = vpop.f32.mrf.mxu0
    %v1986 = vadd.f32 %v816, %v1985
    %v1987 = vpop.f32.mrf.mxu0
    %v1988 = vadd.f32 %v820, %v1987
    %v1989 = vpop.f32.mrf.mxu0
    %v1990 = vpop.f32.mrf.mxu0
    %1991 = vdwg.mxu0
    %1992 = vmatprep.subr.bf16.mxu0 %v1546
    %1993 = vmatpush1.bf16.msra.mxu0 %v1545
    %1994 = vmatprep.subr.bf16.mxu0 %v1540
    %1995 = vmatpush1.bf16.msra.mxu0 %v1539
    %1996 = vmatprep.subr.bf16.mxu0 %v1534
    %1997 = vmatpush1.bf16.msra.mxu0 %v1533
    %1998 = vmatprep.subr.bf16.mxu0 %v1528
    %1999 = vmatpush1.bf16.msra.mxu0 %v1527
    %2000 = vmatprep.subr.bf16.mxu0 %v1522
    %2001 = vmatpush1.bf16.msra.mxu0 %v1521
    %2002 = vmatprep.subr.bf16.mxu0 %v1516
    %2003 = vmatpush1.bf16.msra.mxu0 %v1515
    %2004 = vmatprep.subr.bf16.mxu0 %v1510
    %2005 = vmatpush1.bf16.msra.mxu0 %v1509
    %2006 = vmatprep.subr.bf16.mxu0 %v1504
    %2007 = vmatpush1.bf16.msra.mxu0 %v1503
    %2008 = vmatprep.subr.bf16.mxu0 %v1594
    %2009 = vmatpush2.bf16.msra.mxu0 %v1593
    %2010 = vmatprep.subr.bf16.mxu0 %v1588
    %2011 = vmatpush2.bf16.msra.mxu0 %v1587
    %2012 = vmatprep.subr.bf16.mxu0 %v1582
    %2013 = vmatpush2.bf16.msra.mxu0 %v1581
    %2014 = vmatprep.subr.bf16.mxu0 %v1576
    %2015 = vmatpush2.bf16.msra.mxu0 %v1575
    %2016 = vmatprep.subr.bf16.mxu0 %v1570
    %2017 = vmatpush2.bf16.msra.mxu0 %v1569
    %2018 = vmatprep.subr.bf16.mxu0 %v1564
    %2019 = vmatpush2.bf16.msra.mxu0 %v1563
    %2020 = vmatprep.subr.bf16.mxu0 %v1558
    %2021 = vmatpush2.bf16.msra.mxu0 %v1557
    %2022 = vmatprep.subr.bf16.mxu0 %v1552
    %2023 = vmatpush2.bf16.msra.mxu0 %v1551
    %2024 = vmatprep.mubr.bf16.mxu0 %v602
    %2025 = vmatmul.mubr.bf16.gmra.mxu0 %v601
    %v2026 = vpop.f32.mrf.mxu0
    %v2027 = vadd.f32 %v1986, %v2026
    %v2028 = vpop.f32.mrf.mxu0
    %v2029 = vadd.f32 %v1988, %v2028
    %v2030 = vpop.f32.mrf.mxu0
    %v2031 = vpop.f32.mrf.mxu0
    %2032 = vdwg.mxu0
    %v2033 = vmax.f32 %v1863, 0.0
    %v2034 = vmax.f32 %v1865, 0.0
    %v2035 = vmax.f32 %v1945, 0.0
    %v2036 = vmax.f32 %v1947, 0.0
    %v2037 = vmax.f32 %v2027, 0.0
    %v2038 = vmax.f32 %v2029, 0.0
    %v2039 = vpack.c.bf16 %v2033, %v2033
    %v2040 = vpack.c.bf16 %v2034, %v2034
    %v2041 = vpack.c.bf16 %v2035, %v2035
    %v2042 = vpack.c.bf16 %v2036, %v2036
    %v2043 = vpack.c.bf16 %v2037, %v2037
    %v2044 = vpack.c.bf16 %v2038, %v2038
    %v2045 = vld [vmem:[#allocation10] sm:$0xf]
    %v2046 = vld [vmem:[#allocation10 + $0x4] sm:$0xf]
    %v2047 = vld [vmem:[#allocation10 + $0x8] sm:$0xf]
    %v2048 = vld [vmem:[#allocation10 + $0xc] sm:$0xf]
    %v2049 = vld [vmem:[#allocation10 + $0x10] sm:$0xf]
    %v2050 = vld [vmem:[#allocation10 + $0x14] sm:$0xf]
    %v2051 = vld [vmem:[#allocation10 + $0x18] sm:$0xf]
    %v2052 = vld [vmem:[#allocation10 + $0x1c] sm:$0xf]
    %v2053 = vld [vmem:[#allocation10 + $0x20] sm:$0xf]
    %v2054 = vld [vmem:[#allocation10 + $0x24] sm:$0xf]
    %v2055 = vld [vmem:[#allocation10 + $0x28] sm:$0xf]
    %v2056 = vld [vmem:[#allocation10 + $0x2c] sm:$0xf]
    %v2057 = vld [vmem:[#allocation10 + $0x30] sm:$0xf]
    %v2058 = vld [vmem:[#allocation10 + $0x34] sm:$0xf]
    %v2059 = vld [vmem:[#allocation10 + $0x38] sm:$0xf]
    %v2060 = vld [vmem:[#allocation10 + $0x3c] sm:$0xf]
    %v2061 = vld [vmem:[#allocation10 + $0x40] sm:$0xf]
    %v2062 = vld [vmem:[#allocation10 + $0x44] sm:$0xf]
    %v2063 = vld [vmem:[#allocation10 + $0x48] sm:$0xf]
    %v2064 = vld [vmem:[#allocation10 + $0x4c] sm:$0xf]
    %v2065 = vld [vmem:[#allocation10 + $0x50] sm:$0xf]
    %v2066 = vld [vmem:[#allocation10 + $0x54] sm:$0xf]
    %v2067 = vld [vmem:[#allocation10 + $0x58] sm:$0xf]
    %v2068 = vld [vmem:[#allocation10 + $0x5c] sm:$0xf]
    %v2069 = vld [vmem:[#allocation10 + $0x60] sm:$0xf]
    %v2070 = vld [vmem:[#allocation10 + $0x64] sm:$0xf]
    %v2071 = vld [vmem:[#allocation10 + $0x68] sm:$0xf]
    %v2072 = vld [vmem:[#allocation10 + $0x6c] sm:$0xf]
    %v2073 = vld [vmem:[#allocation10 + $0x70] sm:$0xf]
    %v2074 = vld [vmem:[#allocation10 + $0x74] sm:$0xf]
    %v2075 = vld [vmem:[#allocation10 + $0x78] sm:$0xf]
    %v2076 = vld [vmem:[#allocation10 + $0x7c] sm:$0xf]
    %v2077 = vld [vmem:[#allocation10 + $0x80] sm:$0xf]
    %v2078 = vld [vmem:[#allocation10 + $0x84] sm:$0xf]
    %v2079 = vld [vmem:[#allocation10 + $0x88] sm:$0xf]
    %v2080 = vld [vmem:[#allocation10 + $0x8c] sm:$0xf]
    %v2081 = vld [vmem:[#allocation10 + $0x90] sm:$0xf]
    %v2082 = vld [vmem:[#allocation10 + $0x94] sm:$0xf]
    %v2083 = vld [vmem:[#allocation10 + $0x98] sm:$0xf]
    %v2084 = vld [vmem:[#allocation10 + $0x9c] sm:$0xf]
    %v2085 = vld [vmem:[#allocation10 + $0xa0] sm:$0xf]
    %v2086 = vld [vmem:[#allocation10 + $0xa4] sm:$0xf]
    %v2087 = vld [vmem:[#allocation10 + $0xa8] sm:$0xf]
    %v2088 = vld [vmem:[#allocation10 + $0xac] sm:$0xf]
    %v2089 = vld [vmem:[#allocation10 + $0xb0] sm:$0xf]
    %v2090 = vld [vmem:[#allocation10 + $0xb4] sm:$0xf]
    %v2091 = vld [vmem:[#allocation10 + $0xb8] sm:$0xf]
    %v2092 = vld [vmem:[#allocation10 + $0xbc] sm:$0xf]
    %v2093 = vld [vmem:[#allocation10 + $0xc0] sm:$0xf]
    %v2094 = vld [vmem:[#allocation10 + $0xc4] sm:$0xf]
    %v2095 = vld [vmem:[#allocation10 + $0xc8] sm:$0xf]
    %v2096 = vld [vmem:[#allocation10 + $0xcc] sm:$0xf]
    %v2097 = vld [vmem:[#allocation10 + $0xd0] sm:$0xf]
    %v2098 = vld [vmem:[#allocation10 + $0xd4] sm:$0xf]
    %v2099 = vld [vmem:[#allocation10 + $0xd8] sm:$0xf]
    %v2100 = vld [vmem:[#allocation10 + $0xdc] sm:$0xf]
    %v2101 = vld [vmem:[#allocation10 + $0xe0] sm:$0xf]
    %v2102 = vld [vmem:[#allocation10 + $0xe4] sm:$0xf]
    %v2103 = vld [vmem:[#allocation10 + $0xe8] sm:$0xf]
    %v2104 = vld [vmem:[#allocation10 + $0xec] sm:$0xf]
    %v2105 = vld [vmem:[#allocation10 + $0xf0] sm:$0xf]
    %v2106 = vld [vmem:[#allocation10 + $0xf4] sm:$0xf]
    %v2107 = vld [vmem:[#allocation10 + $0xf8] sm:$0xf]
    %v2108 = vld [vmem:[#allocation10 + $0xfc] sm:$0xf]
    %v2109 = vld [vmem:[#allocation10 + $0x100] sm:$0xf]
    %v2110 = vld [vmem:[#allocation10 + $0x104] sm:$0xf]
    %v2111 = vld [vmem:[#allocation10 + $0x108] sm:$0xf]
    %v2112 = vld [vmem:[#allocation10 + $0x10c] sm:$0xf]
    %v2113 = vld [vmem:[#allocation10 + $0x110] sm:$0xf]
    %v2114 = vld [vmem:[#allocation10 + $0x114] sm:$0xf]
    %v2115 = vld [vmem:[#allocation10 + $0x118] sm:$0xf]
    %v2116 = vld [vmem:[#allocation10 + $0x11c] sm:$0xf]
    %v2117 = vld [vmem:[#allocation10 + $0x120] sm:$0xf]
    %v2118 = vld [vmem:[#allocation10 + $0x124] sm:$0xf]
    %v2119 = vld [vmem:[#allocation10 + $0x128] sm:$0xf]
    %v2120 = vld [vmem:[#allocation10 + $0x12c] sm:$0xf]
    %v2121 = vld [vmem:[#allocation10 + $0x130] sm:$0xf]
    %v2122 = vld [vmem:[#allocation10 + $0x134] sm:$0xf]
    %v2123 = vld [vmem:[#allocation10 + $0x138] sm:$0xf]
    %v2124 = vld [vmem:[#allocation10 + $0x13c] sm:$0xf]
    %v2125 = vld [vmem:[#allocation10 + $0x140] sm:$0xf]
    %v2126 = vld [vmem:[#allocation10 + $0x144] sm:$0xf]
    %v2127 = vld [vmem:[#allocation10 + $0x148] sm:$0xf]
    %v2128 = vld [vmem:[#allocation10 + $0x14c] sm:$0xf]
    %v2129 = vld [vmem:[#allocation10 + $0x150] sm:$0xf]
    %v2130 = vld [vmem:[#allocation10 + $0x154] sm:$0xf]
    %v2131 = vld [vmem:[#allocation10 + $0x158] sm:$0xf]
    %v2132 = vld [vmem:[#allocation10 + $0x15c] sm:$0xf]
    %v2133 = vld [vmem:[#allocation10 + $0x160] sm:$0xf]
    %v2134 = vld [vmem:[#allocation10 + $0x164] sm:$0xf]
    %v2135 = vld [vmem:[#allocation10 + $0x168] sm:$0xf]
    %v2136 = vld [vmem:[#allocation10 + $0x16c] sm:$0xf]
    %v2137 = vld [vmem:[#allocation10 + $0x170] sm:$0xf]
    %v2138 = vld [vmem:[#allocation10 + $0x174] sm:$0xf]
    %v2139 = vld [vmem:[#allocation10 + $0x178] sm:$0xf]
    %v2140 = vld [vmem:[#allocation10 + $0x17c] sm:$0xf]
    %v2141 = vld [vmem:[%s6] sm:$0x1]
    %v2143 = vlaneseq
    %v2144 = vshrl.u32 %v2143, 7
    %v2145 = vsub.s32 0, %v2144
    %v2146 = vrot.slane %v2141, %v2145
    %v2244 = vunpack.c.l.b16 %v2045
    %v2245 = vunpack.c.l.b16 %v2046
    %v2246 = vunpack.c.l.b16 %v2047
    %v2247 = vunpack.c.l.b16 %v2048
    %v2248 = vunpack.c.l.b16 %v2049
    %v2249 = vunpack.c.l.b16 %v2050
    %v2250 = vunpack.c.l.b16 %v2051
    %v2251 = vunpack.c.l.b16 %v2052
    %v2252 = vunpack.c.l.b16 %v2053
    %v2253 = vunpack.c.l.b16 %v2054
    %v2254 = vunpack.c.l.b16 %v2055
    %v2255 = vunpack.c.l.b16 %v2056
    %v2256 = vunpack.c.l.b16 %v2057
    %v2257 = vunpack.c.l.b16 %v2058
    %v2258 = vunpack.c.l.b16 %v2059
    %v2259 = vunpack.c.l.b16 %v2060
    %v2260 = vunpack.c.l.b16 %v2061
    %v2261 = vunpack.c.l.b16 %v2062
    %v2262 = vunpack.c.l.b16 %v2063
    %v2263 = vunpack.c.l.b16 %v2064
    %v2264 = vunpack.c.l.b16 %v2065
    %v2265 = vunpack.c.l.b16 %v2066
    %v2266 = vunpack.c.l.b16 %v2067
    %v2267 = vunpack.c.l.b16 %v2068
    %v2268 = vunpack.c.l.b16 %v2069
    %v2269 = vunpack.c.l.b16 %v2070
    %v2270 = vunpack.c.l.b16 %v2071
    %v2271 = vunpack.c.l.b16 %v2072
    %v2272 = vunpack.c.l.b16 %v2073
    %v2273 = vunpack.c.l.b16 %v2074
    %v2274 = vunpack.c.l.b16 %v2075
    %v2275 = vunpack.c.l.b16 %v2076
    %v2276 = vunpack.c.l.b16 %v2077
    %v2277 = vunpack.c.l.b16 %v2078
    %v2278 = vunpack.c.l.b16 %v2079
    %v2279 = vunpack.c.l.b16 %v2080
    %v2280 = vunpack.c.l.b16 %v2081
    %v2281 = vunpack.c.l.b16 %v2082
    %v2282 = vunpack.c.l.b16 %v2083
    %v2283 = vunpack.c.l.b16 %v2084
    %v2284 = vunpack.c.l.b16 %v2085
    %v2285 = vunpack.c.l.b16 %v2086
    %v2286 = vunpack.c.l.b16 %v2087
    %v2287 = vunpack.c.l.b16 %v2088
    %v2288 = vunpack.c.l.b16 %v2089
    %v2289 = vunpack.c.l.b16 %v2090
    %v2290 = vunpack.c.l.b16 %v2091
    %v2291 = vunpack.c.l.b16 %v2092
    %v2292 = vunpack.c.l.b16 %v2093
    %v2293 = vunpack.c.l.b16 %v2094
    %v2294 = vunpack.c.l.b16 %v2095
    %v2295 = vunpack.c.l.b16 %v2096
    %v2296 = vunpack.c.l.b16 %v2097
    %v2297 = vunpack.c.l.b16 %v2098
    %v2298 = vunpack.c.l.b16 %v2099
    %v2299 = vunpack.c.l.b16 %v2100
    %v2300 = vunpack.c.l.b16 %v2101
    %v2301 = vunpack.c.l.b16 %v2102
    %v2302 = vunpack.c.l.b16 %v2103
    %v2303 = vunpack.c.l.b16 %v2104
    %v2304 = vunpack.c.l.b16 %v2105
    %v2305 = vunpack.c.l.b16 %v2106
    %v2306 = vunpack.c.l.b16 %v2107
    %v2307 = vunpack.c.l.b16 %v2108
    %v2308 = vunpack.c.l.b16 %v2109
    %v2309 = vunpack.c.l.b16 %v2110
    %v2310 = vunpack.c.l.b16 %v2111
    %v2311 = vunpack.c.l.b16 %v2112
    %v2312 = vunpack.c.l.b16 %v2113
    %v2313 = vunpack.c.l.b16 %v2114
    %v2314 = vunpack.c.l.b16 %v2115
    %v2315 = vunpack.c.l.b16 %v2116
    %v2316 = vunpack.c.l.b16 %v2117
    %v2317 = vunpack.c.l.b16 %v2118
    %v2318 = vunpack.c.l.b16 %v2119
    %v2319 = vunpack.c.l.b16 %v2120
    %v2320 = vunpack.c.l.b16 %v2121
    %v2321 = vunpack.c.l.b16 %v2122
    %v2322 = vunpack.c.l.b16 %v2123
    %v2323 = vunpack.c.l.b16 %v2124
    %v2324 = vunpack.c.l.b16 %v2125
    %v2325 = vunpack.c.l.b16 %v2126
    %v2326 = vunpack.c.l.b16 %v2127
    %v2327 = vunpack.c.l.b16 %v2128
    %v2328 = vunpack.c.l.b16 %v2129
    %v2329 = vunpack.c.l.b16 %v2130
    %v2330 = vunpack.c.l.b16 %v2131
    %v2331 = vunpack.c.l.b16 %v2132
    %v2332 = vunpack.c.l.b16 %v2133
    %v2333 = vunpack.c.l.b16 %v2134
    %v2334 = vunpack.c.l.b16 %v2135
    %v2335 = vunpack.c.l.b16 %v2136
    %v2336 = vunpack.c.l.b16 %v2137
    %v2337 = vunpack.c.l.b16 %v2138
    %v2338 = vunpack.c.l.b16 %v2139
    %v2339 = vunpack.c.l.b16 %v2140
    %v2340 = vpack.c.b16 %v2245, %v2244
    %v2341 = vpack.c.b16 %v2247, %v2246
    %v2342 = vpack.c.b16 %v2249, %v2248
    %v2343 = vpack.c.b16 %v2251, %v2250
    %v2344 = vpack.c.b16 %v2253, %v2252
    %v2345 = vpack.c.b16 %v2255, %v2254
    %v2346 = vpack.c.b16 %v2257, %v2256
    %v2347 = vpack.c.b16 %v2259, %v2258
    %v2348 = vpack.c.b16 %v2261, %v2260
    %v2349 = vpack.c.b16 %v2263, %v2262
    %v2350 = vpack.c.b16 %v2265, %v2264
    %v2351 = vpack.c.b16 %v2267, %v2266
    %v2352 = vpack.c.b16 %v2269, %v2268
    %v2353 = vpack.c.b16 %v2271, %v2270
    %v2354 = vpack.c.b16 %v2273, %v2272
    %v2355 = vpack.c.b16 %v2275, %v2274
    %v2356 = vpack.c.b16 %v2277, %v2276
    %v2357 = vpack.c.b16 %v2279, %v2278
    %v2358 = vpack.c.b16 %v2281, %v2280
    %v2359 = vpack.c.b16 %v2283, %v2282
    %v2360 = vpack.c.b16 %v2285, %v2284
    %v2361 = vpack.c.b16 %v2287, %v2286
    %v2362 = vpack.c.b16 %v2289, %v2288
    %v2363 = vpack.c.b16 %v2291, %v2290
    %v2364 = vpack.c.b16 %v2293, %v2292
    %v2365 = vpack.c.b16 %v2295, %v2294
    %v2366 = vpack.c.b16 %v2297, %v2296
    %v2367 = vpack.c.b16 %v2299, %v2298
    %v2368 = vpack.c.b16 %v2301, %v2300
    %v2369 = vpack.c.b16 %v2303, %v2302
    %v2370 = vpack.c.b16 %v2305, %v2304
    %v2371 = vpack.c.b16 %v2307, %v2306
    %v2372 = vpack.c.b16 %v2309, %v2308
    %v2373 = vpack.c.b16 %v2311, %v2310
    %v2374 = vpack.c.b16 %v2313, %v2312
    %v2375 = vpack.c.b16 %v2315, %v2314
    %v2376 = vpack.c.b16 %v2317, %v2316
    %v2377 = vpack.c.b16 %v2319, %v2318
    %v2378 = vpack.c.b16 %v2321, %v2320
    %v2379 = vpack.c.b16 %v2323, %v2322
    %v2380 = vpack.c.b16 %v2325, %v2324
    %v2381 = vpack.c.b16 %v2327, %v2326
    %v2382 = vpack.c.b16 %v2329, %v2328
    %v2383 = vpack.c.b16 %v2331, %v2330
    %v2384 = vpack.c.b16 %v2333, %v2332
    %v2385 = vpack.c.b16 %v2335, %v2334
    %v2386 = vpack.c.b16 %v2337, %v2336
    %v2387 = vpack.c.b16 %v2339, %v2338
    %2436 = vmatprep.subr.bf16.mxu0 0
    %2437 = vmatpush1.bf16.msra.mxu0 %v2347
    %2438 = vmatprep.subr.bf16.mxu0 0
    %2439 = vmatpush1.bf16.msra.mxu0 %v2346
    %2440 = vmatprep.subr.bf16.mxu0 0
    %2441 = vmatpush1.bf16.msra.mxu0 %v2345
    %2442 = vmatprep.subr.bf16.mxu0 0
    %2443 = vmatpush1.bf16.msra.mxu0 %v2344
    %2444 = vmatprep.subr.bf16.mxu0 0
    %2445 = vmatpush1.bf16.msra.mxu0 %v2343
    %2446 = vmatprep.subr.bf16.mxu0 0
    %2447 = vmatpush1.bf16.msra.mxu0 %v2342
    %2448 = vmatprep.subr.bf16.mxu0 0
    %2449 = vmatpush1.bf16.msra.mxu0 %v2341
    %2450 = vmatprep.subr.bf16.mxu0 0
    %2451 = vmatpush1.bf16.msra.mxu0 %v2340
    %2452 = vmatprep.subr.bf16.mxu0 0
    %2453 = vmatpush2.bf16.msra.mxu0 %v2355
    %2454 = vmatprep.subr.bf16.mxu0 0
    %2455 = vmatpush2.bf16.msra.mxu0 %v2354
    %2456 = vmatprep.subr.bf16.mxu0 0
    %2457 = vmatpush2.bf16.msra.mxu0 %v2353
    %2458 = vmatprep.subr.bf16.mxu0 0
    %2459 = vmatpush2.bf16.msra.mxu0 %v2352
    %2460 = vmatprep.subr.bf16.mxu0 0
    %2461 = vmatpush2.bf16.msra.mxu0 %v2351
    %2462 = vmatprep.subr.bf16.mxu0 0
    %2463 = vmatpush2.bf16.msra.mxu0 %v2350
    %2464 = vmatprep.subr.bf16.mxu0 0
    %2465 = vmatpush2.bf16.msra.mxu0 %v2349
    %2466 = vmatprep.subr.bf16.mxu0 0
    %2467 = vmatpush2.bf16.msra.mxu0 %v2348
    %2468 = vmatprep.mubr.bf16.mxu0 %v2040
    %2469 = vmatmul.mubr.bf16.gmra.mxu0 %v2039
    %v2470 = vpop.f32.mrf.mxu0
    %v2471 = vadd.f32 %v2146, %v2470
    %v2472 = vpop.f32.mrf.mxu0
    %v2473 = vpop.f32.mrf.mxu0
    %v2474 = vpop.f32.mrf.mxu0
    %2475 = vdwg.mxu0
    %2476 = vmatprep.subr.bf16.mxu0 0
    %2477 = vmatpush1.bf16.msra.mxu0 %v2363
    %2478 = vmatprep.subr.bf16.mxu0 0
    %2479 = vmatpush1.bf16.msra.mxu0 %v2362
    %2480 = vmatprep.subr.bf16.mxu0 0
    %2481 = vmatpush1.bf16.msra.mxu0 %v2361
    %2482 = vmatprep.subr.bf16.mxu0 0
    %2483 = vmatpush1.bf16.msra.mxu0 %v2360
    %2484 = vmatprep.subr.bf16.mxu0 0
    %2485 = vmatpush1.bf16.msra.mxu0 %v2359
    %2486 = vmatprep.subr.bf16.mxu0 0
    %2487 = vmatpush1.bf16.msra.mxu0 %v2358
    %2488 = vmatprep.subr.bf16.mxu0 0
    %2489 = vmatpush1.bf16.msra.mxu0 %v2357
    %2490 = vmatprep.subr.bf16.mxu0 0
    %2491 = vmatpush1.bf16.msra.mxu0 %v2356
    %2492 = vmatprep.subr.bf16.mxu0 0
    %2493 = vmatpush2.bf16.msra.mxu0 %v2371
    %2494 = vmatprep.subr.bf16.mxu0 0
    %2495 = vmatpush2.bf16.msra.mxu0 %v2370
    %2496 = vmatprep.subr.bf16.mxu0 0
    %2497 = vmatpush2.bf16.msra.mxu0 %v2369
    %2498 = vmatprep.subr.bf16.mxu0 0
    %2499 = vmatpush2.bf16.msra.mxu0 %v2368
    %2500 = vmatprep.subr.bf16.mxu0 0
    %2501 = vmatpush2.bf16.msra.mxu0 %v2367
    %2502 = vmatprep.subr.bf16.mxu0 0
    %2503 = vmatpush2.bf16.msra.mxu0 %v2366
    %2504 = vmatprep.subr.bf16.mxu0 0
    %2505 = vmatpush2.bf16.msra.mxu0 %v2365
    %2506 = vmatprep.subr.bf16.mxu0 0
    %2507 = vmatpush2.bf16.msra.mxu0 %v2364
    %2508 = vmatprep.mubr.bf16.mxu0 %v2042
    %2509 = vmatmul.mubr.bf16.gmra.mxu0 %v2041
    %v2510 = vpop.f32.mrf.mxu0
    %v2511 = vadd.f32 %v2471, %v2510
    %v2512 = vpop.f32.mrf.mxu0
    %v2513 = vpop.f32.mrf.mxu0
    %v2514 = vpop.f32.mrf.mxu0
    %2515 = vdwg.mxu0
    %2516 = vmatprep.subr.bf16.mxu0 0
    %2517 = vmatpush1.bf16.msra.mxu0 %v2379
    %2518 = vmatprep.subr.bf16.mxu0 0
    %2519 = vmatpush1.bf16.msra.mxu0 %v2378
    %2520 = vmatprep.subr.bf16.mxu0 0
    %2521 = vmatpush1.bf16.msra.mxu0 %v2377
    %2522 = vmatprep.subr.bf16.mxu0 0
    %2523 = vmatpush1.bf16.msra.mxu0 %v2376
    %2524 = vmatprep.subr.bf16.mxu0 0
    %2525 = vmatpush1.bf16.msra.mxu0 %v2375
    %2526 = vmatprep.subr.bf16.mxu0 0
    %2527 = vmatpush1.bf16.msra.mxu0 %v2374
    %2528 = vmatprep.subr.bf16.mxu0 0
    %2529 = vmatpush1.bf16.msra.mxu0 %v2373
    %2530 = vmatprep.subr.bf16.mxu0 0
    %2531 = vmatpush1.bf16.msra.mxu0 %v2372
    %2532 = vmatprep.subr.bf16.mxu0 0
    %2533 = vmatpush2.bf16.msra.mxu0 %v2387
    %2534 = vmatprep.subr.bf16.mxu0 0
    %2535 = vmatpush2.bf16.msra.mxu0 %v2386
    %2536 = vmatprep.subr.bf16.mxu0 0
    %2537 = vmatpush2.bf16.msra.mxu0 %v2385
    %2538 = vmatprep.subr.bf16.mxu0 0
    %2539 = vmatpush2.bf16.msra.mxu0 %v2384
    %2540 = vmatprep.subr.bf16.mxu0 0
    %2541 = vmatpush2.bf16.msra.mxu0 %v2383
    %2542 = vmatprep.subr.bf16.mxu0 0
    %2543 = vmatpush2.bf16.msra.mxu0 %v2382
    %2544 = vmatprep.subr.bf16.mxu0 0
    %2545 = vmatpush2.bf16.msra.mxu0 %v2381
    %2546 = vmatprep.subr.bf16.mxu0 0
    %2547 = vmatpush2.bf16.msra.mxu0 %v2380
    %2548 = vmatprep.mubr.bf16.mxu0 %v2044
    %2549 = vmatmul.mubr.bf16.gmra.mxu0 %v2043
    %v2550 = vpop.f32.mrf.mxu0
    %v2551 = vadd.f32 %v2511, %v2550
    %v2552 = vpop.f32.mrf.mxu0
    %v2553 = vpop.f32.mrf.mxu0
    %v2554 = vpop.f32.mrf.mxu0
    %2555 = vdwg.mxu0
    %2556 = vst [vmem:[#allocation11] sm:$0x3] %v2551
    // Predicated region
    $region50: #{tpu_custom_call.1} parent=1 // pred_check
      _
    $region51: #{tpu_custom_call.1} parent=1 // pred_check_branch
      %2558 = sbr.rel (0) target = $region53
    $region52: #{tpu_custom_call.1} parent=1 // pred_region
      %s2560 = ssub.s32 32, 32
      %2561 = vsyncadd [#allocation4], %s2560
      %s2563 = sshll.u32 [#allocation11], 4
      %s2564 = int_to_ptr.vmem [resolvable:$true] %s2563
      %2566 = dma.vmem_to_hbm [thread:$0]  %s2564, 32, %s7, [#allocation4]
    $region53: #{tpu_custom_call.1} parent=1 // pred_fallthru
      _
    // Predicated region
    $region54: #{tpu_custom_call.1} parent=1 // pred_check
      _
    $region55: #{tpu_custom_call.1} parent=1 // pred_check_branch
      %2568 = sbr.rel (0) target = $region57
    $region56: #{tpu_custom_call.1} parent=1 // pred_region
      %2569 = dma.done [#allocation4], 32
    $region57: #{tpu_custom_call.1} parent=1 // pred_fallthru
      _
    %2570 = vsyncpa [#allocation3], 1
    %2571 = vsyncpa [#allocation6], 1
    %2572 = vsyncpa [#allocation9], 1
    %2573 = vsyncpa [#allocation4], 1

// kernel: tpu_custom_call.1
$region0: #{tpu_custom_call.1}
  #allocation0 [shape = 'u32[]', space=smem, size = 0x4, offset = 0x4, fixed_abs, tag = 'smem constant byte address 0x4 - core index']
  #allocation1 [shape = 'u32[144,128]{1,0:T(1,128)}', space=vmem, size = 0x12000, scoped, tag = 'internal scratch']
  %s0 = inlined_call_operand.hbm [shape: f32[2,256], index: 0, kind: input, shape index: {}]
  %s1 = inlined_call_operand.hbm [shape: bf16[256,512], index: 1, kind: input, shape index: {}]
  %s2 = inlined_call_operand.hbm [shape: f32[1,512], index: 2, kind: input, shape index: {}]
  %s3 = inlined_call_operand.hbm [shape: bf16[512,768], index: 3, kind: input, shape index: {}]
  %s4 = inlined_call_operand.vmem [shape: f32[1,768], index: 4, kind: input, shape index: {}]
  %s5 = inlined_call_operand.hbm [shape: bf16[768,128], index: 5, kind: input, shape index: {}]
  %s6 = inlined_call_operand.vmem [shape: f32[1,128], index: 6, kind: input, shape index: {}]
  %s7 = inlined_call_operand.hbm [shape: f32[2,128], index: 7, kind: output, shape index: {}]
  %s8 = sld [smem:[#allocation0]]
  $region58: #{tpu_custom_call.1} parent=0
    _
  %s10 = ssub.s32 1, %s8
  %s11 = scalar_select 0, %s10, %s8
  $region1: #{tpu_custom_call.1} parent=0
    #allocation2 [shape = 'u8[2048]{0}', space=vmem, size = 0x800, scoped, tag = 'input window, operand 0, single buffered']
    #allocation3 [shape = 's32[1]{0}', space=sflag, size = 0x4, scoped, tag = 'scoped memory for tpu_custom_call.1']
    #allocation4 [shape = 's32[1]{0}', space=sflag, size = 0x4, scoped, tag = 'scoped memory for tpu_custom_call.1']
    #allocation5 [shape = 'u8[262144]{0}', space=vmem, size = 0x40000, scoped, tag = 'input window, operand 1, single buffered']
    #allocation6 [shape = 's32[1]{0}', space=sflag, size = 0x4, scoped, tag = 'scoped memory for tpu_custom_call.1']
    #allocation7 [shape = 'u8[2048]{0}', space=vmem, size = 0x800, scoped, tag = 'input window, operand 2, single buffered']
    #allocation8 [shape = 'u8[786432]{0}', space=vmem, size = 0xc0000, scoped, tag = 'input window, operand 3, single buffered']
    #allocation9 [shape = 's32[1]{0}', space=sflag, size = 0x4, scoped, tag = 'scoped memory for tpu_custom_call.1']
    #allocation10 [shape = 'u8[196608]{0}', space=vmem, size = 0x30000, scoped, tag = 'input window, operand 5, single buffered']
    #allocation11 [shape = 'u8[1024]{0}', space=vmem, size = 0x400, scoped, tag = 'output window, operand 0, single buffered']
    %12 = vsyncpa [#allocation3], 0
    %13 = vsyncpa [#allocation6], 0
    %14 = vsyncpa [#allocation9], 0
    %15 = vsyncpa [#allocation4], 0
    // Predicated region
    $region2: #{tpu_custom_call.1} parent=1 // pred_check
      _
    $region3: #{tpu_custom_call.1} parent=1 // pred_check_branch
      %17 = sbr.rel (0) target = $region5
    $region4: #{tpu_custom_call.1} parent=1 // pred_region
      %s19 = ssub.s32 64, 64
      %20 = vsyncadd [#allocation3], %s19
      %s22 = sshll.u32 [#allocation2], 4
      %s23 = int_to_ptr.vmem [resolvable:$true] %s22
      %25 = dma.hbm_to_vmem [thread:$0]  %s0, 64, %s23, [#allocation3]
    $region5: #{tpu_custom_call.1} parent=1 // pred_fallthru
      _
    // Predicated region
    $region6: #{tpu_custom_call.1} parent=1 // pred_check
      _
    $region7: #{tpu_custom_call.1} parent=1 // pred_check_branch
      %27 = sbr.rel (0) target = $region9
    $region8: #{tpu_custom_call.1} parent=1 // pred_region
      %s29 = ssub.s32 8192, 8192
      %30 = vsyncadd [#allocation6], %s29
      %s31 = sshll.u32 [#allocation5], 4
      %s32 = int_to_ptr.vmem [resolvable:$true] %s31
      %37 = dma.hbm_to_vmem [thread:$0]  %s1, 8192, %s32, [#allocation6], 256, 256, 16
    $region9: #{tpu_custom_call.1} parent=1 // pred_fallthru
      _
    // Predicated region
    $region10: #{tpu_custom_call.1} parent=1 // pred_check
      _
    $region11: #{tpu_custom_call.1} parent=1 // pred_check_branch
      %39 = sbr.rel (0) target = $region13
    $region12: #{tpu_custom_call.1} parent=1 // pred_region
      %s41 = ssub.s32 64, 64
      %42 = vsyncadd [#allocation6], %s41
      %s44 = sshll.u32 [#allocation7], 4
      %s45 = int_to_ptr.vmem [resolvable:$true] %s44
      %47 = dma.hbm_to_vmem [thread:$0]  %s2, 64, %s45, [#allocation6]
    $region13: #{tpu_custom_call.1} parent=1 // pred_fallthru
      _
    // Predicated region
    $region14: #{tpu_custom_call.1} parent=1 // pred_check
      _
    $region15: #{tpu_custom_call.1} parent=1 // pred_check_branch
      %49 = sbr.rel (0) target = $region17
    $region16: #{tpu_custom_call.1} parent=1 // pred_region
      %s51 = ssub.s32 24576, 24576
      %52 = vsyncadd [#allocation9], %s51
      %s53 = sshll.u32 [#allocation8], 4
      %s54 = int_to_ptr.vmem [resolvable:$true] %s53
      %59 = dma.hbm_to_vmem [thread:$0]  %s3, 24576, %s54, [#allocation9], 384, 384, 24
    $region17: #{tpu_custom_call.1} parent=1 // pred_fallthru
      _
    // Predicated region
    $region18: #{tpu_custom_call.1} parent=1 // pred_check
      _
    $region19: #{tpu_custom_call.1} parent=1 // pred_check_branch
      %61 = sbr.rel (0) target = $region21
    $region20: #{tpu_custom_call.1} parent=1 // pred_region
      _
    $region21: #{tpu_custom_call.1} parent=1 // pred_fallthru
      _
    // Predicated region
    $region22: #{tpu_custom_call.1} parent=1 // pred_check
      _
    $region23: #{tpu_custom_call.1} parent=1 // pred_check_branch
      %63 = sbr.rel (0) target = $region25
    $region24: #{tpu_custom_call.1} parent=1 // pred_region
      %s65 = ssub.s32 6144, 6144
      %66 = vsyncadd [#allocation9], %s65
      %s67 = sshll.u32 [#allocation10], 4
      %s68 = int_to_ptr.vmem [resolvable:$true] %s67
      %73 = dma.hbm_to_vmem [thread:$0]  %s5, 6144, %s68, [#allocation9], 64, 64, 4
    $region25: #{tpu_custom_call.1} parent=1 // pred_fallthru
      _
    // Predicated region
    $region26: #{tpu_custom_call.1} parent=1 // pred_check
      _
    $region27: #{tpu_custom_call.1} parent=1 // pred_check_branch
      %75 = sbr.rel (0) target = $region29
    $region28: #{tpu_custom_call.1} parent=1 // pred_region
      _
    $region29: #{tpu_custom_call.1} parent=1 // pred_fallthru
      _
    // Predicated region
    $region30: #{tpu_custom_call.1} parent=1 // pred_check
      _
    $region31: #{tpu_custom_call.1} parent=1 // pred_check_branch
      %77 = sbr.rel (0) target = $region33
    $region32: #{tpu_custom_call.1} parent=1 // pred_region
      %78 = dma.done [#allocation3], 64
    $region33: #{tpu_custom_call.1} parent=1 // pred_fallthru
      _
    // Predicated region
    $region34: #{tpu_custom_call.1} parent=1 // pred_check
      _
    $region35: #{tpu_custom_call.1} parent=1 // pred_check_branch
      %80 = sbr.rel (0) target = $region37
    $region36: #{tpu_custom_call.1} parent=1 // pred_region
      %81 = dma.done [#allocation6], 8192
    $region37: #{tpu_custom_call.1} parent=1 // pred_fallthru
      _
    // Predicated region
    $region38: #{tpu_custom_call.1} parent=1 // pred_check
      _
    $region39: #{tpu_custom_call.1} parent=1 // pred_check_branch
      %83 = sbr.rel (0) target = $region41
    $region40: #{tpu_custom_call.1} parent=1 // pred_region
      %84 = dma.done [#allocation6], 64
    $region41: #{tpu_custom_call.1} parent=1 // pred_fallthru
      _
    // Predicated region
    $region42: #{tpu_custom_call.1} parent=1 // pred_check
      _
    $region43: #{tpu_custom_call.1} parent=1 // pred_check_branch
      %86 = sbr.rel (0) target = $region45
    $region44: #{tpu_custom_call.1} parent=1 // pred_region
      %87 = dma.done [#allocation9], 24576
    $region45: #{tpu_custom_call.1} parent=1 // pred_fallthru
      _
    // Predicated region
    $region46: #{tpu_custom_call.1} parent=1 // pred_check
      _
    $region47: #{tpu_custom_call.1} parent=1 // pred_check_branch
      %89 = sbr.rel (0) target = $region49
    $region48: #{tpu_custom_call.1} parent=1 // pred_region
      %90 = dma.done [#allocation9], 6144
    $region49: #{tpu_custom_call.1} parent=1 // pred_fallthru
      _
    %v92 = vld [vmem:[#allocation2] sm:$0xf]
    %v93 = vmax.f32 %v92, 0.0
    %v96 = vunpack.c.l.s4 1983009808
    %v97 = vunpack.c.0.s8 %v96
    %v98 = vlaneseq
    %v99 = vshrl.u32 %v98, 7
    %v100 = vsub.s32 %v97, %v99
    %v101 = vrot.slane %v93, %v100
    %v102 = vcombine.high %v101, %v101
    %v105 = vpack.c.bf16 %v101, %v101
    %v106 = vpack.c.bf16 %v102, %v102
    %v107 = vld [vmem:[#allocation5] sm:$0xff]
    %v108 = vld [vmem:[#allocation5 + $0x8] sm:$0xff]
    %v109 = vld [vmem:[#allocation5 + $0x10] sm:$0xff]
    %v110 = vld [vmem:[#allocation5 + $0x18] sm:$0xff]
    %v111 = vld [vmem:[#allocation5 + $0x20] sm:$0xff]
    %v112 = vld [vmem:[#allocation5 + $0x28] sm:$0xff]
    %v113 = vld [vmem:[#allocation5 + $0x30] sm:$0xff]
    %v114 = vld [vmem:[#allocation5 + $0x38] sm:$0xff]
    %v115 = vld [vmem:[#allocation5 + $0x40] sm:$0xff]
    %v116 = vld [vmem:[#allocation5 + $0x48] sm:$0xff]
    %v117 = vld [vmem:[#allocation5 + $0x50] sm:$0xff]
    %v118 = vld [vmem:[#allocation5 + $0x58] sm:$0xff]
    %v119 = vld [vmem:[#allocation5 + $0x60] sm:$0xff]
    %v120 = vld [vmem:[#allocation5 + $0x68] sm:$0xff]
    %v121 = vld [vmem:[#allocation5 + $0x70] sm:$0xff]
    %v122 = vld [vmem:[#allocation5 + $0x78] sm:$0xff]
    %v123 = vld [vmem:[#allocation5 + $0x80] sm:$0xff]
    %v124 = vld [vmem:[#allocation5 + $0x88] sm:$0xff]
    %v125 = vld [vmem:[#allocation5 + $0x90] sm:$0xff]
    %v126 = vld [vmem:[#allocation5 + $0x98] sm:$0xff]
    %v127 = vld [vmem:[#allocation5 + $0xa0] sm:$0xff]
    %v128 = vld [vmem:[#allocation5 + $0xa8] sm:$0xff]
    %v129 = vld [vmem:[#allocation5 + $0xb0] sm:$0xff]
    %v130 = vld [vmem:[#allocation5 + $0xb8] sm:$0xff]
    %v131 = vld [vmem:[#allocation5 + $0xc0] sm:$0xff]
    %v132 = vld [vmem:[#allocation5 + $0xc8] sm:$0xff]
    %v133 = vld [vmem:[#allocation5 + $0xd0] sm:$0xff]
    %v134 = vld [vmem:[#allocation5 + $0xd8] sm:$0xff]
    %v135 = vld [vmem:[#allocation5 + $0xe0] sm:$0xff]
    %v136 = vld [vmem:[#allocation5 + $0xe8] sm:$0xff]
    %v137 = vld [vmem:[#allocation5 + $0xf0] sm:$0xff]
    %v138 = vld [vmem:[#allocation5 + $0xf8] sm:$0xff]
    %v139 = vld [vmem:[#allocation5 + $0x100] sm:$0xff]
    %v140 = vld [vmem:[#allocation5 + $0x108] sm:$0xff]
    %v141 = vld [vmem:[#allocation5 + $0x110] sm:$0xff]
    %v142 = vld [vmem:[#allocation5 + $0x118] sm:$0xff]
    %v143 = vld [vmem:[#allocation5 + $0x120] sm:$0xff]
    %v144 = vld [vmem:[#allocation5 + $0x128] sm:$0xff]
    %v145 = vld [vmem:[#allocation5 + $0x130] sm:$0xff]
    %v146 = vld [vmem:[#allocation5 + $0x138] sm:$0xff]
    %v147 = vld [vmem:[#allocation5 + $0x140] sm:$0xff]
    %v148 = vld [vmem:[#allocation5 + $0x148] sm:$0xff]
    %v149 = vld [vmem:[#allocation5 + $0x150] sm:$0xff]
    %v150 = vld [vmem:[#allocation5 + $0x158] sm:$0xff]
    %v151 = vld [vmem:[#allocation5 + $0x160] sm:$0xff]
    %v152 = vld [vmem:[#allocation5 + $0x168] sm:$0xff]
    %v153 = vld [vmem:[#allocation5 + $0x170] sm:$0xff]
    %v154 = vld [vmem:[#allocation5 + $0x178] sm:$0xff]
    %v155 = vld [vmem:[#allocation5 + $0x180] sm:$0xff]
    %v156 = vld [vmem:[#allocation5 + $0x188] sm:$0xff]
    %v157 = vld [vmem:[#allocation5 + $0x190] sm:$0xff]
    %v158 = vld [vmem:[#allocation5 + $0x198] sm:$0xff]
    %v159 = vld [vmem:[#allocation5 + $0x1a0] sm:$0xff]
    %v160 = vld [vmem:[#allocation5 + $0x1a8] sm:$0xff]
    %v161 = vld [vmem:[#allocation5 + $0x1b0] sm:$0xff]
    %v162 = vld [vmem:[#allocation5 + $0x1b8] sm:$0xff]
    %v163 = vld [vmem:[#allocation5 + $0x1c0] sm:$0xff]
    %v164 = vld [vmem:[#allocation5 + $0x1c8] sm:$0xff]
    %v165 = vld [vmem:[#allocation5 + $0x1d0] sm:$0xff]
    %v166 = vld [vmem:[#allocation5 + $0x1d8] sm:$0xff]
    %v167 = vld [vmem:[#allocation5 + $0x1e0] sm:$0xff]
    %v168 = vld [vmem:[#allocation5 + $0x1e8] sm:$0xff]
    %v169 = vld [vmem:[#allocation5 + $0x1f0] sm:$0xff]
    %v170 = vld [vmem:[#allocation5 + $0x1f8] sm:$0xff]
    %v171 = vld [vmem:[#allocation7] sm:$0xf]
    %v173 = vlaneseq
    %v174 = vshrl.u32 %v173, 7
    %v175 = vsub.s32 0, %v174
    %v176 = vrot.slane %v171, %v175
    %v177 = vlaneseq
    %v178 = vshrl.u32 %v177, 7
    %v179 = vsub.s32 1, %v178
    %v180 = vrot.slane %v171, %v179
    %v181 = vlaneseq
    %v182 = vshrl.u32 %v181, 7
    %v183 = vsub.s32 2, %v182
    %v184 = vrot.slane %v171, %v183
    %v185 = vlaneseq
    %v186 = vshrl.u32 %v185, 7
    %v187 = vsub.s32 3, %v186
    %v188 = vrot.slane %v171, %v187
    %v257 = vunpack.c.l.b16 %v107
    %v258 = vunpack.c.h.b16 %v107
    %v259 = vunpack.c.l.b16 %v108
    %v260 = vunpack.c.h.b16 %v108
    %v261 = vunpack.c.l.b16 %v109
    %v262 = vunpack.c.h.b16 %v109
    %v263 = vunpack.c.l.b16 %v110
    %v264 = vunpack.c.h.b16 %v110
    %v265 = vunpack.c.l.b16 %v111
    %v266 = vunpack.c.h.b16 %v111
    %v267 = vunpack.c.l.b16 %v112
    %v268 = vunpack.c.h.b16 %v112
    %v269 = vunpack.c.l.b16 %v113
    %v270 = vunpack.c.h.b16 %v113
    %v271 = vunpack.c.l.b16 %v114
    %v272 = vunpack.c.h.b16 %v114
    %v273 = vunpack.c.l.b16 %v115
    %v274 = vunpack.c.h.b16 %v115
    %v275 = vunpack.c.l.b16 %v116
    %v276 = vunpack.c.h.b16 %v116
    %v277 = vunpack.c.l.b16 %v117
    %v278 = vunpack.c.h.b16 %v117
    %v279 = vunpack.c.l.b16 %v118
    %v280 = vunpack.c.h.b16 %v118
    %v281 = vunpack.c.l.b16 %v119
    %v282 = vunpack.c.h.b16 %v119
    %v283 = vunpack.c.l.b16 %v120
    %v284 = vunpack.c.h.b16 %v120
    %v285 = vunpack.c.l.b16 %v121
    %v286 = vunpack.c.h.b16 %v121
    %v287 = vunpack.c.l.b16 %v122
    %v288 = vunpack.c.h.b16 %v122
    %v289 = vunpack.c.l.b16 %v123
    %v290 = vunpack.c.h.b16 %v123
    %v291 = vunpack.c.l.b16 %v124
    %v292 = vunpack.c.h.b16 %v124
    %v293 = vunpack.c.l.b16 %v125
    %v294 = vunpack.c.h.b16 %v125
    %v295 = vunpack.c.l.b16 %v126
    %v296 = vunpack.c.h.b16 %v126
    %v297 = vunpack.c.l.b16 %v127
    %v298 = vunpack.c.h.b16 %v127
    %v299 = vunpack.c.l.b16 %v128
    %v300 = vunpack.c.h.b16 %v128
    %v301 = vunpack.c.l.b16 %v129
    %v302 = vunpack.c.h.b16 %v129
    %v303 = vunpack.c.l.b16 %v130
    %v304 = vunpack.c.h.b16 %v130
    %v305 = vunpack.c.l.b16 %v131
    %v306 = vunpack.c.h.b16 %v131
    %v307 = vunpack.c.l.b16 %v132
    %v308 = vunpack.c.h.b16 %v132
    %v309 = vunpack.c.l.b16 %v133
    %v310 = vunpack.c.h.b16 %v133
    %v311 = vunpack.c.l.b16 %v134
    %v312 = vunpack.c.h.b16 %v134
    %v313 = vunpack.c.l.b16 %v135
    %v314 = vunpack.c.h.b16 %v135
    %v315 = vunpack.c.l.b16 %v136
    %v316 = vunpack.c.h.b16 %v136
    %v317 = vunpack.c.l.b16 %v137
    %v318 = vunpack.c.h.b16 %v137
    %v319 = vunpack.c.l.b16 %v138
    %v320 = vunpack.c.h.b16 %v138
    %v321 = vunpack.c.l.b16 %v139
    %v322 = vunpack.c.h.b16 %v139
    %v323 = vunpack.c.l.b16 %v140
    %v324 = vunpack.c.h.b16 %v140
    %v325 = vunpack.c.l.b16 %v141
    %v326 = vunpack.c.h.b16 %v141
    %v327 = vunpack.c.l.b16 %v142
    %v328 = vunpack.c.h.b16 %v142
    %v329 = vunpack.c.l.b16 %v143
    %v330 = vunpack.c.h.b16 %v143
    %v331 = vunpack.c.l.b16 %v144
    %v332 = vunpack.c.h.b16 %v144
    %v333 = vunpack.c.l.b16 %v145
    %v334 = vunpack.c.h.b16 %v145
    %v335 = vunpack.c.l.b16 %v146
    %v336 = vunpack.c.h.b16 %v146
    %v337 = vunpack.c.l.b16 %v147
    %v338 = vunpack.c.h.b16 %v147
    %v339 = vunpack.c.l.b16 %v148
    %v340 = vunpack.c.h.b16 %v148
    %v341 = vunpack.c.l.b16 %v149
    %v342 = vunpack.c.h.b16 %v149
    %v343 = vunpack.c.l.b16 %v150
    %v344 = vunpack.c.h.b16 %v150
    %v345 = vunpack.c.l.b16 %v151
    %v346 = vunpack.c.h.b16 %v151
    %v347 = vunpack.c.l.b16 %v152
    %v348 = vunpack.c.h.b16 %v152
    %v349 = vunpack.c.l.b16 %v153
    %v350 = vunpack.c.h.b16 %v153
    %v351 = vunpack.c.l.b16 %v154
    %v352 = vunpack.c.h.b16 %v154
    %v353 = vunpack.c.l.b16 %v155
    %v354 = vunpack.c.h.b16 %v155
    %v355 = vunpack.c.l.b16 %v156
    %v356 = vunpack.c.h.b16 %v156
    %v357 = vunpack.c.l.b16 %v157
    %v358 = vunpack.c.h.b16 %v157
    %v359 = vunpack.c.l.b16 %v158
    %v360 = vunpack.c.h.b16 %v158
    %v361 = vunpack.c.l.b16 %v159
    %v362 = vunpack.c.h.b16 %v159
    %v363 = vunpack.c.l.b16 %v160
    %v364 = vunpack.c.h.b16 %v160
    %v365 = vunpack.c.l.b16 %v161
    %v366 = vunpack.c.h.b16 %v161
    %v367 = vunpack.c.l.b16 %v162
    %v368 = vunpack.c.h.b16 %v162
    %v369 = vunpack.c.l.b16 %v163
    %v370 = vunpack.c.h.b16 %v163
    %v371 = vunpack.c.l.b16 %v164
    %v372 = vunpack.c.h.b16 %v164
    %v373 = vunpack.c.l.b16 %v165
    %v374 = vunpack.c.h.b16 %v165
    %v375 = vunpack.c.l.b16 %v166
    %v376 = vunpack.c.h.b16 %v166
    %v377 = vunpack.c.l.b16 %v167
    %v378 = vunpack.c.h.b16 %v167
    %v379 = vunpack.c.l.b16 %v168
    %v380 = vunpack.c.h.b16 %v168
    %v381 = vunpack.c.l.b16 %v169
    %v382 = vunpack.c.h.b16 %v169
    %v383 = vunpack.c.l.b16 %v170
    %v384 = vunpack.c.h.b16 %v170
    %v385 = vpack.c.b16 %v261, %v257
    %v386 = vpack.c.b16 %v262, %v258
    %v387 = vpack.c.b16 %v263, %v259
    %v388 = vpack.c.b16 %v264, %v260
    %v389 = vpack.c.b16 %v269, %v265
    %v390 = vpack.c.b16 %v270, %v266
    %v391 = vpack.c.b16 %v271, %v267
    %v392 = vpack.c.b16 %v272, %v268
    %v393 = vpack.c.b16 %v277, %v273
    %v394 = vpack.c.b16 %v278, %v274
    %v395 = vpack.c.b16 %v279, %v275
    %v396 = vpack.c.b16 %v280, %v276
    %v397 = vpack.c.b16 %v285, %v281
    %v398 = vpack.c.b16 %v286, %v282
    %v399 = vpack.c.b16 %v287, %v283
    %v400 = vpack.c.b16 %v288, %v284
    %v401 = vpack.c.b16 %v293, %v289
    %v402 = vpack.c.b16 %v294, %v290
    %v403 = vpack.c.b16 %v295, %v291
    %v404 = vpack.c.b16 %v296, %v292
    %v405 = vpack.c.b16 %v301, %v297
    %v406 = vpack.c.b16 %v302, %v298
    %v407 = vpack.c.b16 %v303, %v299
    %v408 = vpack.c.b16 %v304, %v300
    %v409 = vpack.c.b16 %v309, %v305
    %v410 = vpack.c.b16 %v310, %v306
    %v411 = vpack.c.b16 %v311, %v307
    %v412 = vpack.c.b16 %v312, %v308
    %v413 = vpack.c.b16 %v317, %v313
    %v414 = vpack.c.b16 %v318, %v314
    %v415 = vpack.c.b16 %v319, %v315
    %v416 = vpack.c.b16 %v320, %v316
    %v417 = vpack.c.b16 %v325, %v321
    %v418 = vpack.c.b16 %v326, %v322
    %v419 = vpack.c.b16 %v327, %v323
    %v420 = vpack.c.b16 %v328, %v324
    %v421 = vpack.c.b16 %v333, %v329
    %v422 = vpack.c.b16 %v334, %v330
    %v423 = vpack.c.b16 %v335, %v331
    %v424 = vpack.c.b16 %v336, %v332
    %v425 = vpack.c.b16 %v341, %v337
    %v426 = vpack.c.b16 %v342, %v338
    %v427 = vpack.c.b16 %v343, %v339
    %v428 = vpack.c.b16 %v344, %v340
    %v429 = vpack.c.b16 %v349, %v345
    %v430 = vpack.c.b16 %v350, %v346
    %v431 = vpack.c.b16 %v351, %v347
    %v432 = vpack.c.b16 %v352, %v348
    %v433 = vpack.c.b16 %v357, %v353
    %v434 = vpack.c.b16 %v358, %v354
    %v435 = vpack.c.b16 %v359, %v355
    %v436 = vpack.c.b16 %v360, %v356
    %v437 = vpack.c.b16 %v365, %v361
    %v438 = vpack.c.b16 %v366, %v362
    %v439 = vpack.c.b16 %v367, %v363
    %v440 = vpack.c.b16 %v368, %v364
    %v441 = vpack.c.b16 %v373, %v369
    %v442 = vpack.c.b16 %v374, %v370
    %v443 = vpack.c.b16 %v375, %v371
    %v444 = vpack.c.b16 %v376, %v372
    %v445 = vpack.c.b16 %v381, %v377
    %v446 = vpack.c.b16 %v382, %v378
    %v447 = vpack.c.b16 %v383, %v379
    %v448 = vpack.c.b16 %v384, %v380
    %513 = vmatprep.subr.bf16.mxu0 %v414
    %514 = vmatpush1.bf16.msra.mxu0 %v413
    %515 = vmatprep.subr.bf16.mxu0 %v410
    %516 = vmatpush1.bf16.msra.mxu0 %v409
    %517 = vmatprep.subr.bf16.mxu0 %v406
    %518 = vmatpush1.bf16.msra.mxu0 %v405
    %519 = vmatprep.subr.bf16.mxu0 %v402
    %520 = vmatpush1.bf16.msra.mxu0 %v401
    %521 = vmatprep.subr.bf16.mxu0 %v398
    %522 = vmatpush1.bf16.msra.mxu0 %v397
    %523 = vmatprep.subr.bf16.mxu0 %v394
    %524 = vmatpush1.bf16.msra.mxu0 %v393
    %525 = vmatprep.subr.bf16.mxu0 %v390
    %526 = vmatpush1.bf16.msra.mxu0 %v389
    %527 = vmatprep.subr.bf16.mxu0 %v386
    %528 = vmatpush1.bf16.msra.mxu0 %v385
    %529 = vmatprep.subr.bf16.mxu0 %v446
    %530 = vmatpush2.bf16.msra.mxu0 %v445
    %531 = vmatprep.subr.bf16.mxu0 %v442
    %532 = vmatpush2.bf16.msra.mxu0 %v441
    %533 = vmatprep.subr.bf16.mxu0 %v438
    %534 = vmatpush2.bf16.msra.mxu0 %v437
    %535 = vmatprep.subr.bf16.mxu0 %v434
    %536 = vmatpush2.bf16.msra.mxu0 %v433
    %537 = vmatprep.subr.bf16.mxu0 %v430
    %538 = vmatpush2.bf16.msra.mxu0 %v429
    %539 = vmatprep.subr.bf16.mxu0 %v426
    %540 = vmatpush2.bf16.msra.mxu0 %v425
    %541 = vmatprep.subr.bf16.mxu0 %v422
    %542 = vmatpush2.bf16.msra.mxu0 %v421
    %543 = vmatprep.subr.bf16.mxu0 %v418
    %544 = vmatpush2.bf16.msra.mxu0 %v417
    %545 = vmatprep.mubr.bf16.mxu0 %v106
    %546 = vmatmul.mubr.bf16.gmra.mxu0 %v105
    %v547 = vpop.f32.mrf.mxu0
    %v548 = vadd.f32 %v176, %v547
    %v549 = vpop.f32.mrf.mxu0
    %v550 = vadd.f32 %v180, %v549
    %v551 = vpop.f32.mrf.mxu0
    %v552 = vpop.f32.mrf.mxu0
    %553 = vdwg.mxu0
    %554 = vmatprep.subr.bf16.mxu0 %v416
    %555 = vmatpush1.bf16.msra.mxu0 %v415
    %556 = vmatprep.subr.bf16.mxu0 %v412
    %557 = vmatpush1.bf16.msra.mxu0 %v411
    %558 = vmatprep.subr.bf16.mxu0 %v408
    %559 = vmatpush1.bf16.msra.mxu0 %v407
    %560 = vmatprep.subr.bf16.mxu0 %v404
    %561 = vmatpush1.bf16.msra.mxu0 %v403
    %562 = vmatprep.subr.bf16.mxu0 %v400
    %563 = vmatpush1.bf16.msra.mxu0 %v399
    %564 = vmatprep.subr.bf16.mxu0 %v396
    %565 = vmatpush1.bf16.msra.mxu0 %v395
    %566 = vmatprep.subr.bf16.mxu0 %v392
    %567 = vmatpush1.bf16.msra.mxu0 %v391
    %568 = vmatprep.subr.bf16.mxu0 %v388
    %569 = vmatpush1.bf16.msra.mxu0 %v387
    %570 = vmatprep.subr.bf16.mxu0 %v448
    %571 = vmatpush2.bf16.msra.mxu0 %v447
    %572 = vmatprep.subr.bf16.mxu0 %v444
    %573 = vmatpush2.bf16.msra.mxu0 %v443
    %574 = vmatprep.subr.bf16.mxu0 %v440
    %575 = vmatpush2.bf16.msra.mxu0 %v439
    %576 = vmatprep.subr.bf16.mxu0 %v436
    %577 = vmatpush2.bf16.msra.mxu0 %v435
    %578 = vmatprep.subr.bf16.mxu0 %v432
    %579 = vmatpush2.bf16.msra.mxu0 %v431
    %580 = vmatprep.subr.bf16.mxu0 %v428
    %581 = vmatpush2.bf16.msra.mxu0 %v427
    %582 = vmatprep.subr.bf16.mxu0 %v424
    %583 = vmatpush2.bf16.msra.mxu0 %v423
    %584 = vmatprep.subr.bf16.mxu0 %v420
    %585 = vmatpush2.bf16.msra.mxu0 %v419
    %586 = vmatprep.mubr.bf16.mxu0 %v106
    %587 = vmatmul.mubr.bf16.gmra.mxu0 %v105
    %v588 = vpop.f32.mrf.mxu0
    %v589 = vadd.f32 %v184, %v588
    %v590 = vpop.f32.mrf.mxu0
    %v591 = vadd.f32 %v188, %v590
    %v592 = vpop.f32.mrf.mxu0
    %v593 = vpop.f32.mrf.mxu0
    %594 = vdwg.mxu0
    %v595 = vmax.f32 %v548, 0.0
    %v596 = vmax.f32 %v550, 0.0
    %v597 = vmax.f32 %v589, 0.0
    %v598 = vmax.f32 %v591, 0.0
    %v599 = vpack.c.bf16 %v595, %v595
    %v600 = vpack.c.bf16 %v596, %v596
    %v601 = vpack.c.bf16 %v597, %v597
    %v602 = vpack.c.bf16 %v598, %v598
    %v603 = vld [vmem:[#allocation8] sm:$0xff]
    %v604 = vld [vmem:[#allocation8 + $0x8] sm:$0xff]
    %v605 = vld [vmem:[#allocation8 + $0x10] sm:$0xff]
    %v606 = vld [vmem:[#allocation8 + $0x18] sm:$0xff]
    %v607 = vld [vmem:[#allocation8 + $0x20] sm:$0xff]
    %v608 = vld [vmem:[#allocation8 + $0x28] sm:$0xff]
    %v609 = vld [vmem:[#allocation8 + $0x30] sm:$0xff]
    %v610 = vld [vmem:[#allocation8 + $0x38] sm:$0xff]
    %v611 = vld [vmem:[#allocation8 + $0x40] sm:$0xff]
    %v612 = vld [vmem:[#allocation8 + $0x48] sm:$0xff]
    %v613 = vld [vmem:[#allocation8 + $0x50] sm:$0xff]
    %v614 = vld [vmem:[#allocation8 + $0x58] sm:$0xff]
    %v615 = vld [vmem:[#allocation8 + $0x60] sm:$0xff]
    %v616 = vld [vmem:[#allocation8 + $0x68] sm:$0xff]
    %v617 = vld [vmem:[#allocation8 + $0x70] sm:$0xff]
    %v618 = vld [vmem:[#allocation8 + $0x78] sm:$0xff]
    %v619 = vld [vmem:[#allocation8 + $0x80] sm:$0xff]
    %v620 = vld [vmem:[#allocation8 + $0x88] sm:$0xff]
    %v621 = vld [vmem:[#allocation8 + $0x90] sm:$0xff]
    %v622 = vld [vmem:[#allocation8 + $0x98] sm:$0xff]
    %v623 = vld [vmem:[#allocation8 + $0xa0] sm:$0xff]
    %v624 = vld [vmem:[#allocation8 + $0xa8] sm:$0xff]
    %v625 = vld [vmem:[#allocation8 + $0xb0] sm:$0xff]
    %v626 = vld [vmem:[#allocation8 + $0xb8] sm:$0xff]
    %v627 = vld [vmem:[#allocation8 + $0xc0] sm:$0xff]
    %v628 = vld [vmem:[#allocation8 + $0xc8] sm:$0xff]
    %v629 = vld [vmem:[#allocation8 + $0xd0] sm:$0xff]
    %v630 = vld [vmem:[#allocation8 + $0xd8] sm:$0xff]
    %v631 = vld [vmem:[#allocation8 + $0xe0] sm:$0xff]
    %v632 = vld [vmem:[#allocation8 + $0xe8] sm:$0xff]
    %v633 = vld [vmem:[#allocation8 + $0xf0] sm:$0xff]
    %v634 = vld [vmem:[#allocation8 + $0xf8] sm:$0xff]
    %v635 = vld [vmem:[#allocation8 + $0x100] sm:$0xff]
    %v636 = vld [vmem:[#allocation8 + $0x108] sm:$0xff]
    %v637 = vld [vmem:[#allocation8 + $0x110] sm:$0xff]
    %v638 = vld [vmem:[#allocation8 + $0x118] sm:$0xff]
    %v639 = vld [vmem:[#allocation8 + $0x120] sm:$0xff]
    %v640 = vld [vmem:[#allocation8 + $0x128] sm:$0xff]
    %v641 = vld [vmem:[#allocation8 + $0x130] sm:$0xff]
    %v642 = vld [vmem:[#allocation8 + $0x138] sm:$0xff]
    %v643 = vld [vmem:[#allocation8 + $0x140] sm:$0xff]
    %v644 = vld [vmem:[#allocation8 + $0x148] sm:$0xff]
    %v645 = vld [vmem:[#allocation8 + $0x150] sm:$0xff]
    %v646 = vld [vmem:[#allocation8 + $0x158] sm:$0xff]
    %v647 = vld [vmem:[#allocation8 + $0x160] sm:$0xff]
    %v648 = vld [vmem:[#allocation8 + $0x168] sm:$0xff]
    %v649 = vld [vmem:[#allocation8 + $0x170] sm:$0xff]
    %v650 = vld [vmem:[#allocation8 + $0x178] sm:$0xff]
    %v651 = vld [vmem:[#allocation8 + $0x180] sm:$0xff]
    %v652 = vld [vmem:[#allocation8 + $0x188] sm:$0xff]
    %v653 = vld [vmem:[#allocation8 + $0x190] sm:$0xff]
    %v654 = vld [vmem:[#allocation8 + $0x198] sm:$0xff]
    %v655 = vld [vmem:[#allocation8 + $0x1a0] sm:$0xff]
    %v656 = vld [vmem:[#allocation8 + $0x1a8] sm:$0xff]
    %v657 = vld [vmem:[#allocation8 + $0x1b0] sm:$0xff]
    %v658 = vld [vmem:[#allocation8 + $0x1b8] sm:$0xff]
    %v659 = vld [vmem:[#allocation8 + $0x1c0] sm:$0xff]
    %v660 = vld [vmem:[#allocation8 + $0x1c8] sm:$0xff]
    %v661 = vld [vmem:[#allocation8 + $0x1d0] sm:$0xff]
    %v662 = vld [vmem:[#allocation8 + $0x1d8] sm:$0xff]
    %v663 = vld [vmem:[#allocation8 + $0x1e0] sm:$0xff]
    %v664 = vld [vmem:[#allocation8 + $0x1e8] sm:$0xff]
    %v665 = vld [vmem:[#allocation8 + $0x1f0] sm:$0xff]
    %v666 = vld [vmem:[#allocation8 + $0x1f8] sm:$0xff]
    %v667 = vld [vmem:[#allocation8 + $0x200] sm:$0xff]
    %v668 = vld [vmem:[#allocation8 + $0x208] sm:$0xff]
    %v669 = vld [vmem:[#allocation8 + $0x210] sm:$0xff]
    %v670 = vld [vmem:[#allocation8 + $0x218] sm:$0xff]
    %v671 = vld [vmem:[#allocation8 + $0x220] sm:$0xff]
    %v672 = vld [vmem:[#allocation8 + $0x228] sm:$0xff]
    %v673 = vld [vmem:[#allocation8 + $0x230] sm:$0xff]
    %v674 = vld [vmem:[#allocation8 + $0x238] sm:$0xff]
    %v675 = vld [vmem:[#allocation8 + $0x240] sm:$0xff]
    %v676 = vld [vmem:[#allocation8 + $0x248] sm:$0xff]
    %v677 = vld [vmem:[#allocation8 + $0x250] sm:$0xff]
    %v678 = vld [vmem:[#allocation8 + $0x258] sm:$0xff]
    %v679 = vld [vmem:[#allocation8 + $0x260] sm:$0xff]
    %v680 = vld [vmem:[#allocation8 + $0x268] sm:$0xff]
    %v681 = vld [vmem:[#allocation8 + $0x270] sm:$0xff]
    %v682 = vld [vmem:[#allocation8 + $0x278] sm:$0xff]
    %v683 = vld [vmem:[#allocation8 + $0x280] sm:$0xff]
    %v684 = vld [vmem:[#allocation8 + $0x288] sm:$0xff]
    %v685 = vld [vmem:[#allocation8 + $0x290] sm:$0xff]
    %v686 = vld [vmem:[#allocation8 + $0x298] sm:$0xff]
    %v687 = vld [vmem:[#allocation8 + $0x2a0] sm:$0xff]
    %v688 = vld [vmem:[#allocation8 + $0x2a8] sm:$0xff]
    %v689 = vld [vmem:[#allocation8 + $0x2b0] sm:$0xff]
    %v690 = vld [vmem:[#allocation8 + $0x2b8] sm:$0xff]
    %v691 = vld [vmem:[#allocation8 + $0x2c0] sm:$0xff]
    %v692 = vld [vmem:[#allocation8 + $0x2c8] sm:$0xff]
    %v693 = vld [vmem:[#allocation8 + $0x2d0] sm:$0xff]
    %v694 = vld [vmem:[#allocation8 + $0x2d8] sm:$0xff]
    %v695 = vld [vmem:[#allocation8 + $0x2e0] sm:$0xff]
    %v696 = vld [vmem:[#allocation8 + $0x2e8] sm:$0xff]
    %v697 = vld [vmem:[#allocation8 + $0x2f0] sm:$0xff]
    %v698 = vld [vmem:[#allocation8 + $0x2f8] sm:$0xff]
    %v699 = vld [vmem:[#allocation8 + $0x300] sm:$0xff]
    %v700 = vld [vmem:[#allocation8 + $0x308] sm:$0xff]
    %v701 = vld [vmem:[#allocation8 + $0x310] sm:$0xff]
    %v702 = vld [vmem:[#allocation8 + $0x318] sm:$0xff]
    %v703 = vld [vmem:[#allocation8 + $0x320] sm:$0xff]
    %v704 = vld [vmem:[#allocation8 + $0x328] sm:$0xff]
    %v705 = vld [vmem:[#allocation8 + $0x330] sm:$0xff]
    %v706 = vld [vmem:[#allocation8 + $0x338] sm:$0xff]
    %v707 = vld [vmem:[#allocation8 + $0x340] sm:$0xff]
    %v708 = vld [vmem:[#allocation8 + $0x348] sm:$0xff]
    %v709 = vld [vmem:[#allocation8 + $0x350] sm:$0xff]
    %v710 = vld [vmem:[#allocation8 + $0x358] sm:$0xff]
    %v711 = vld [vmem:[#allocation8 + $0x360] sm:$0xff]
    %v712 = vld [vmem:[#allocation8 + $0x368] sm:$0xff]
    %v713 = vld [vmem:[#allocation8 + $0x370] sm:$0xff]
    %v714 = vld [vmem:[#allocation8 + $0x378] sm:$0xff]
    %v715 = vld [vmem:[#allocation8 + $0x380] sm:$0xff]
    %v716 = vld [vmem:[#allocation8 + $0x388] sm:$0xff]
    %v717 = vld [vmem:[#allocation8 + $0x390] sm:$0xff]
    %v718 = vld [vmem:[#allocation8 + $0x398] sm:$0xff]
    %v719 = vld [vmem:[#allocation8 + $0x3a0] sm:$0xff]
    %v720 = vld [vmem:[#allocation8 + $0x3a8] sm:$0xff]
    %v721 = vld [vmem:[#allocation8 + $0x3b0] sm:$0xff]
    %v722 = vld [vmem:[#allocation8 + $0x3b8] sm:$0xff]
    %v723 = vld [vmem:[#allocation8 + $0x3c0] sm:$0xff]
    %v724 = vld [vmem:[#allocation8 + $0x3c8] sm:$0xff]
    %v725 = vld [vmem:[#allocation8 + $0x3d0] sm:$0xff]
    %v726 = vld [vmem:[#allocation8 + $0x3d8] sm:$0xff]
    %v727 = vld [vmem:[#allocation8 + $0x3e0] sm:$0xff]
    %v728 = vld [vmem:[#allocation8 + $0x3e8] sm:$0xff]
    %v729 = vld [vmem:[#allocation8 + $0x3f0] sm:$0xff]
    %v730 = vld [vmem:[#allocation8 + $0x3f8] sm:$0xff]
    %v731 = vld [vmem:[#allocation8 + $0x400] sm:$0xff]
    %v732 = vld [vmem:[#allocation8 + $0x408] sm:$0xff]
    %v733 = vld [vmem:[#allocation8 + $0x410] sm:$0xff]
    %v734 = vld [vmem:[#allocation8 + $0x418] sm:$0xff]
    %v735 = vld [vmem:[#allocation8 + $0x420] sm:$0xff]
    %v736 = vld [vmem:[#allocation8 + $0x428] sm:$0xff]
    %v737 = vld [vmem:[#allocation8 + $0x430] sm:$0xff]
    %v738 = vld [vmem:[#allocation8 + $0x438] sm:$0xff]
    %v739 = vld [vmem:[#allocation8 + $0x440] sm:$0xff]
    %v740 = vld [vmem:[#allocation8 + $0x448] sm:$0xff]
    %v741 = vld [vmem:[#allocation8 + $0x450] sm:$0xff]
    %v742 = vld [vmem:[#allocation8 + $0x458] sm:$0xff]
    %v743 = vld [vmem:[#allocation8 + $0x460] sm:$0xff]
    %v744 = vld [vmem:[#allocation8 + $0x468] sm:$0xff]
    %v745 = vld [vmem:[#allocation8 + $0x470] sm:$0xff]
    %v746 = vld [vmem:[#allocation8 + $0x478] sm:$0xff]
    %v747 = vld [vmem:[#allocation8 + $0x480] sm:$0xff]
    %v748 = vld [vmem:[#allocation8 + $0x488] sm:$0xff]
    %v749 = vld [vmem:[#allocation8 + $0x490] sm:$0xff]
    %v750 = vld [vmem:[#allocation8 + $0x498] sm:$0xff]
    %v751 = vld [vmem:[#allocation8 + $0x4a0] sm:$0xff]
    %v752 = vld [vmem:[#allocation8 + $0x4a8] sm:$0xff]
    %v753 = vld [vmem:[#allocation8 + $0x4b0] sm:$0xff]
    %v754 = vld [vmem:[#allocation8 + $0x4b8] sm:$0xff]
    %v755 = vld [vmem:[#allocation8 + $0x4c0] sm:$0xff]
    %v756 = vld [vmem:[#allocation8 + $0x4c8] sm:$0xff]
    %v757 = vld [vmem:[#allocation8 + $0x4d0] sm:$0xff]
    %v758 = vld [vmem:[#allocation8 + $0x4d8] sm:$0xff]
    %v759 = vld [vmem:[#allocation8 + $0x4e0] sm:$0xff]
    %v760 = vld [vmem:[#allocation8 + $0x4e8] sm:$0xff]
    %v761 = vld [vmem:[#allocation8 + $0x4f0] sm:$0xff]
    %v762 = vld [vmem:[#allocation8 + $0x4f8] sm:$0xff]
    %v763 = vld [vmem:[#allocation8 + $0x500] sm:$0xff]
    %v764 = vld [vmem:[#allocation8 + $0x508] sm:$0xff]
    %v765 = vld [vmem:[#allocation8 + $0x510] sm:$0xff]
    %v766 = vld [vmem:[#allocation8 + $0x518] sm:$0xff]
    %v767 = vld [vmem:[#allocation8 + $0x520] sm:$0xff]
    %v768 = vld [vmem:[#allocation8 + $0x528] sm:$0xff]
    %v769 = vld [vmem:[#allocation8 + $0x530] sm:$0xff]
    %v770 = vld [vmem:[#allocation8 + $0x538] sm:$0xff]
    %v771 = vld [vmem:[#allocation8 + $0x540] sm:$0xff]
    %v772 = vld [vmem:[#allocation8 + $0x548] sm:$0xff]
    %v773 = vld [vmem:[#allocation8 + $0x550] sm:$0xff]
    %v774 = vld [vmem:[#allocation8 + $0x558] sm:$0xff]
    %v775 = vld [vmem:[#allocation8 + $0x560] sm:$0xff]
    %v776 = vld [vmem:[#allocation8 + $0x568] sm:$0xff]
    %v777 = vld [vmem:[#allocation8 + $0x570] sm:$0xff]
    %v778 = vld [vmem:[#allocation8 + $0x578] sm:$0xff]
    %v779 = vld [vmem:[#allocation8 + $0x580] sm:$0xff]
    %v780 = vld [vmem:[#allocation8 + $0x588] sm:$0xff]
    %v781 = vld [vmem:[#allocation8 + $0x590] sm:$0xff]
    %v782 = vld [vmem:[#allocation8 + $0x598] sm:$0xff]
    %v783 = vld [vmem:[#allocation8 + $0x5a0] sm:$0xff]
    %v784 = vld [vmem:[#allocation8 + $0x5a8] sm:$0xff]
    %v785 = vld [vmem:[#allocation8 + $0x5b0] sm:$0xff]
    %v786 = vld [vmem:[#allocation8 + $0x5b8] sm:$0xff]
    %v787 = vld [vmem:[#allocation8 + $0x5c0] sm:$0xff]
    %v788 = vld [vmem:[#allocation8 + $0x5c8] sm:$0xff]
    %v789 = vld [vmem:[#allocation8 + $0x5d0] sm:$0xff]
    %v790 = vld [vmem:[#allocation8 + $0x5d8] sm:$0xff]
    %v791 = vld [vmem:[#allocation8 + $0x5e0] sm:$0xff]
    %v792 = vld [vmem:[#allocation8 + $0x5e8] sm:$0xff]
    %v793 = vld [vmem:[#allocation8 + $0x5f0] sm:$0xff]
    %v794 = vld [vmem:[#allocation8 + $0x5f8] sm:$0xff]
    %v795 = vld [vmem:[%s4] sm:$0x3f]
    %v797 = vlaneseq
    %v798 = vshrl.u32 %v797, 7
    %v799 = vsub.s32 0, %v798
    %v800 = vrot.slane %v795, %v799
    %v801 = vlaneseq
    %v802 = vshrl.u32 %v801, 7
    %v803 = vsub.s32 1, %v802
    %v804 = vrot.slane %v795, %v803
    %v805 = vlaneseq
    %v806 = vshrl.u32 %v805, 7
    %v807 = vsub.s32 2, %v806
    %v808 = vrot.slane %v795, %v807
    %v809 = vlaneseq
    %v810 = vshrl.u32 %v809, 7
    %v811 = vsub.s32 3, %v810
    %v812 = vrot.slane %v795, %v811
    %v813 = vlaneseq
    %v814 = vshrl.u32 %v813, 7
    %v815 = vsub.s32 4, %v814
    %v816 = vrot.slane %v795, %v815
    %v817 = vlaneseq
    %v818 = vshrl.u32 %v817, 7
    %v819 = vsub.s32 5, %v818
    %v820 = vrot.slane %v795, %v819
    %v1019 = vunpack.c.l.b16 %v603
    %v1020 = vunpack.c.h.b16 %v603
    %v1021 = vunpack.c.l.b16 %v604
    %v1022 = vunpack.c.h.b16 %v604
    %v1023 = vunpack.c.l.b16 %v605
    %v1024 = vunpack.c.h.b16 %v605
    %v1025 = vunpack.c.l.b16 %v606
    %v1026 = vunpack.c.h.b16 %v606
    %v1027 = vunpack.c.l.b16 %v607
    %v1028 = vunpack.c.h.b16 %v607
    %v1029 = vunpack.c.l.b16 %v608
    %v1030 = vunpack.c.h.b16 %v608
    %v1031 = vunpack.c.l.b16 %v609
    %v1032 = vunpack.c.h.b16 %v609
    %v1033 = vunpack.c.l.b16 %v610
    %v1034 = vunpack.c.h.b16 %v610
    %v1035 = vunpack.c.l.b16 %v611
    %v1036 = vunpack.c.h.b16 %v611
    %v1037 = vunpack.c.l.b16 %v612
    %v1038 = vunpack.c.h.b16 %v612
    %v1039 = vunpack.c.l.b16 %v613
    %v1040 = vunpack.c.h.b16 %v613
    %v1041 = vunpack.c.l.b16 %v614
    %v1042 = vunpack.c.h.b16 %v614
    %v1043 = vunpack.c.l.b16 %v615
    %v1044 = vunpack.c.h.b16 %v615
    %v1045 = vunpack.c.l.b16 %v616
    %v1046 = vunpack.c.h.b16 %v616
    %v1047 = vunpack.c.l.b16 %v617
    %v1048 = vunpack.c.h.b16 %v617
    %v1049 = vunpack.c.l.b16 %v618
    %v1050 = vunpack.c.h.b16 %v618
    %v1051 = vunpack.c.l.b16 %v619
    %v1052 = vunpack.c.h.b16 %v619
    %v1053 = vunpack.c.l.b16 %v620
    %v1054 = vunpack.c.h.b16 %v620
    %v1055 = vunpack.c.l.b16 %v621
    %v1056 = vunpack.c.h.b16 %v621
    %v1057 = vunpack.c.l.b16 %v622
    %v1058 = vunpack.c.h.b16 %v622
    %v1059 = vunpack.c.l.b16 %v623
    %v1060 = vunpack.c.h.b16 %v623
    %v1061 = vunpack.c.l.b16 %v624
    %v1062 = vunpack.c.h.b16 %v624
    %v1063 = vunpack.c.l.b16 %v625
    %v1064 = vunpack.c.h.b16 %v625
    %v1065 = vunpack.c.l.b16 %v626
    %v1066 = vunpack.c.h.b16 %v626
    %v1067 = vunpack.c.l.b16 %v627
    %v1068 = vunpack.c.h.b16 %v627
    %v1069 = vunpack.c.l.b16 %v628
    %v1070 = vunpack.c.h.b16 %v628
    %v1071 = vunpack.c.l.b16 %v629
    %v1072 = vunpack.c.h.b16 %v629
    %v1073 = vunpack.c.l.b16 %v630
    %v1074 = vunpack.c.h.b16 %v630
    %v1075 = vunpack.c.l.b16 %v631
    %v1076 = vunpack.c.h.b16 %v631
    %v1077 = vunpack.c.l.b16 %v632
    %v1078 = vunpack.c.h.b16 %v632
    %v1079 = vunpack.c.l.b16 %v633
    %v1080 = vunpack.c.h.b16 %v633
    %v1081 = vunpack.c.l.b16 %v634
    %v1082 = vunpack.c.h.b16 %v634
    %v1083 = vunpack.c.l.b16 %v635
    %v1084 = vunpack.c.h.b16 %v635
    %v1085 = vunpack.c.l.b16 %v636
    %v1086 = vunpack.c.h.b16 %v636
    %v1087 = vunpack.c.l.b16 %v637
    %v1088 = vunpack.c.h.b16 %v637
    %v1089 = vunpack.c.l.b16 %v638
    %v1090 = vunpack.c.h.b16 %v638
    %v1091 = vunpack.c.l.b16 %v639
    %v1092 = vunpack.c.h.b16 %v639
    %v1093 = vunpack.c.l.b16 %v640
    %v1094 = vunpack.c.h.b16 %v640
    %v1095 = vunpack.c.l.b16 %v641
    %v1096 = vunpack.c.h.b16 %v641
    %v1097 = vunpack.c.l.b16 %v642
    %v1098 = vunpack.c.h.b16 %v642
    %v1099 = vunpack.c.l.b16 %v643
    %v1100 = vunpack.c.h.b16 %v643
    %v1101 = vunpack.c.l.b16 %v644
    %v1102 = vunpack.c.h.b16 %v644
    %v1103 = vunpack.c.l.b16 %v645
    %v1104 = vunpack.c.h.b16 %v645
    %v1105 = vunpack.c.l.b16 %v646
    %v1106 = vunpack.c.h.b16 %v646
    %v1107 = vunpack.c.l.b16 %v647
    %v1108 = vunpack.c.h.b16 %v647
    %v1109 = vunpack.c.l.b16 %v648
    %v1110 = vunpack.c.h.b16 %v648
    %v1111 = vunpack.c.l.b16 %v649
    %v1112 = vunpack.c.h.b16 %v649
    %v1113 = vunpack.c.l.b16 %v650
    %v1114 = vunpack.c.h.b16 %v650
    %v1115 = vunpack.c.l.b16 %v651
    %v1116 = vunpack.c.h.b16 %v651
    %v1117 = vunpack.c.l.b16 %v652
    %v1118 = vunpack.c.h.b16 %v652
    %v1119 = vunpack.c.l.b16 %v653
    %v1120 = vunpack.c.h.b16 %v653
    %v1121 = vunpack.c.l.b16 %v654
    %v1122 = vunpack.c.h.b16 %v654
    %v1123 = vunpack.c.l.b16 %v655
    %v1124 = vunpack.c.h.b16 %v655
    %v1125 = vunpack.c.l.b16 %v656
    %v1126 = vunpack.c.h.b16 %v656
    %v1127 = vunpack.c.l.b16 %v657
    %v1128 = vunpack.c.h.b16 %v657
    %v1129 = vunpack.c.l.b16 %v658
    %v1130 = vunpack.c.h.b16 %v658
    %v1131 = vunpack.c.l.b16 %v659
    %v1132 = vunpack.c.h.b16 %v659
    %v1133 = vunpack.c.l.b16 %v660
    %v1134 = vunpack.c.h.b16 %v660
    %v1135 = vunpack.c.l.b16 %v661
    %v1136 = vunpack.c.h.b16 %v661
    %v1137 = vunpack.c.l.b16 %v662
    %v1138 = vunpack.c.h.b16 %v662
    %v1139 = vunpack.c.l.b16 %v663
    %v1140 = vunpack.c.h.b16 %v663
    %v1141 = vunpack.c.l.b16 %v664
    %v1142 = vunpack.c.h.b16 %v664
    %v1143 = vunpack.c.l.b16 %v665
    %v1144 = vunpack.c.h.b16 %v665
    %v1145 = vunpack.c.l.b16 %v666
    %v1146 = vunpack.c.h.b16 %v666
    %v1147 = vunpack.c.l.b16 %v667
    %v1148 = vunpack.c.h.b16 %v667
    %v1149 = vunpack.c.l.b16 %v668
    %v1150 = vunpack.c.h.b16 %v668
    %v1151 = vunpack.c.l.b16 %v669
    %v1152 = vunpack.c.h.b16 %v669
    %v1153 = vunpack.c.l.b16 %v670
    %v1154 = vunpack.c.h.b16 %v670
    %v1155 = vunpack.c.l.b16 %v671
    %v1156 = vunpack.c.h.b16 %v671
    %v1157 = vunpack.c.l.b16 %v672
    %v1158 = vunpack.c.h.b16 %v672
    %v1159 = vunpack.c.l.b16 %v673
    %v1160 = vunpack.c.h.b16 %v673
    %v1161 = vunpack.c.l.b16 %v674
    %v1162 = vunpack.c.h.b16 %v674
    %v1163 = vunpack.c.l.b16 %v675
    %v1164 = vunpack.c.h.b16 %v675
    %v1165 = vunpack.c.l.b16 %v676
    %v1166 = vunpack.c.h.b16 %v676
    %v1167 = vunpack.c.l.b16 %v677
    %v1168 = vunpack.c.h.b16 %v677
    %v1169 = vunpack.c.l.b16 %v678
    %v1170 = vunpack.c.h.b16 %v678
    %v1171 = vunpack.c.l.b16 %v679
    %v1172 = vunpack.c.h.b16 %v679
    %v1173 = vunpack.c.l.b16 %v680
    %v1174 = vunpack.c.h.b16 %v680
    %v1175 = vunpack.c.l.b16 %v681
    %v1176 = vunpack.c.h.b16 %v681
    %v1177 = vunpack.c.l.b16 %v682
    %v1178 = vunpack.c.h.b16 %v682
    %v1179 = vunpack.c.l.b16 %v683
    %v1180 = vunpack.c.h.b16 %v683
    %v1181 = vunpack.c.l.b16 %v684
    %v1182 = vunpack.c.h.b16 %v684
    %v1183 = vunpack.c.l.b16 %v685
    %v1184 = vunpack.c.h.b16 %v685
    %v1185 = vunpack.c.l.b16 %v686
    %v1186 = vunpack.c.h.b16 %v686
    %v1187 = vunpack.c.l.b16 %v687
    %v1188 = vunpack.c.h.b16 %v687
    %v1189 = vunpack.c.l.b16 %v688
    %v1190 = vunpack.c.h.b16 %v688
    %v1191 = vunpack.c.l.b16 %v689
    %v1192 = vunpack.c.h.b16 %v689
    %v1193 = vunpack.c.l.b16 %v690
    %v1194 = vunpack.c.h.b16 %v690
    %v1195 = vunpack.c.l.b16 %v691
    %v1196 = vunpack.c.h.b16 %v691
    %v1197 = vunpack.c.l.b16 %v692
    %v1198 = vunpack.c.h.b16 %v692
    %v1199 = vunpack.c.l.b16 %v693
    %v1200 = vunpack.c.h.b16 %v693
    %v1201 = vunpack.c.l.b16 %v694
    %v1202 = vunpack.c.h.b16 %v694
    %v1203 = vunpack.c.l.b16 %v695
    %v1204 = vunpack.c.h.b16 %v695
    %v1205 = vunpack.c.l.b16 %v696
    %v1206 = vunpack.c.h.b16 %v696
    %v1207 = vunpack.c.l.b16 %v697
    %v1208 = vunpack.c.h.b16 %v697
    %v1209 = vunpack.c.l.b16 %v698
    %v1210 = vunpack.c.h.b16 %v698
    %v1211 = vunpack.c.l.b16 %v699
    %v1212 = vunpack.c.h.b16 %v699
    %v1213 = vunpack.c.l.b16 %v700
    %v1214 = vunpack.c.h.b16 %v700
    %v1215 = vunpack.c.l.b16 %v701
    %v1216 = vunpack.c.h.b16 %v701
    %v1217 = vunpack.c.l.b16 %v702
    %v1218 = vunpack.c.h.b16 %v702
    %v1219 = vunpack.c.l.b16 %v703
    %v1220 = vunpack.c.h.b16 %v703
    %v1221 = vunpack.c.l.b16 %v704
    %v1222 = vunpack.c.h.b16 %v704
    %v1223 = vunpack.c.l.b16 %v705
    %v1224 = vunpack.c.h.b16 %v705
    %v1225 = vunpack.c.l.b16 %v706
    %v1226 = vunpack.c.h.b16 %v706
    %v1227 = vunpack.c.l.b16 %v707
    %v1228 = vunpack.c.h.b16 %v707
    %v1229 = vunpack.c.l.b16 %v708
    %v1230 = vunpack.c.h.b16 %v708
    %v1231 = vunpack.c.l.b16 %v709
    %v1232 = vunpack.c.h.b16 %v709
    %v1233 = vunpack.c.l.b16 %v710
    %v1234 = vunpack.c.h.b16 %v710
    %v1235 = vunpack.c.l.b16 %v711
    %v1236 = vunpack.c.h.b16 %v711
    %v1237 = vunpack.c.l.b16 %v712
    %v1238 = vunpack.c.h.b16 %v712
    %v1239 = vunpack.c.l.b16 %v713
    %v1240 = vunpack.c.h.b16 %v713
    %v1241 = vunpack.c.l.b16 %v714
    %v1242 = vunpack.c.h.b16 %v714
    %v1243 = vunpack.c.l.b16 %v715
    %v1244 = vunpack.c.h.b16 %v715
    %v1245 = vunpack.c.l.b16 %v716
    %v1246 = vunpack.c.h.b16 %v716
    %v1247 = vunpack.c.l.b16 %v717
    %v1248 = vunpack.c.h.b16 %v717
    %v1249 = vunpack.c.l.b16 %v718
    %v1250 = vunpack.c.h.b16 %v718
    %v1251 = vunpack.c.l.b16 %v719
    %v1252 = vunpack.c.h.b16 %v719
    %v1253 = vunpack.c.l.b16 %v720
    %v1254 = vunpack.c.h.b16 %v720
    %v1255 = vunpack.c.l.b16 %v721
    %v1256 = vunpack.c.h.b16 %v721
    %v1257 = vunpack.c.l.b16 %v722
    %v1258 = vunpack.c.h.b16 %v722
    %v1259 = vunpack.c.l.b16 %v723
    %v1260 = vunpack.c.h.b16 %v723
    %v1261 = vunpack.c.l.b16 %v724
    %v1262 = vunpack.c.h.b16 %v724
    %v1263 = vunpack.c.l.b16 %v725
    %v1264 = vunpack.c.h.b16 %v725
    %v1265 = vunpack.c.l.b16 %v726
    %v1266 = vunpack.c.h.b16 %v726
    %v1267 = vunpack.c.l.b16 %v727
    %v1268 = vunpack.c.h.b16 %v727
    %v1269 = vunpack.c.l.b16 %v728
    %v1270 = vunpack.c.h.b16 %v728
    %v1271 = vunpack.c.l.b16 %v729
    %v1272 = vunpack.c.h.b16 %v729
    %v1273 = vunpack.c.l.b16 %v730
    %v1274 = vunpack.c.h.b16 %v730
    %v1275 = vunpack.c.l.b16 %v731
    %v1276 = vunpack.c.h.b16 %v731
    %v1277 = vunpack.c.l.b16 %v732
    %v1278 = vunpack.c.h.b16 %v732
    %v1279 = vunpack.c.l.b16 %v733
    %v1280 = vunpack.c.h.b16 %v733
    %v1281 = vunpack.c.l.b16 %v734
    %v1282 = vunpack.c.h.b16 %v734
    %v1283 = vunpack.c.l.b16 %v735
    %v1284 = vunpack.c.h.b16 %v735
    %v1285 = vunpack.c.l.b16 %v736
    %v1286 = vunpack.c.h.b16 %v736
    %v1287 = vunpack.c.l.b16 %v737
    %v1288 = vunpack.c.h.b16 %v737
    %v1289 = vunpack.c.l.b16 %v738
    %v1290 = vunpack.c.h.b16 %v738
    %v1291 = vunpack.c.l.b16 %v739
    %v1292 = vunpack.c.h.b16 %v739
    %v1293 = vunpack.c.l.b16 %v740
    %v1294 = vunpack.c.h.b16 %v740
    %v1295 = vunpack.c.l.b16 %v741
    %v1296 = vunpack.c.h.b16 %v741
    %v1297 = vunpack.c.l.b16 %v742
    %v1298 = vunpack.c.h.b16 %v742
    %v1299 = vunpack.c.l.b16 %v743
    %v1300 = vunpack.c.h.b16 %v743
    %v1301 = vunpack.c.l.b16 %v744
    %v1302 = vunpack.c.h.b16 %v744
    %v1303 = vunpack.c.l.b16 %v745
    %v1304 = vunpack.c.h.b16 %v745
    %v1305 = vunpack.c.l.b16 %v746
    %v1306 = vunpack.c.h.b16 %v746
    %v1307 = vunpack.c.l.b16 %v747
    %v1308 = vunpack.c.h.b16 %v747
    %v1309 = vunpack.c.l.b16 %v748
    %v1310 = vunpack.c.h.b16 %v748
    %v1311 = vunpack.c.l.b16 %v749
    %v1312 = vunpack.c.h.b16 %v749
    %v1313 = vunpack.c.l.b16 %v750
    %v1314 = vunpack.c.h.b16 %v750
    %v1315 = vunpack.c.l.b16 %v751
    %v1316 = vunpack.c.h.b16 %v751
    %v1317 = vunpack.c.l.b16 %v752
    %v1318 = vunpack.c.h.b16 %v752
    %v1319 = vunpack.c.l.b16 %v753
    %v1320 = vunpack.c.h.b16 %v753
    %v1321 = vunpack.c.l.b16 %v754
    %v1322 = vunpack.c.h.b16 %v754
    %v1323 = vunpack.c.l.b16 %v755
    %v1324 = vunpack.c.h.b16 %v755
    %v1325 = vunpack.c.l.b16 %v756
    %v1326 = vunpack.c.h.b16 %v756
    %v1327 = vunpack.c.l.b16 %v757
    %v1328 = vunpack.c.h.b16 %v757
    %v1329 = vunpack.c.l.b16 %v758
    %v1330 = vunpack.c.h.b16 %v758
    %v1331 = vunpack.c.l.b16 %v759
    %v1332 = vunpack.c.h.b16 %v759
    %v1333 = vunpack.c.l.b16 %v760
    %v1334 = vunpack.c.h.b16 %v760
    %v1335 = vunpack.c.l.b16 %v761
    %v1336 = vunpack.c.h.b16 %v761
    %v1337 = vunpack.c.l.b16 %v762
    %v1338 = vunpack.c.h.b16 %v762
    %v1339 = vunpack.c.l.b16 %v763
    %v1340 = vunpack.c.h.b16 %v763
    %v1341 = vunpack.c.l.b16 %v764
    %v1342 = vunpack.c.h.b16 %v764
    %v1343 = vunpack.c.l.b16 %v765
    %v1344 = vunpack.c.h.b16 %v765
    %v1345 = vunpack.c.l.b16 %v766
    %v1346 = vunpack.c.h.b16 %v766
    %v1347 = vunpack.c.l.b16 %v767
    %v1348 = vunpack.c.h.b16 %v767
    %v1349 = vunpack.c.l.b16 %v768
    %v1350 = vunpack.c.h.b16 %v768
    %v1351 = vunpack.c.l.b16 %v769
    %v1352 = vunpack.c.h.b16 %v769
    %v1353 = vunpack.c.l.b16 %v770
    %v1354 = vunpack.c.h.b16 %v770
    %v1355 = vunpack.c.l.b16 %v771
    %v1356 = vunpack.c.h.b16 %v771
    %v1357 = vunpack.c.l.b16 %v772
    %v1358 = vunpack.c.h.b16 %v772
    %v1359 = vunpack.c.l.b16 %v773
    %v1360 = vunpack.c.h.b16 %v773
    %v1361 = vunpack.c.l.b16 %v774
    %v1362 = vunpack.c.h.b16 %v774
    %v1363 = vunpack.c.l.b16 %v775
    %v1364 = vunpack.c.h.b16 %v775
    %v1365 = vunpack.c.l.b16 %v776
    %v1366 = vunpack.c.h.b16 %v776
    %v1367 = vunpack.c.l.b16 %v777
    %v1368 = vunpack.c.h.b16 %v777
    %v1369 = vunpack.c.l.b16 %v778
    %v1370 = vunpack.c.h.b16 %v778
    %v1371 = vunpack.c.l.b16 %v779
    %v1372 = vunpack.c.h.b16 %v779
    %v1373 = vunpack.c.l.b16 %v780
    %v1374 = vunpack.c.h.b16 %v780
    %v1375 = vunpack.c.l.b16 %v781
    %v1376 = vunpack.c.h.b16 %v781
    %v1377 = vunpack.c.l.b16 %v782
    %v1378 = vunpack.c.h.b16 %v782
    %v1379 = vunpack.c.l.b16 %v783
    %v1380 = vunpack.c.h.b16 %v783
    %v1381 = vunpack.c.l.b16 %v784
    %v1382 = vunpack.c.h.b16 %v784
    %v1383 = vunpack.c.l.b16 %v785
    %v1384 = vunpack.c.h.b16 %v785
    %v1385 = vunpack.c.l.b16 %v786
    %v1386 = vunpack.c.h.b16 %v786
    %v1387 = vunpack.c.l.b16 %v787
    %v1388 = vunpack.c.h.b16 %v787
    %v1389 = vunpack.c.l.b16 %v788
    %v1390 = vunpack.c.h.b16 %v788
    %v1391 = vunpack.c.l.b16 %v789
    %v1392 = vunpack.c.h.b16 %v789
    %v1393 = vunpack.c.l.b16 %v790
    %v1394 = vunpack.c.h.b16 %v790
    %v1395 = vunpack.c.l.b16 %v791
    %v1396 = vunpack.c.h.b16 %v791
    %v1397 = vunpack.c.l.b16 %v792
    %v1398 = vunpack.c.h.b16 %v792
    %v1399 = vunpack.c.l.b16 %v793
    %v1400 = vunpack.c.h.b16 %v793
    %v1401 = vunpack.c.l.b16 %v794
    %v1402 = vunpack.c.h.b16 %v794
    %v1403 = vpack.c.b16 %v1025, %v1019
    %v1404 = vpack.c.b16 %v1026, %v1020
    %v1405 = vpack.c.b16 %v1027, %v1021
    %v1406 = vpack.c.b16 %v1028, %v1022
    %v1407 = vpack.c.b16 %v1029, %v1023
    %v1408 = vpack.c.b16 %v1030, %v1024
    %v1409 = vpack.c.b16 %v1037, %v1031
    %v1410 = vpack.c.b16 %v1038, %v1032
    %v1411 = vpack.c.b16 %v1039, %v1033
    %v1412 = vpack.c.b16 %v1040, %v1034
    %v1413 = vpack.c.b16 %v1041, %v1035
    %v1414 = vpack.c.b16 %v1042, %v1036
    %v1415 = vpack.c.b16 %v1049, %v1043
    %v1416 = vpack.c.b16 %v1050, %v1044
    %v1417 = vpack.c.b16 %v1051, %v1045
    %v1418 = vpack.c.b16 %v1052, %v1046
    %v1419 = vpack.c.b16 %v1053, %v1047
    %v1420 = vpack.c.b16 %v1054, %v1048
    %v1421 = vpack.c.b16 %v1061, %v1055
    %v1422 = vpack.c.b16 %v1062, %v1056
    %v1423 = vpack.c.b16 %v1063, %v1057
    %v1424 = vpack.c.b16 %v1064, %v1058
    %v1425 = vpack.c.b16 %v1065, %v1059
    %v1426 = vpack.c.b16 %v1066, %v1060
    %v1427 = vpack.c.b16 %v1073, %v1067
    %v1428 = vpack.c.b16 %v1074, %v1068
    %v1429 = vpack.c.b16 %v1075, %v1069
    %v1430 = vpack.c.b16 %v1076, %v1070
    %v1431 = vpack.c.b16 %v1077, %v1071
    %v1432 = vpack.c.b16 %v1078, %v1072
    %v1433 = vpack.c.b16 %v1085, %v1079
    %v1434 = vpack.c.b16 %v1086, %v1080
    %v1435 = vpack.c.b16 %v1087, %v1081
    %v1436 = vpack.c.b16 %v1088, %v1082
    %v1437 = vpack.c.b16 %v1089, %v1083
    %v1438 = vpack.c.b16 %v1090, %v1084
    %v1439 = vpack.c.b16 %v1097, %v1091
    %v1440 = vpack.c.b16 %v1098, %v1092
    %v1441 = vpack.c.b16 %v1099, %v1093
    %v1442 = vpack.c.b16 %v1100, %v1094
    %v1443 = vpack.c.b16 %v1101, %v1095
    %v1444 = vpack.c.b16 %v1102, %v1096
    %v1445 = vpack.c.b16 %v1109, %v1103
    %v1446 = vpack.c.b16 %v1110, %v1104
    %v1447 = vpack.c.b16 %v1111, %v1105
    %v1448 = vpack.c.b16 %v1112, %v1106
    %v1449 = vpack.c.b16 %v1113, %v1107
    %v1450 = vpack.c.b16 %v1114, %v1108
    %v1451 = vpack.c.b16 %v1121, %v1115
    %v1452 = vpack.c.b16 %v1122, %v1116
    %v1453 = vpack.c.b16 %v1123, %v1117
    %v1454 = vpack.c.b16 %v1124, %v1118
    %v1455 = vpack.c.b16 %v1125, %v1119
    %v1456 = vpack.c.b16 %v1126, %v1120
    %v1457 = vpack.c.b16 %v1133, %v1127
    %v1458 = vpack.c.b16 %v1134, %v1128
    %v1459 = vpack.c.b16 %v1135, %v1129
    %v1460 = vpack.c.b16 %v1136, %v1130
    %v1461 = vpack.c.b16 %v1137, %v1131
    %v1462 = vpack.c.b16 %v1138, %v1132
    %v1463 = vpack.c.b16 %v1145, %v1139
    %v1464 = vpack.c.b16 %v1146, %v1140
    %v1465 = vpack.c.b16 %v1147, %v1141
    %v1466 = vpack.c.b16 %v1148, %v1142
    %v1467 = vpack.c.b16 %v1149, %v1143
    %v1468 = vpack.c.b16 %v1150, %v1144
    %v1469 = vpack.c.b16 %v1157, %v1151
    %v1470 = vpack.c.b16 %v1158, %v1152
    %v1471 = vpack.c.b16 %v1159, %v1153
    %v1472 = vpack.c.b16 %v1160, %v1154
    %v1473 = vpack.c.b16 %v1161, %v1155
    %v1474 = vpack.c.b16 %v1162, %v1156
    %v1475 = vpack.c.b16 %v1169, %v1163
    %v1476 = vpack.c.b16 %v1170, %v1164
    %v1477 = vpack.c.b16 %v1171, %v1165
    %v1478 = vpack.c.b16 %v1172, %v1166
    %v1479 = vpack.c.b16 %v1173, %v1167
    %v1480 = vpack.c.b16 %v1174, %v1168
    %v1481 = vpack.c.b16 %v1181, %v1175
    %v1482 = vpack.c.b16 %v1182, %v1176
    %v1483 = vpack.c.b16 %v1183, %v1177
    %v1484 = vpack.c.b16 %v1184, %v1178
    %v1485 = vpack.c.b16 %v1185, %v1179
    %v1486 = vpack.c.b16 %v1186, %v1180
    %v1487 = vpack.c.b16 %v1193, %v1187
    %v1488 = vpack.c.b16 %v1194, %v1188
    %v1489 = vpack.c.b16 %v1195, %v1189
    %v1490 = vpack.c.b16 %v1196, %v1190
    %v1491 = vpack.c.b16 %v1197, %v1191
    %v1492 = vpack.c.b16 %v1198, %v1192
    %v1493 = vpack.c.b16 %v1205, %v1199
    %v1494 = vpack.c.b16 %v1206, %v1200
    %v1495 = vpack.c.b16 %v1207, %v1201
    %v1496 = vpack.c.b16 %v1208, %v1202
    %v1497 = vpack.c.b16 %v1209, %v1203
    %v1498 = vpack.c.b16 %v1210, %v1204
    %v1499 = vpack.c.b16 %v1217, %v1211
    %v1500 = vpack.c.b16 %v1218, %v1212
    %v1501 = vpack.c.b16 %v1219, %v1213
    %v1502 = vpack.c.b16 %v1220, %v1214
    %v1503 = vpack.c.b16 %v1221, %v1215
    %v1504 = vpack.c.b16 %v1222, %v1216
    %v1505 = vpack.c.b16 %v1229, %v1223
    %v1506 = vpack.c.b16 %v1230, %v1224
    %v1507 = vpack.c.b16 %v1231, %v1225
    %v1508 = vpack.c.b16 %v1232, %v1226
    %v1509 = vpack.c.b16 %v1233, %v1227
    %v1510 = vpack.c.b16 %v1234, %v1228
    %v1511 = vpack.c.b16 %v1241, %v1235
    %v1512 = vpack.c.b16 %v1242, %v1236
    %v1513 = vpack.c.b16 %v1243, %v1237
    %v1514 = vpack.c.b16 %v1244, %v1238
    %v1515 = vpack.c.b16 %v1245, %v1239
    %v1516 = vpack.c.b16 %v1246, %v1240
    %v1517 = vpack.c.b16 %v1253, %v1247
    %v1518 = vpack.c.b16 %v1254, %v1248
    %v1519 = vpack.c.b16 %v1255, %v1249
    %v1520 = vpack.c.b16 %v1256, %v1250
    %v1521 = vpack.c.b16 %v1257, %v1251
    %v1522 = vpack.c.b16 %v1258, %v1252
    %v1523 = vpack.c.b16 %v1265, %v1259
    %v1524 = vpack.c.b16 %v1266, %v1260
    %v1525 = vpack.c.b16 %v1267, %v1261
    %v1526 = vpack.c.b16 %v1268, %v1262
    %v1527 = vpack.c.b16 %v1269, %v1263
    %v1528 = vpack.c.b16 %v1270, %v1264
    %v1529 = vpack.c.b16 %v1277, %v1271
    %v1530 = vpack.c.b16 %v1278, %v1272
    %v1531 = vpack.c.b16 %v1279, %v1273
    %v1532 = vpack.c.b16 %v1280, %v1274
    %v1533 = vpack.c.b16 %v1281, %v1275
    %v1534 = vpack.c.b16 %v1282, %v1276
    %v1535 = vpack.c.b16 %v1289, %v1283
    %v1536 = vpack.c.b16 %v1290, %v1284
    %v1537 = vpack.c.b16 %v1291, %v1285
    %v1538 = vpack.c.b16 %v1292, %v1286
    %v1539 = vpack.c.b16 %v1293, %v1287
    %v1540 = vpack.c.b16 %v1294, %v1288
    %v1541 = vpack.c.b16 %v1301, %v1295
    %v1542 = vpack.c.b16 %v1302, %v1296
    %v1543 = vpack.c.b16 %v1303, %v1297
    %v1544 = vpack.c.b16 %v1304, %v1298
    %v1545 = vpack.c.b16 %v1305, %v1299
    %v1546 = vpack.c.b16 %v1306, %v1300
    %v1547 = vpack.c.b16 %v1313, %v1307
    %v1548 = vpack.c.b16 %v1314, %v1308
    %v1549 = vpack.c.b16 %v1315, %v1309
    %v1550 = vpack.c.b16 %v1316, %v1310
    %v1551 = vpack.c.b16 %v1317, %v1311
    %v1552 = vpack.c.b16 %v1318, %v1312
    %v1553 = vpack.c.b16 %v1325, %v1319
    %v1554 = vpack.c.b16 %v1326, %v1320
    %v1555 = vpack.c.b16 %v1327, %v1321
    %v1556 = vpack.c.b16 %v1328, %v1322
    %v1557 = vpack.c.b16 %v1329, %v1323
    %v1558 = vpack.c.b16 %v1330, %v1324
    %v1559 = vpack.c.b16 %v1337, %v1331
    %v1560 = vpack.c.b16 %v1338, %v1332
    %v1561 = vpack.c.b16 %v1339, %v1333
    %v1562 = vpack.c.b16 %v1340, %v1334
    %v1563 = vpack.c.b16 %v1341, %v1335
    %v1564 = vpack.c.b16 %v1342, %v1336
    %v1565 = vpack.c.b16 %v1349, %v1343
    %v1566 = vpack.c.b16 %v1350, %v1344
    %v1567 = vpack.c.b16 %v1351, %v1345
    %v1568 = vpack.c.b16 %v1352, %v1346
    %v1569 = vpack.c.b16 %v1353, %v1347
    %v1570 = vpack.c.b16 %v1354, %v1348
    %v1571 = vpack.c.b16 %v1361, %v1355
    %v1572 = vpack.c.b16 %v1362, %v1356
    %v1573 = vpack.c.b16 %v1363, %v1357
    %v1574 = vpack.c.b16 %v1364, %v1358
    %v1575 = vpack.c.b16 %v1365, %v1359
    %v1576 = vpack.c.b16 %v1366, %v1360
    %v1577 = vpack.c.b16 %v1373, %v1367
    %v1578 = vpack.c.b16 %v1374, %v1368
    %v1579 = vpack.c.b16 %v1375, %v1369
    %v1580 = vpack.c.b16 %v1376, %v1370
    %v1581 = vpack.c.b16 %v1377, %v1371
    %v1582 = vpack.c.b16 %v1378, %v1372
    %v1583 = vpack.c.b16 %v1385, %v1379
    %v1584 = vpack.c.b16 %v1386, %v1380
    %v1585 = vpack.c.b16 %v1387, %v1381
    %v1586 = vpack.c.b16 %v1388, %v1382
    %v1587 = vpack.c.b16 %v1389, %v1383
    %v1588 = vpack.c.b16 %v1390, %v1384
    %v1589 = vpack.c.b16 %v1397, %v1391
    %v1590 = vpack.c.b16 %v1398, %v1392
    %v1591 = vpack.c.b16 %v1399, %v1393
    %v1592 = vpack.c.b16 %v1400, %v1394
    %v1593 = vpack.c.b16 %v1401, %v1395
    %v1594 = vpack.c.b16 %v1402, %v1396
    %1787 = vmatprep.subr.bf16.mxu0 %v1446
    %1788 = vmatpush1.bf16.msra.mxu0 %v1445
    %1789 = vmatprep.subr.bf16.mxu0 %v1440
    %1790 = vmatpush1.bf16.msra.mxu0 %v1439
    %1791 = vmatprep.subr.bf16.mxu0 %v1434
    %1792 = vmatpush1.bf16.msra.mxu0 %v1433
    %1793 = vmatprep.subr.bf16.mxu0 %v1428
    %1794 = vmatpush1.bf16.msra.mxu0 %v1427
    %1795 = vmatprep.subr.bf16.mxu0 %v1422
    %1796 = vmatpush1.bf16.msra.mxu0 %v1421
    %1797 = vmatprep.subr.bf16.mxu0 %v1416
    %1798 = vmatpush1.bf16.msra.mxu0 %v1415
    %1799 = vmatprep.subr.bf16.mxu0 %v1410
    %1800 = vmatpush1.bf16.msra.mxu0 %v1409
    %1801 = vmatprep.subr.bf16.mxu0 %v1404
    %1802 = vmatpush1.bf16.msra.mxu0 %v1403
    %1803 = vmatprep.subr.bf16.mxu0 %v1494
    %1804 = vmatpush2.bf16.msra.mxu0 %v1493
    %1805 = vmatprep.subr.bf16.mxu0 %v1488
    %1806 = vmatpush2.bf16.msra.mxu0 %v1487
    %1807 = vmatprep.subr.bf16.mxu0 %v1482
    %1808 = vmatpush2.bf16.msra.mxu0 %v1481
    %1809 = vmatprep.subr.bf16.mxu0 %v1476
    %1810 = vmatpush2.bf16.msra.mxu0 %v1475
    %1811 = vmatprep.subr.bf16.mxu0 %v1470
    %1812 = vmatpush2.bf16.msra.mxu0 %v1469
    %1813 = vmatprep.subr.bf16.mxu0 %v1464
    %1814 = vmatpush2.bf16.msra.mxu0 %v1463
    %1815 = vmatprep.subr.bf16.mxu0 %v1458
    %1816 = vmatpush2.bf16.msra.mxu0 %v1457
    %1817 = vmatprep.subr.bf16.mxu0 %v1452
    %1818 = vmatpush2.bf16.msra.mxu0 %v1451
    %1819 = vmatprep.mubr.bf16.mxu0 %v600
    %1820 = vmatmul.mubr.bf16.gmra.mxu0 %v599
    %v1821 = vpop.f32.mrf.mxu0
    %v1822 = vadd.f32 %v800, %v1821
    %v1823 = vpop.f32.mrf.mxu0
    %v1824 = vadd.f32 %v804, %v1823
    %v1825 = vpop.f32.mrf.mxu0
    %v1826 = vpop.f32.mrf.mxu0
    %1827 = vdwg.mxu0
    %1828 = vmatprep.subr.bf16.mxu0 %v1542
    %1829 = vmatpush1.bf16.msra.mxu0 %v1541
    %1830 = vmatprep.subr.bf16.mxu0 %v1536
    %1831 = vmatpush1.bf16.msra.mxu0 %v1535
    %1832 = vmatprep.subr.bf16.mxu0 %v1530
    %1833 = vmatpush1.bf16.msra.mxu0 %v1529
    %1834 = vmatprep.subr.bf16.mxu0 %v1524
    %1835 = vmatpush1.bf16.msra.mxu0 %v1523
    %1836 = vmatprep.subr.bf16.mxu0 %v1518
    %1837 = vmatpush1.bf16.msra.mxu0 %v1517
    %1838 = vmatprep.subr.bf16.mxu0 %v1512
    %1839 = vmatpush1.bf16.msra.mxu0 %v1511
    %1840 = vmatprep.subr.bf16.mxu0 %v1506
    %1841 = vmatpush1.bf16.msra.mxu0 %v1505
    %1842 = vmatprep.subr.bf16.mxu0 %v1500
    %1843 = vmatpush1.bf16.msra.mxu0 %v1499
    %1844 = vmatprep.subr.bf16.mxu0 %v1590
    %1845 = vmatpush2.bf16.msra.mxu0 %v1589
    %1846 = vmatprep.subr.bf16.mxu0 %v1584
    %1847 = vmatpush2.bf16.msra.mxu0 %v1583
    %1848 = vmatprep.subr.bf16.mxu0 %v1578
    %1849 = vmatpush2.bf16.msra.mxu0 %v1577
    %1850 = vmatprep.subr.bf16.mxu0 %v1572
    %1851 = vmatpush2.bf16.msra.mxu0 %v1571
    %1852 = vmatprep.subr.bf16.mxu0 %v1566
    %1853 = vmatpush2.bf16.msra.mxu0 %v1565
    %1854 = vmatprep.subr.bf16.mxu0 %v1560
    %1855 = vmatpush2.bf16.msra.mxu0 %v1559
    %1856 = vmatprep.subr.bf16.mxu0 %v1554
    %1857 = vmatpush2.bf16.msra.mxu0 %v1553
    %1858 = vmatprep.subr.bf16.mxu0 %v1548
    %1859 = vmatpush2.bf16.msra.mxu0 %v1547
    %1860 = vmatprep.mubr.bf16.mxu0 %v602
    %1861 = vmatmul.mubr.bf16.gmra.mxu0 %v601
    %v1862 = vpop.f32.mrf.mxu0
    %v1863 = vadd.f32 %v1822, %v1862
    %v1864 = vpop.f32.mrf.mxu0
    %v1865 = vadd.f32 %v1824, %v1864
    %v1866 = vpop.f32.mrf.mxu0
    %v1867 = vpop.f32.mrf.mxu0
    %1868 = vdwg.mxu0
    %1869 = vmatprep.subr.bf16.mxu0 %v1448
    %1870 = vmatpush1.bf16.msra.mxu0 %v1447
    %1871 = vmatprep.subr.bf16.mxu0 %v1442
    %1872 = vmatpush1.bf16.msra.mxu0 %v1441
    %1873 = vmatprep.subr.bf16.mxu0 %v1436
    %1874 = vmatpush1.bf16.msra.mxu0 %v1435
    %1875 = vmatprep.subr.bf16.mxu0 %v1430
    %1876 = vmatpush1.bf16.msra.mxu0 %v1429
    %1877 = vmatprep.subr.bf16.mxu0 %v1424
    %1878 = vmatpush1.bf16.msra.mxu0 %v1423
    %1879 = vmatprep.subr.bf16.mxu0 %v1418
    %1880 = vmatpush1.bf16.msra.mxu0 %v1417
    %1881 = vmatprep.subr.bf16.mxu0 %v1412
    %1882 = vmatpush1.bf16.msra.mxu0 %v1411
    %1883 = vmatprep.subr.bf16.mxu0 %v1406
    %1884 = vmatpush1.bf16.msra.mxu0 %v1405
    %1885 = vmatprep.subr.bf16.mxu0 %v1496
    %1886 = vmatpush2.bf16.msra.mxu0 %v1495
    %1887 = vmatprep.subr.bf16.mxu0 %v1490
    %1888 = vmatpush2.bf16.msra.mxu0 %v1489
    %1889 = vmatprep.subr.bf16.mxu0 %v1484
    %1890 = vmatpush2.bf16.msra.mxu0 %v1483
    %1891 = vmatprep.subr.bf16.mxu0 %v1478
    %1892 = vmatpush2.bf16.msra.mxu0 %v1477
    %1893 = vmatprep.subr.bf16.mxu0 %v1472
    %1894 = vmatpush2.bf16.msra.mxu0 %v1471
    %1895 = vmatprep.subr.bf16.mxu0 %v1466
    %1896 = vmatpush2.bf16.msra.mxu0 %v1465
    %1897 = vmatprep.subr.bf16.mxu0 %v1460
    %1898 = vmatpush2.bf16.msra.mxu0 %v1459
    %1899 = vmatprep.subr.bf16.mxu0 %v1454
    %1900 = vmatpush2.bf16.msra.mxu0 %v1453
    %1901 = vmatprep.mubr.bf16.mxu0 %v600
    %1902 = vmatmul.mubr.bf16.gmra.mxu0 %v599
    %v1903 = vpop.f32.mrf.mxu0
    %v1904 = vadd.f32 %v808, %v1903
    %v1905 = vpop.f32.mrf.mxu0
    %v1906 = vadd.f32 %v812, %v1905
    %v1907 = vpop.f32.mrf.mxu0
    %v1908 = vpop.f32.mrf.mxu0
    %1909 = vdwg.mxu0
    %1910 = vmatprep.subr.bf16.mxu0 %v1544
    %1911 = vmatpush1.bf16.msra.mxu0 %v1543
    %1912 = vmatprep.subr.bf16.mxu0 %v1538
    %1913 = vmatpush1.bf16.msra.mxu0 %v1537
    %1914 = vmatprep.subr.bf16.mxu0 %v1532
    %1915 = vmatpush1.bf16.msra.mxu0 %v1531
    %1916 = vmatprep.subr.bf16.mxu0 %v1526
    %1917 = vmatpush1.bf16.msra.mxu0 %v1525
    %1918 = vmatprep.subr.bf16.mxu0 %v1520
    %1919 = vmatpush1.bf16.msra.mxu0 %v1519
    %1920 = vmatprep.subr.bf16.mxu0 %v1514
    %1921 = vmatpush1.bf16.msra.mxu0 %v1513
    %1922 = vmatprep.subr.bf16.mxu0 %v1508
    %1923 = vmatpush1.bf16.msra.mxu0 %v1507
    %1924 = vmatprep.subr.bf16.mxu0 %v1502
    %1925 = vmatpush1.bf16.msra.mxu0 %v1501
    %1926 = vmatprep.subr.bf16.mxu0 %v1592
    %1927 = vmatpush2.bf16.msra.mxu0 %v1591
    %1928 = vmatprep.subr.bf16.mxu0 %v1586
    %1929 = vmatpush2.bf16.msra.mxu0 %v1585
    %1930 = vmatprep.subr.bf16.mxu0 %v1580
    %1931 = vmatpush2.bf16.msra.mxu0 %v1579
    %1932 = vmatprep.subr.bf16.mxu0 %v1574
    %1933 = vmatpush2.bf16.msra.mxu0 %v1573
    %1934 = vmatprep.subr.bf16.mxu0 %v1568
    %1935 = vmatpush2.bf16.msra.mxu0 %v1567
    %1936 = vmatprep.subr.bf16.mxu0 %v1562
    %1937 = vmatpush2.bf16.msra.mxu0 %v1561
    %1938 = vmatprep.subr.bf16.mxu0 %v1556
    %1939 = vmatpush2.bf16.msra.mxu0 %v1555
    %1940 = vmatprep.subr.bf16.mxu0 %v1550
    %1941 = vmatpush2.bf16.msra.mxu0 %v1549
    %1942 = vmatprep.mubr.bf16.mxu0 %v602
    %1943 = vmatmul.mubr.bf16.gmra.mxu0 %v601
    %v1944 = vpop.f32.mrf.mxu0
    %v1945 = vadd.f32 %v1904, %v1944
    %v1946 = vpop.f32.mrf.mxu0
    %v1947 = vadd.f32 %v1906, %v1946
    %v1948 = vpop.f32.mrf.mxu0
    %v1949 = vpop.f32.mrf.mxu0
    %1950 = vdwg.mxu0
    %1951 = vmatprep.subr.bf16.mxu0 %v1450
    %1952 = vmatpush1.bf16.msra.mxu0 %v1449
    %1953 = vmatprep.subr.bf16.mxu0 %v1444
    %1954 = vmatpush1.bf16.msra.mxu0 %v1443
    %1955 = vmatprep.subr.bf16.mxu0 %v1438
    %1956 = vmatpush1.bf16.msra.mxu0 %v1437
    %1957 = vmatprep.subr.bf16.mxu0 %v1432
    %1958 = vmatpush1.bf16.msra.mxu0 %v1431
    %1959 = vmatprep.subr.bf16.mxu0 %v1426
    %1960 = vmatpush1.bf16.msra.mxu0 %v1425
    %1961 = vmatprep.subr.bf16.mxu0 %v1420
    %1962 = vmatpush1.bf16.msra.mxu0 %v1419
    %1963 = vmatprep.subr.bf16.mxu0 %v1414
    %1964 = vmatpush1.bf16.msra.mxu0 %v1413
    %1965 = vmatprep.subr.bf16.mxu0 %v1408
    %1966 = vmatpush1.bf16.msra.mxu0 %v1407
    %1967 = vmatprep.subr.bf16.mxu0 %v1498
    %1968 = vmatpush2.bf16.msra.mxu0 %v1497
    %1969 = vmatprep.subr.bf16.mxu0 %v1492
    %1970 = vmatpush2.bf16.msra.mxu0 %v1491
    %1971 = vmatprep.subr.bf16.mxu0 %v1486
    %1972 = vmatpush2.bf16.msra.mxu0 %v1485
    %1973 = vmatprep.subr.bf16.mxu0 %v1480
    %1974 = vmatpush2.bf16.msra.mxu0 %v1479
    %1975 = vmatprep.subr.bf16.mxu0 %v1474
    %1976 = vmatpush2.bf16.msra.mxu0 %v1473
    %1977 = vmatprep.subr.bf16.mxu0 %v1468
    %1978 = vmatpush2.bf16.msra.mxu0 %v1467
    %1979 = vmatprep.subr.bf16.mxu0 %v1462
    %1980 = vmatpush2.bf16.msra.mxu0 %v1461
    %1981 = vmatprep.subr.bf16.mxu0 %v1456
    %1982 = vmatpush2.bf16.msra.mxu0 %v1455
    %1983 = vmatprep.mubr.bf16.mxu0 %v600
    %1984 = vmatmul.mubr.bf16.gmra.mxu0 %v599
    %v1985 = vpop.f32.mrf.mxu0
    %v1986 = vadd.f32 %v816, %v1985
    %v1987 = vpop.f32.mrf.mxu0
    %v1988 = vadd.f32 %v820, %v1987
    %v1989 = vpop.f32.mrf.mxu0
    %v1990 = vpop.f32.mrf.mxu0
    %1991 = vdwg.mxu0
    %1992 = vmatprep.subr.bf16.mxu0 %v1546
    %1993 = vmatpush1.bf16.msra.mxu0 %v1545
    %1994 = vmatprep.subr.bf16.mxu0 %v1540
    %1995 = vmatpush1.bf16.msra.mxu0 %v1539
    %1996 = vmatprep.subr.bf16.mxu0 %v1534
    %1997 = vmatpush1.bf16.msra.mxu0 %v1533
    %1998 = vmatprep.subr.bf16.mxu0 %v1528
    %1999 = vmatpush1.bf16.msra.mxu0 %v1527
    %2000 = vmatprep.subr.bf16.mxu0 %v1522
    %2001 = vmatpush1.bf16.msra.mxu0 %v1521
    %2002 = vmatprep.subr.bf16.mxu0 %v1516
    %2003 = vmatpush1.bf16.msra.mxu0 %v1515
    %2004 = vmatprep.subr.bf16.mxu0 %v1510
    %2005 = vmatpush1.bf16.msra.mxu0 %v1509
    %2006 = vmatprep.subr.bf16.mxu0 %v1504
    %2007 = vmatpush1.bf16.msra.mxu0 %v1503
    %2008 = vmatprep.subr.bf16.mxu0 %v1594
    %2009 = vmatpush2.bf16.msra.mxu0 %v1593
    %2010 = vmatprep.subr.bf16.mxu0 %v1588
    %2011 = vmatpush2.bf16.msra.mxu0 %v1587
    %2012 = vmatprep.subr.bf16.mxu0 %v1582
    %2013 = vmatpush2.bf16.msra.mxu0 %v1581
    %2014 = vmatprep.subr.bf16.mxu0 %v1576
    %2015 = vmatpush2.bf16.msra.mxu0 %v1575
    %2016 = vmatprep.subr.bf16.mxu0 %v1570
    %2017 = vmatpush2.bf16.msra.mxu0 %v1569
    %2018 = vmatprep.subr.bf16.mxu0 %v1564
    %2019 = vmatpush2.bf16.msra.mxu0 %v1563
    %2020 = vmatprep.subr.bf16.mxu0 %v1558
    %2021 = vmatpush2.bf16.msra.mxu0 %v1557
    %2022 = vmatprep.subr.bf16.mxu0 %v1552
    %2023 = vmatpush2.bf16.msra.mxu0 %v1551
    %2024 = vmatprep.mubr.bf16.mxu0 %v602
    %2025 = vmatmul.mubr.bf16.gmra.mxu0 %v601
    %v2026 = vpop.f32.mrf.mxu0
    %v2027 = vadd.f32 %v1986, %v2026
    %v2028 = vpop.f32.mrf.mxu0
    %v2029 = vadd.f32 %v1988, %v2028
    %v2030 = vpop.f32.mrf.mxu0
    %v2031 = vpop.f32.mrf.mxu0
    %2032 = vdwg.mxu0
    %v2033 = vmax.f32 %v1863, 0.0
    %v2034 = vmax.f32 %v1865, 0.0
    %v2035 = vmax.f32 %v1945, 0.0
    %v2036 = vmax.f32 %v1947, 0.0
    %v2037 = vmax.f32 %v2027, 0.0
    %v2038 = vmax.f32 %v2029, 0.0
    %v2039 = vpack.c.bf16 %v2033, %v2033
    %v2040 = vpack.c.bf16 %v2034, %v2034
    %v2041 = vpack.c.bf16 %v2035, %v2035
    %v2042 = vpack.c.bf16 %v2036, %v2036
    %v2043 = vpack.c.bf16 %v2037, %v2037
    %v2044 = vpack.c.bf16 %v2038, %v2038
    %v2045 = vld [vmem:[#allocation10] sm:$0xf]
    %v2046 = vld [vmem:[#allocation10 + $0x4] sm:$0xf]
    %v2047 = vld [vmem:[#allocation10 + $0x8] sm:$0xf]
    %v2048 = vld [vmem:[#allocation10 + $0xc] sm:$0xf]
    %v2049 = vld [vmem:[#allocation10 + $0x10] sm:$0xf]
    %v2050 = vld [vmem:[#allocation10 + $0x14] sm:$0xf]
    %v2051 = vld [vmem:[#allocation10 + $0x18] sm:$0xf]
    %v2052 = vld [vmem:[#allocation10 + $0x1c] sm:$0xf]
    %v2053 = vld [vmem:[#allocation10 + $0x20] sm:$0xf]
    %v2054 = vld [vmem:[#allocation10 + $0x24] sm:$0xf]
    %v2055 = vld [vmem:[#allocation10 + $0x28] sm:$0xf]
    %v2056 = vld [vmem:[#allocation10 + $0x2c] sm:$0xf]
    %v2057 = vld [vmem:[#allocation10 + $0x30] sm:$0xf]
    %v2058 = vld [vmem:[#allocation10 + $0x34] sm:$0xf]
    %v2059 = vld [vmem:[#allocation10 + $0x38] sm:$0xf]
    %v2060 = vld [vmem:[#allocation10 + $0x3c] sm:$0xf]
    %v2061 = vld [vmem:[#allocation10 + $0x40] sm:$0xf]
    %v2062 = vld [vmem:[#allocation10 + $0x44] sm:$0xf]
    %v2063 = vld [vmem:[#allocation10 + $0x48] sm:$0xf]
    %v2064 = vld [vmem:[#allocation10 + $0x4c] sm:$0xf]
    %v2065 = vld [vmem:[#allocation10 + $0x50] sm:$0xf]
    %v2066 = vld [vmem:[#allocation10 + $0x54] sm:$0xf]
    %v2067 = vld [vmem:[#allocation10 + $0x58] sm:$0xf]
    %v2068 = vld [vmem:[#allocation10 + $0x5c] sm:$0xf]
    %v2069 = vld [vmem:[#allocation10 + $0x60] sm:$0xf]
    %v2070 = vld [vmem:[#allocation10 + $0x64] sm:$0xf]
    %v2071 = vld [vmem:[#allocation10 + $0x68] sm:$0xf]
    %v2072 = vld [vmem:[#allocation10 + $0x6c] sm:$0xf]
    %v2073 = vld [vmem:[#allocation10 + $0x70] sm:$0xf]
    %v2074 = vld [vmem:[#allocation10 + $0x74] sm:$0xf]
    %v2075 = vld [vmem:[#allocation10 + $0x78] sm:$0xf]
    %v2076 = vld [vmem:[#allocation10 + $0x7c] sm:$0xf]
    %v2077 = vld [vmem:[#allocation10 + $0x80] sm:$0xf]
    %v2078 = vld [vmem:[#allocation10 + $0x84] sm:$0xf]
    %v2079 = vld [vmem:[#allocation10 + $0x88] sm:$0xf]
    %v2080 = vld [vmem:[#allocation10 + $0x8c] sm:$0xf]
    %v2081 = vld [vmem:[#allocation10 + $0x90] sm:$0xf]
    %v2082 = vld [vmem:[#allocation10 + $0x94] sm:$0xf]
    %v2083 = vld [vmem:[#allocation10 + $0x98] sm:$0xf]
    %v2084 = vld [vmem:[#allocation10 + $0x9c] sm:$0xf]
    %v2085 = vld [vmem:[#allocation10 + $0xa0] sm:$0xf]
    %v2086 = vld [vmem:[#allocation10 + $0xa4] sm:$0xf]
    %v2087 = vld [vmem:[#allocation10 + $0xa8] sm:$0xf]
    %v2088 = vld [vmem:[#allocation10 + $0xac] sm:$0xf]
    %v2089 = vld [vmem:[#allocation10 + $0xb0] sm:$0xf]
    %v2090 = vld [vmem:[#allocation10 + $0xb4] sm:$0xf]
    %v2091 = vld [vmem:[#allocation10 + $0xb8] sm:$0xf]
    %v2092 = vld [vmem:[#allocation10 + $0xbc] sm:$0xf]
    %v2093 = vld [vmem:[#allocation10 + $0xc0] sm:$0xf]
    %v2094 = vld [vmem:[#allocation10 + $0xc4] sm:$0xf]
    %v2095 = vld [vmem:[#allocation10 + $0xc8] sm:$0xf]
    %v2096 = vld [vmem:[#allocation10 + $0xcc] sm:$0xf]
    %v2097 = vld [vmem:[#allocation10 + $0xd0] sm:$0xf]
    %v2098 = vld [vmem:[#allocation10 + $0xd4] sm:$0xf]
    %v2099 = vld [vmem:[#allocation10 + $0xd8] sm:$0xf]
    %v2100 = vld [vmem:[#allocation10 + $0xdc] sm:$0xf]
    %v2101 = vld [vmem:[#allocation10 + $0xe0] sm:$0xf]
    %v2102 = vld [vmem:[#allocation10 + $0xe4] sm:$0xf]
    %v2103 = vld [vmem:[#allocation10 + $0xe8] sm:$0xf]
    %v2104 = vld [vmem:[#allocation10 + $0xec] sm:$0xf]
    %v2105 = vld [vmem:[#allocation10 + $0xf0] sm:$0xf]
    %v2106 = vld [vmem:[#allocation10 + $0xf4] sm:$0xf]
    %v2107 = vld [vmem:[#allocation10 + $0xf8] sm:$0xf]
    %v2108 = vld [vmem:[#allocation10 + $0xfc] sm:$0xf]
    %v2109 = vld [vmem:[#allocation10 + $0x100] sm:$0xf]
    %v2110 = vld [vmem:[#allocation10 + $0x104] sm:$0xf]
    %v2111 = vld [vmem:[#allocation10 + $0x108] sm:$0xf]
    %v2112 = vld [vmem:[#allocation10 + $0x10c] sm:$0xf]
    %v2113 = vld [vmem:[#allocation10 + $0x110] sm:$0xf]
    %v2114 = vld [vmem:[#allocation10 + $0x114] sm:$0xf]
    %v2115 = vld [vmem:[#allocation10 + $0x118] sm:$0xf]
    %v2116 = vld [vmem:[#allocation10 + $0x11c] sm:$0xf]
    %v2117 = vld [vmem:[#allocation10 + $0x120] sm:$0xf]
    %v2118 = vld [vmem:[#allocation10 + $0x124] sm:$0xf]
    %v2119 = vld [vmem:[#allocation10 + $0x128] sm:$0xf]
    %v2120 = vld [vmem:[#allocation10 + $0x12c] sm:$0xf]
    %v2121 = vld [vmem:[#allocation10 + $0x130] sm:$0xf]
    %v2122 = vld [vmem:[#allocation10 + $0x134] sm:$0xf]
    %v2123 = vld [vmem:[#allocation10 + $0x138] sm:$0xf]
    %v2124 = vld [vmem:[#allocation10 + $0x13c] sm:$0xf]
    %v2125 = vld [vmem:[#allocation10 + $0x140] sm:$0xf]
    %v2126 = vld [vmem:[#allocation10 + $0x144] sm:$0xf]
    %v2127 = vld [vmem:[#allocation10 + $0x148] sm:$0xf]
    %v2128 = vld [vmem:[#allocation10 + $0x14c] sm:$0xf]
    %v2129 = vld [vmem:[#allocation10 + $0x150] sm:$0xf]
    %v2130 = vld [vmem:[#allocation10 + $0x154] sm:$0xf]
    %v2131 = vld [vmem:[#allocation10 + $0x158] sm:$0xf]
    %v2132 = vld [vmem:[#allocation10 + $0x15c] sm:$0xf]
    %v2133 = vld [vmem:[#allocation10 + $0x160] sm:$0xf]
    %v2134 = vld [vmem:[#allocation10 + $0x164] sm:$0xf]
    %v2135 = vld [vmem:[#allocation10 + $0x168] sm:$0xf]
    %v2136 = vld [vmem:[#allocation10 + $0x16c] sm:$0xf]
    %v2137 = vld [vmem:[#allocation10 + $0x170] sm:$0xf]
    %v2138 = vld [vmem:[#allocation10 + $0x174] sm:$0xf]
    %v2139 = vld [vmem:[#allocation10 + $0x178] sm:$0xf]
    %v2140 = vld [vmem:[#allocation10 + $0x17c] sm:$0xf]
    %v2141 = vld [vmem:[%s6] sm:$0x1]
    %v2143 = vlaneseq
    %v2144 = vshrl.u32 %v2143, 7
    %v2145 = vsub.s32 0, %v2144
    %v2146 = vrot.slane %v2141, %v2145
    %v2244 = vunpack.c.l.b16 %v2045
    %v2245 = vunpack.c.l.b16 %v2046
    %v2246 = vunpack.c.l.b16 %v2047
    %v2247 = vunpack.c.l.b16 %v2048
    %v2248 = vunpack.c.l.b16 %v2049
    %v2249 = vunpack.c.l.b16 %v2050
    %v2250 = vunpack.c.l.b16 %v2051
    %v2251 = vunpack.c.l.b16 %v2052
    %v2252 = vunpack.c.l.b16 %v2053
    %v2253 = vunpack.c.l.b16 %v2054
    %v2254 = vunpack.c.l.b16 %v2055
    %v2255 = vunpack.c.l.b16 %v2056
    %v2256 = vunpack.c.l.b16 %v2057
    %v2257 = vunpack.c.l.b16 %v2058
    %v2258 = vunpack.c.l.b16 %v2059
    %v2259 = vunpack.c.l.b16 %v2060
    %v2260 = vunpack.c.l.b16 %v2061
    %v2261 = vunpack.c.l.b16 %v2062
    %v2262 = vunpack.c.l.b16 %v2063
    %v2263 = vunpack.c.l.b16 %v2064
    %v2264 = vunpack.c.l.b16 %v2065
    %v2265 = vunpack.c.l.b16 %v2066
    %v2266 = vunpack.c.l.b16 %v2067
    %v2267 = vunpack.c.l.b16 %v2068
    %v2268 = vunpack.c.l.b16 %v2069
    %v2269 = vunpack.c.l.b16 %v2070
    %v2270 = vunpack.c.l.b16 %v2071
    %v2271 = vunpack.c.l.b16 %v2072
    %v2272 = vunpack.c.l.b16 %v2073
    %v2273 = vunpack.c.l.b16 %v2074
    %v2274 = vunpack.c.l.b16 %v2075
    %v2275 = vunpack.c.l.b16 %v2076
    %v2276 = vunpack.c.l.b16 %v2077
    %v2277 = vunpack.c.l.b16 %v2078
    %v2278 = vunpack.c.l.b16 %v2079
    %v2279 = vunpack.c.l.b16 %v2080
    %v2280 = vunpack.c.l.b16 %v2081
    %v2281 = vunpack.c.l.b16 %v2082
    %v2282 = vunpack.c.l.b16 %v2083
    %v2283 = vunpack.c.l.b16 %v2084
    %v2284 = vunpack.c.l.b16 %v2085
    %v2285 = vunpack.c.l.b16 %v2086
    %v2286 = vunpack.c.l.b16 %v2087
    %v2287 = vunpack.c.l.b16 %v2088
    %v2288 = vunpack.c.l.b16 %v2089
    %v2289 = vunpack.c.l.b16 %v2090
    %v2290 = vunpack.c.l.b16 %v2091
    %v2291 = vunpack.c.l.b16 %v2092
    %v2292 = vunpack.c.l.b16 %v2093
    %v2293 = vunpack.c.l.b16 %v2094
    %v2294 = vunpack.c.l.b16 %v2095
    %v2295 = vunpack.c.l.b16 %v2096
    %v2296 = vunpack.c.l.b16 %v2097
    %v2297 = vunpack.c.l.b16 %v2098
    %v2298 = vunpack.c.l.b16 %v2099
    %v2299 = vunpack.c.l.b16 %v2100
    %v2300 = vunpack.c.l.b16 %v2101
    %v2301 = vunpack.c.l.b16 %v2102
    %v2302 = vunpack.c.l.b16 %v2103
    %v2303 = vunpack.c.l.b16 %v2104
    %v2304 = vunpack.c.l.b16 %v2105
    %v2305 = vunpack.c.l.b16 %v2106
    %v2306 = vunpack.c.l.b16 %v2107
    %v2307 = vunpack.c.l.b16 %v2108
    %v2308 = vunpack.c.l.b16 %v2109
    %v2309 = vunpack.c.l.b16 %v2110
    %v2310 = vunpack.c.l.b16 %v2111
    %v2311 = vunpack.c.l.b16 %v2112
    %v2312 = vunpack.c.l.b16 %v2113
    %v2313 = vunpack.c.l.b16 %v2114
    %v2314 = vunpack.c.l.b16 %v2115
    %v2315 = vunpack.c.l.b16 %v2116
    %v2316 = vunpack.c.l.b16 %v2117
    %v2317 = vunpack.c.l.b16 %v2118
    %v2318 = vunpack.c.l.b16 %v2119
    %v2319 = vunpack.c.l.b16 %v2120
    %v2320 = vunpack.c.l.b16 %v2121
    %v2321 = vunpack.c.l.b16 %v2122
    %v2322 = vunpack.c.l.b16 %v2123
    %v2323 = vunpack.c.l.b16 %v2124
    %v2324 = vunpack.c.l.b16 %v2125
    %v2325 = vunpack.c.l.b16 %v2126
    %v2326 = vunpack.c.l.b16 %v2127
    %v2327 = vunpack.c.l.b16 %v2128
    %v2328 = vunpack.c.l.b16 %v2129
    %v2329 = vunpack.c.l.b16 %v2130
    %v2330 = vunpack.c.l.b16 %v2131
    %v2331 = vunpack.c.l.b16 %v2132
    %v2332 = vunpack.c.l.b16 %v2133
    %v2333 = vunpack.c.l.b16 %v2134
    %v2334 = vunpack.c.l.b16 %v2135
    %v2335 = vunpack.c.l.b16 %v2136
    %v2336 = vunpack.c.l.b16 %v2137
    %v2337 = vunpack.c.l.b16 %v2138
    %v2338 = vunpack.c.l.b16 %v2139
    %v2339 = vunpack.c.l.b16 %v2140
    %v2340 = vpack.c.b16 %v2245, %v2244
    %v2341 = vpack.c.b16 %v2247, %v2246
    %v2342 = vpack.c.b16 %v2249, %v2248
    %v2343 = vpack.c.b16 %v2251, %v2250
    %v2344 = vpack.c.b16 %v2253, %v2252
    %v2345 = vpack.c.b16 %v2255, %v2254
    %v2346 = vpack.c.b16 %v2257, %v2256
    %v2347 = vpack.c.b16 %v2259, %v2258
    %v2348 = vpack.c.b16 %v2261, %v2260
    %v2349 = vpack.c.b16 %v2263, %v2262
    %v2350 = vpack.c.b16 %v2265, %v2264
    %v2351 = vpack.c.b16 %v2267, %v2266
    %v2352 = vpack.c.b16 %v2269, %v2268
    %v2353 = vpack.c.b16 %v2271, %v2270
    %v2354 = vpack.c.b16 %v2273, %v2272
    %v2355 = vpack.c.b16 %v2275, %v2274
    %v2356 = vpack.c.b16 %v2277, %v2276
    %v2357 = vpack.c.b16 %v2279, %v2278
    %v2358 = vpack.c.b16 %v2281, %v2280
    %v2359 = vpack.c.b16 %v2283, %v2282
    %v2360 = vpack.c.b16 %v2285, %v2284
    %v2361 = vpack.c.b16 %v2287, %v2286
    %v2362 = vpack.c.b16 %v2289, %v2288
    %v2363 = vpack.c.b16 %v2291, %v2290
    %v2364 = vpack.c.b16 %v2293, %v2292
    %v2365 = vpack.c.b16 %v2295, %v2294
    %v2366 = vpack.c.b16 %v2297, %v2296
    %v2367 = vpack.c.b16 %v2299, %v2298
    %v2368 = vpack.c.b16 %v2301, %v2300
    %v2369 = vpack.c.b16 %v2303, %v2302
    %v2370 = vpack.c.b16 %v2305, %v2304
    %v2371 = vpack.c.b16 %v2307, %v2306
    %v2372 = vpack.c.b16 %v2309, %v2308
    %v2373 = vpack.c.b16 %v2311, %v2310
    %v2374 = vpack.c.b16 %v2313, %v2312
    %v2375 = vpack.c.b16 %v2315, %v2314
    %v2376 = vpack.c.b16 %v2317, %v2316
    %v2377 = vpack.c.b16 %v2319, %v2318
    %v2378 = vpack.c.b16 %v2321, %v2320
    %v2379 = vpack.c.b16 %v2323, %v2322
    %v2380 = vpack.c.b16 %v2325, %v2324
    %v2381 = vpack.c.b16 %v2327, %v2326
    %v2382 = vpack.c.b16 %v2329, %v2328
    %v2383 = vpack.c.b16 %v2331, %v2330
    %v2384 = vpack.c.b16 %v2333, %v2332
    %v2385 = vpack.c.b16 %v2335, %v2334
    %v2386 = vpack.c.b16 %v2337, %v2336
    %v2387 = vpack.c.b16 %v2339, %v2338
    %2436 = vmatprep.subr.bf16.mxu0 0
    %2437 = vmatpush1.bf16.msra.mxu0 %v2347
    %2438 = vmatprep.subr.bf16.mxu0 0
    %2439 = vmatpush1.bf16.msra.mxu0 %v2346
    %2440 = vmatprep.subr.bf16.mxu0 0
    %2441 = vmatpush1.bf16.msra.mxu0 %v2345
    %2442 = vmatprep.subr.bf16.mxu0 0
    %2443 = vmatpush1.bf16.msra.mxu0 %v2344
    %2444 = vmatprep.subr.bf16.mxu0 0
    %2445 = vmatpush1.bf16.msra.mxu0 %v2343
    %2446 = vmatprep.subr.bf16.mxu0 0
    %2447 = vmatpush1.bf16.msra.mxu0 %v2342
    %2448 = vmatprep.subr.bf16.mxu0 0
    %2449 = vmatpush1.bf16.msra.mxu0 %v2341
    %2450 = vmatprep.subr.bf16.mxu0 0
    %2451 = vmatpush1.bf16.msra.mxu0 %v2340
    %2452 = vmatprep.subr.bf16.mxu0 0
    %2453 = vmatpush2.bf16.msra.mxu0 %v2355
    %2454 = vmatprep.subr.bf16.mxu0 0
    %2455 = vmatpush2.bf16.msra.mxu0 %v2354
    %2456 = vmatprep.subr.bf16.mxu0 0
    %2457 = vmatpush2.bf16.msra.mxu0 %v2353
    %2458 = vmatprep.subr.bf16.mxu0 0
    %2459 = vmatpush2.bf16.msra.mxu0 %v2352
    %2460 = vmatprep.subr.bf16.mxu0 0
    %2461 = vmatpush2.bf16.msra.mxu0 %v2351
    %2462 = vmatprep.subr.bf16.mxu0 0
    %2463 = vmatpush2.bf16.msra.mxu0 %v2350
    %2464 = vmatprep.subr.bf16.mxu0 0
    %2465 = vmatpush2.bf16.msra.mxu0 %v2349
    %2466 = vmatprep.subr.bf16.mxu0 0
    %2467 = vmatpush2.bf16.msra.mxu0 %v2348
    %2468 = vmatprep.mubr.bf16.mxu0 %v2040
    %2469 = vmatmul.mubr.bf16.gmra.mxu0 %v2039
    %v2470 = vpop.f32.mrf.mxu0
    %v2471 = vadd.f32 %v2146, %v2470
    %v2472 = vpop.f32.mrf.mxu0
    %v2473 = vpop.f32.mrf.mxu0
    %v2474 = vpop.f32.mrf.mxu0
    %2475 = vdwg.mxu0
    %2476 = vmatprep.subr.bf16.mxu0 0
    %2477 = vmatpush1.bf16.msra.mxu0 %v2363
    %2478 = vmatprep.subr.bf16.mxu0 0
    %2479 = vmatpush1.bf16.msra.mxu0 %v2362
    %2480 = vmatprep.subr.bf16.mxu0 0
    %2481 = vmatpush1.bf16.msra.mxu0 %v2361
    %2482 = vmatprep.subr.bf16.mxu0 0
    %2483 = vmatpush1.bf16.msra.mxu0 %v2360
    %2484 = vmatprep.subr.bf16.mxu0 0
    %2485 = vmatpush1.bf16.msra.mxu0 %v2359
    %2486 = vmatprep.subr.bf16.mxu0 0
    %2487 = vmatpush1.bf16.msra.mxu0 %v2358
    %2488 = vmatprep.subr.bf16.mxu0 0
    %2489 = vmatpush1.bf16.msra.mxu0 %v2357
    %2490 = vmatprep.subr.bf16.mxu0 0
    %2491 = vmatpush1.bf16.msra.mxu0 %v2356
    %2492 = vmatprep.subr.bf16.mxu0 0
    %2493 = vmatpush2.bf16.msra.mxu0 %v2371
    %2494 = vmatprep.subr.bf16.mxu0 0
    %2495 = vmatpush2.bf16.msra.mxu0 %v2370
    %2496 = vmatprep.subr.bf16.mxu0 0
    %2497 = vmatpush2.bf16.msra.mxu0 %v2369
    %2498 = vmatprep.subr.bf16.mxu0 0
    %2499 = vmatpush2.bf16.msra.mxu0 %v2368
    %2500 = vmatprep.subr.bf16.mxu0 0
    %2501 = vmatpush2.bf16.msra.mxu0 %v2367
    %2502 = vmatprep.subr.bf16.mxu0 0
    %2503 = vmatpush2.bf16.msra.mxu0 %v2366
    %2504 = vmatprep.subr.bf16.mxu0 0
    %2505 = vmatpush2.bf16.msra.mxu0 %v2365
    %2506 = vmatprep.subr.bf16.mxu0 0
    %2507 = vmatpush2.bf16.msra.mxu0 %v2364
    %2508 = vmatprep.mubr.bf16.mxu0 %v2042
    %2509 = vmatmul.mubr.bf16.gmra.mxu0 %v2041
    %v2510 = vpop.f32.mrf.mxu0
    %v2511 = vadd.f32 %v2471, %v2510
    %v2512 = vpop.f32.mrf.mxu0
    %v2513 = vpop.f32.mrf.mxu0
    %v2514 = vpop.f32.mrf.mxu0
    %2515 = vdwg.mxu0
    %2516 = vmatprep.subr.bf16.mxu0 0
    %2517 = vmatpush1.bf16.msra.mxu0 %v2379
    %2518 = vmatprep.subr.bf16.mxu0 0
    %2519 = vmatpush1.bf16.msra.mxu0 %v2378
    %2520 = vmatprep.subr.bf16.mxu0 0
    %2521 = vmatpush1.bf16.msra.mxu0 %v2377
    %2522 = vmatprep.subr.bf16.mxu0 0
    %2523 = vmatpush1.bf16.msra.mxu0 %v2376
    %2524 = vmatprep.subr.bf16.mxu0 0
    %2525 = vmatpush1.bf16.msra.mxu0 %v2375
    %2526 = vmatprep.subr.bf16.mxu0 0
    %2527 = vmatpush1.bf16.msra.mxu0 %v2374
    %2528 = vmatprep.subr.bf16.mxu0 0
    %2529 = vmatpush1.bf16.msra.mxu0 %v2373
    %2530 = vmatprep.subr.bf16.mxu0 0
    %2531 = vmatpush1.bf16.msra.mxu0 %v2372
    %2532 = vmatprep.subr.bf16.mxu0 0
    %2533 = vmatpush2.bf16.msra.mxu0 %v2387
    %2534 = vmatprep.subr.bf16.mxu0 0
    %2535 = vmatpush2.bf16.msra.mxu0 %v2386
    %2536 = vmatprep.subr.bf16.mxu0 0
    %2537 = vmatpush2.bf16.msra.mxu0 %v2385
    %2538 = vmatprep.subr.bf16.mxu0 0
    %2539 = vmatpush2.bf16.msra.mxu0 %v2384
    %2540 = vmatprep.subr.bf16.mxu0 0
    %2541 = vmatpush2.bf16.msra.mxu0 %v2383
    %2542 = vmatprep.subr.bf16.mxu0 0
    %2543 = vmatpush2.bf16.msra.mxu0 %v2382
    %2544 = vmatprep.subr.bf16.mxu0 0
    %2545 = vmatpush2.bf16.msra.mxu0 %v2381
    %2546 = vmatprep.subr.bf16.mxu0 0
    %2547 = vmatpush2.bf16.msra.mxu0 %v2380
    %2548 = vmatprep.mubr.bf16.mxu0 %v2044
    %2549 = vmatmul.mubr.bf16.gmra.mxu0 %v2043
    %v2550 = vpop.f32.mrf.mxu0
    %v2551 = vadd.f32 %v2511, %v2550
    %v2552 = vpop.f32.mrf.mxu0
    %v2553 = vpop.f32.mrf.mxu0
    %v2554 = vpop.f32.mrf.mxu0
    %2555 = vdwg.mxu0
    %2556 = vst [vmem:[#allocation11] sm:$0x3] %v2551
    // Predicated region
    $region50: #{tpu_custom_call.1} parent=1 // pred_check
      _
    $region51: #{tpu_custom_call.1} parent=1 // pred_check_branch
      %2558 = sbr.rel (0) target = $region53
    $region52: #{tpu_custom_call.1} parent=1 // pred_region
      %s2560 = ssub.s32 32, 32
      %2561 = vsyncadd [#allocation4], %s2560
      %s2563 = sshll.u32 [#allocation11], 4
      %s2564 = int_to_ptr.vmem [resolvable:$true] %s2563
      %2566 = dma.vmem_to_hbm [thread:$0]  %s2564, 32, %s7, [#allocation4]
    $region53: #{tpu_custom_call.1} parent=1 // pred_fallthru
      _
    // Predicated region
    $region54: #{tpu_custom_call.1} parent=1 // pred_check
      _
    $region55: #{tpu_custom_call.1} parent=1 // pred_check_branch
      %2568 = sbr.rel (0) target = $region57
    $region56: #{tpu_custom_call.1} parent=1 // pred_region
      %2569 = dma.done [#allocation4], 32
    $region57: #{tpu_custom_call.1} parent=1 // pred_fallthru
      _
    %2570 = vsyncpa [#allocation3], 1
    %2571 = vsyncpa [#allocation6], 1
    %2572 = vsyncpa [#allocation9], 1
    %2573 = vsyncpa [#allocation4], 1

</llo_original>
